<compile_context>
chip_gen: v7x
topology: tpu7x:2x2x1
jax: 0.10.0
libtpu: 0.0.40
codegen_flags: <defaults>
</compile_context>

<pallas_src>
import jax
import jax.numpy as jnp
from jax import lax
from jax.experimental import pallas as pl
from jax.experimental.pallas import tpu as pltpu

# ------------------------- scaled-down configuration -------------------------
N = 8             # batch size
C_IN = 1          # MoCo default in_channels=1
H = W = 16        # spatial size
KH = KW = 3       # stand-in conv kernel
CK = C_IN * KH * KW
CK_PAD = 128      # pad the im2col contraction dim to a full lane width
NHW = N * H * W
FEAT = 32         # stand-in for the 2048-dim resnet feature
HID = 64          # stand-in for the 2048-dim MLP hidden layer
DIM = 128         # projection dim (MoCo default dim=128)
K_QUEUE = 256     # stand-in for K=65536 queue slots
M_MOM = 0.999     # momentum
T = 0.07          # temperature
BN_EPS = 1e-5     # nn.BatchNorm1d default eps
NORM_EPS = 1e-12  # F.normalize default eps

VMEM = pltpu.MemorySpace.VMEM
SMEM = pltpu.MemorySpace.SMEM


# ------------------------------ Pallas kernels --------------------------------
def branch_kernel(p_ref, pool_ref, cw_ref, w1_ref, b1_ref, g1_ref, be1_ref,
                  w2_ref, b2_ref, g2_ref, be2_ref, o_ref):
    """One MoCo branch (grid step = branch): encoder + BN-MLP head + normalize."""
    # stand-in encoder: conv as padded im2col matmul (bf16 MXU), ReLU
    h = jnp.dot(p_ref[...], cw_ref[...],
                preferred_element_type=jnp.float32)           # (N*H*W, FEAT)
    h = jnp.maximum(h, 0.0).astype(jnp.bfloat16)
    # global average pool as an MXU matmul with a block-diagonal 1/HW matrix
    feat = jnp.dot(pool_ref[...], h,
                   preferred_element_type=jnp.float32)        # (N, FEAT) f32

    # projection MLP: Linear -> BatchNorm1d(train-mode batch stats) -> ReLU
    h1 = jnp.dot(feat.astype(jnp.bfloat16), w1_ref[...],
                 preferred_element_type=jnp.float32) + b1_ref[...]
    mu1 = jnp.mean(h1, axis=0, keepdims=True)
    var1 = jnp.mean((h1 - mu1) ** 2, axis=0, keepdims=True)   # biased variance
    h1 = (h1 - mu1) * lax.rsqrt(var1 + BN_EPS) * g1_ref[...] + be1_ref[...]
    h1 = jnp.maximum(h1, 0.0)

    # Linear -> BatchNorm1d
    z = jnp.dot(h1.astype(jnp.bfloat16), w2_ref[...],
                preferred_element_type=jnp.float32) + b2_ref[...]
    mu2 = jnp.mean(z, axis=0, keepdims=True)
    var2 = jnp.mean((z - mu2) ** 2, axis=0, keepdims=True)
    z = (z - mu2) * lax.rsqrt(var2 + BN_EPS) * g2_ref[...] + be2_ref[...]

    # F.normalize(z, dim=1)
    nrm = jnp.sqrt(jnp.sum(z * z, axis=1, keepdims=True))
    o_ref[...] = z / jnp.maximum(nrm, NORM_EPS)               # (N, DIM) lane-dense


def logits_enqueue_kernel(ptr_ref, q_ref, k_ref, queue_in_hbm,
                          lpos_ref, lneg_ref, queue_out_hbm,
                          qbuf, rd_sem, wr_sem):
    """l_pos + lane-dense l_neg logits (/T) + aliased in-place queue enqueue."""
    # Load the (pre-update) queue HBM -> VMEM for the l_neg matmul
    # (torch: self.queue.clone().detach() before _dequeue_and_enqueue).
    rd = pltpu.make_async_copy(queue_in_hbm, qbuf, rd_sem)
    rd.start()
    rd.wait()

    q = q_ref[...]                                            # (N, DIM) f32
    k = k_ref[...]
    inv_t = 1.0 / T

    # l_pos = einsum('nc,nc->n') / T
    lpos_ref[...] = jnp.sum(q * k, axis=1, keepdims=True) * inv_t

    # l_neg = q @ queue.T / T (queue row-major, contract last dims -> MXU NT)
    l_neg = lax.dot_general(q.astype(jnp.bfloat16),
                            qbuf[...].astype(jnp.bfloat16),
                            (((1,), (1,)), ((), ())),
                            preferred_element_type=jnp.float32)
    lneg_ref[...] = l_neg * inv_t                             # (N, K_QUEUE)

    # Enqueue: queue[ptr:ptr+N, :] = k  -> lane-dense DMA of only N x DIM rows.
    wr = pltpu.make_async_copy(
        k_ref, queue_out_hbm.at[pl.ds(ptr_ref[0], N)], wr_sem)
    wr.start()
    wr.wait()


# ------------------------------ wrappers (glue) --------------------------------
def _make_patches(im_nchw):
    x = jnp.transpose(im_nchw, (0, 2, 3, 1))                  # NCHW -> NHWC
    p = lax.conv_general_dilated_patches(
        x, filter_shape=(KH, KW), window_strides=(1, 1), padding="SAME",
        dimension_numbers=("NHWC", "HWIO", "NHWC"))           # (N, H, W, CK)
    p = p.reshape(NHW, CK)
    # zero-pad the CK=9 contraction dim up to 128 lanes (lane-dense vreg loads)
    return jnp.pad(p, ((0, 0), (0, CK_PAD - CK))).astype(jnp.bfloat16)


def branches_forward(im_q, im_k, q_params, k_params):
    """Both MoCo branches in ONE pallas_call (grid=(2,), megacore-parallel)."""
    patches = jnp.stack([_make_patches(im_q), _make_patches(im_k)])  # (2,NHW,128)
    # block-diagonal 1/(H*W) pooling matrix; constant-folded under jit
    pool = (jnp.kron(jnp.eye(N, dtype=jnp.float32),
                     jnp.ones((1, H * W), jnp.float32)) / (H * W)
            ).astype(jnp.bfloat16)                            # (N, N*H*W)

    def s(name):  # stack query / momentum-key params along a branch axis
        return jnp.stack([q_params[name], k_params[name]])

    conv_w = jnp.pad(s("conv_w"),
                     ((0, 0), (0, CK_PAD - CK), (0, 0))).astype(jnp.bfloat16)
    w1 = s("w1").astype(jnp.bfloat16)
    w2 = s("w2").astype(jnp.bfloat16)
    r = lambda name, d: s(name).reshape(2, 1, d)
    b1, g1, be1 = r("b1", HID), r("g1", HID), r("be1", HID)
    b2, g2, be2 = r("b2", DIM), r("g2", DIM), r("be2", DIM)

    per_branch = lambda shape: pl.BlockSpec((None,) + shape, lambda b: (b, 0, 0))
    shared = lambda shape: pl.BlockSpec(shape, lambda b: (0, 0))

    out = pl.pallas_call(
        branch_kernel,
        out_shape=jax.ShapeDtypeStruct((2, N, DIM), jnp.float32),
        grid=(2,),
        in_specs=[per_branch((NHW, CK_PAD)),    # patches
                  shared((N, NHW)),             # pool
                  per_branch((CK_PAD, FEAT)),   # conv_w
                  per_branch((FEAT, HID)),      # w1
                  per_branch((1, HID)),         # b1
                  per_branch((1, HID)),         # g1
                  per_branch((1, HID)),         # be1
                  per_branch((HID, DIM)),       # w2
                  per_branch((1, DIM)),         # b2
                  per_branch((1, DIM)),         # g2
                  per_branch((1, DIM))],        # be2
        out_specs=pl.BlockSpec((None, N, DIM), lambda b: (b, 0, 0)),
        compiler_params=pltpu.CompilerParams(
            dimension_semantics=("parallel",)),
    )(patches, pool, conv_w, w1, b1, g1, be1, w2, b2, g2, be2)
    return out[0], out[1]                                     # q, k


def momentum_update(q_params, k_params):
    # param_k = param_k * m + param_q * (1 - m); plain jnp (XLA fuses this).
    return jax.tree_util.tree_map(
        lambda kv, qv: kv * M_MOM + qv * (1.0 - M_MOM), k_params, q_params)


def logits_and_enqueue(q, k, queue, queue_ptr):
    # outputs: (l_pos/T, l_neg/T, updated queue).  The queue output aliases the
    # queue input buffer; only the N enqueued rows are written inside the kernel.
    return pl.pallas_call(
        logits_enqueue_kernel,
        out_shape=(jax.ShapeDtypeStruct((N, 1), jnp.float32),
                   jax.ShapeDtypeStruct((N, K_QUEUE), jnp.float32),
                   jax.ShapeDtypeStruct((K_QUEUE, DIM), jnp.float32)),
        in_specs=[pl.BlockSpec(memory_space=SMEM),     # queue_ptr
                  pl.BlockSpec(memory_space=VMEM),     # q
                  pl.BlockSpec(memory_space=VMEM),     # k
                  pl.BlockSpec(memory_space=pl.ANY)],  # queue (stays in HBM)
        out_specs=(pl.BlockSpec(memory_space=VMEM),
                   pl.BlockSpec(memory_space=VMEM),
                   pl.BlockSpec(memory_space=pl.ANY)),
        scratch_shapes=[pltpu.VMEM((K_QUEUE, DIM), jnp.float32),
                        pltpu.SemaphoreType.DMA(()),
                        pltpu.SemaphoreType.DMA(())],
        input_output_aliases={3: 2},
    )(queue_ptr, q, k, queue)


def moco_forward(params, state, im_q, im_k):
    # momentum update of key encoder + projection (done before computing k)
    k_params = momentum_update(params["q"], params["k"])

    # query + key branches: one pallas_call, grid=(2,), megacore-parallel
    q, k = branches_forward(im_q, im_k, params["q"], k_params)

    # l_pos, l_neg (both /T) + queue enqueue in one kernel
    l_pos, l_neg, new_queue = logits_and_enqueue(
        q, k, state["queue"], state["queue_ptr"])

    logits = jnp.concatenate([l_pos, l_neg], axis=1)          # (N, 1 + K_QUEUE)
    labels = jnp.zeros((N,), dtype=jnp.int32)  # torch uses int64 on cuda

    # ptr = (ptr + N) % K   (boundary clamp unnecessary: K_QUEUE % N == 0)
    new_ptr = (state["queue_ptr"] + N) % K_QUEUE
    new_state = {"queue": new_queue, "queue_ptr": new_ptr, "k_params": k_params}
    return logits, labels, new_state


# ------------------------------ deterministic init -----------------------------
def init_params(key):
    ks = jax.random.split(key, 4)
    conv_w = 0.1 * jax.random.normal(ks[0], (CK, FEAT), jnp.float32)
    w1 = 0.05 * jax.random.normal(ks[1], (FEAT, HID), jnp.float32)
    b1 = jnp.zeros((HID,), jnp.float32)
    g1 = jnp.ones((HID,), jnp.float32)
    be1 = jnp.zeros((HID,), jnp.float32)
    w2 = 0.05 * jax.random.normal(ks[2], (HID, DIM), jnp.float32)
    b2 = jnp.zeros((DIM,), jnp.float32)
    g2 = jnp.ones((DIM,), jnp.float32)
    be2 = jnp.zeros((DIM,), jnp.float32)
    q_params = dict(conv_w=conv_w, w1=w1, b1=b1, g1=g1, be1=be1,
                    w2=w2, b2=b2, g2=g2, be2=be2)
    # __init__: param_k.data.copy_(param_q.data)
    k_params = {name: v for name, v in q_params.items()}
    # queue buffer: torch stores (dim, K) normalized along dim=0; we store it
    # row-major (K, dim) with unit rows (same semantics, lane-dense layout).
    queue = jax.random.normal(ks[3], (K_QUEUE, DIM), jnp.float32)
    queue = queue / jnp.maximum(
        jnp.linalg.norm(queue, axis=1, keepdims=True), NORM_EPS)
    state = {"queue": queue, "queue_ptr": jnp.zeros((1,), jnp.int32)}
    return {"q": q_params, "k": k_params}, state


if __name__ == "__main__":
    key = jax.random.PRNGKey(0)
    kp, kq, kk = jax.random.split(key, 3)
    params, state = init_params(kp)
    im_q = jax.random.normal(kq, (N, C_IN, H, W), jnp.float32)
    im_k = jax.random.normal(kk, (N, C_IN, H, W), jnp.float32)

    fwd = jax.jit(moco_forward)
    logits, labels, new_state = fwd(params, state, im_q, im_k)
    jax.block_until_ready((logits, labels, new_state))

    assert logits.shape == (N, 1 + K_QUEUE) and logits.dtype == jnp.float32
    assert labels.shape == (N,)
    assert new_state["queue"].shape == (K_QUEUE, DIM)
    assert int(new_state["queue_ptr"][0]) == N % K_QUEUE
    assert bool(jnp.all(jnp.isfinite(logits)))
    # enqueued keys are L2-normalized -> unit-norm rows at the enqueue position
    enq_norms = jnp.linalg.norm(new_state["queue"][:N], axis=1)
    assert bool(jnp.allclose(enq_norms, 1.0, atol=1e-3))
    print("KERNEL_OK")
</pallas_src>

<mosaic_0001>
module attributes {stable_mosaic.version = 11 : i64} {
  func.func @branch_kernel(%arg0: i32, %arg1: memref<1x2048x128xbf16, #tpu.memory_space<vmem>>, %arg2: memref<8x2048xbf16, #tpu.memory_space<vmem>>, %arg3: memref<1x128x32xbf16, #tpu.memory_space<vmem>>, %arg4: memref<1x32x64xbf16, #tpu.memory_space<vmem>>, %arg5: memref<1x1x64xf32, #tpu.memory_space<vmem>>, %arg6: memref<1x1x64xf32, #tpu.memory_space<vmem>>, %arg7: memref<1x1x64xf32, #tpu.memory_space<vmem>>, %arg8: memref<1x64x128xbf16, #tpu.memory_space<vmem>>, %arg9: memref<1x1x128xf32, #tpu.memory_space<vmem>>, %arg10: memref<1x1x128xf32, #tpu.memory_space<vmem>>, %arg11: memref<1x1x128xf32, #tpu.memory_space<vmem>>, %arg12: memref<1x8x128xf32, #tpu.memory_space<vmem>>) attributes {dimension_semantics = [#tpu.dimension_semantics<parallel>], iteration_bounds = array<i64: 2>, scalar_prefetch = 0 : i64, scratch_operands = 0 : i64, tpu.core_type = #tpu.core_type<tc>, window_params = [{transform_indices = @transform_0, window_bounds = array<i64: 1, 2048, 128>}, {pipeline_mode = #tpu.pipeline_mode<synchronous>, transform_indices = @transform_1, window_bounds = array<i64: 8, 2048>}, {transform_indices = @transform_2, window_bounds = array<i64: 1, 128, 32>}, {transform_indices = @transform_3, window_bounds = array<i64: 1, 32, 64>}, {transform_indices = @transform_4, window_bounds = array<i64: 1, 1, 64>}, {transform_indices = @transform_5, window_bounds = array<i64: 1, 1, 64>}, {transform_indices = @transform_6, window_bounds = array<i64: 1, 1, 64>}, {transform_indices = @transform_7, window_bounds = array<i64: 1, 64, 128>}, {transform_indices = @transform_8, window_bounds = array<i64: 1, 1, 128>}, {transform_indices = @transform_9, window_bounds = array<i64: 1, 1, 128>}, {transform_indices = @transform_10, window_bounds = array<i64: 1, 1, 128>}, {transform_indices = @transform_11, window_bounds = array<i64: 1, 8, 128>}]} {
    %c0 = arith.constant 0 : index
    %c0_0 = arith.constant 0 : index
    %c0_1 = arith.constant 0 : index
    %0 = vector.load %arg1[%c0, %c0_0, %c0_1] : memref<1x2048x128xbf16, #tpu.memory_space<vmem>>, vector<1x2048x128xbf16>
    %1 = vector.shape_cast %0 : vector<1x2048x128xbf16> to vector<2048x128xbf16>
    %c0_2 = arith.constant 0 : index
    %c0_3 = arith.constant 0 : index
    %c0_4 = arith.constant 0 : index
    %2 = vector.load %arg3[%c0_2, %c0_3, %c0_4] : memref<1x128x32xbf16, #tpu.memory_space<vmem>>, vector<1x128x32xbf16>
    %3 = vector.shape_cast %2 : vector<1x128x32xbf16> to vector<128x32xbf16>
    %cst = arith.constant dense<0.000000e+00> : vector<2048x32xf32>
    %4 = tpu.matmul %1, %3, %cst {dimension_numbers = #tpu.dot_dimension_numbers<[1], [0], [0], [1], [0, 0, 1, 1], [], []>} : vector<2048x128xbf16>, vector<128x32xbf16>, vector<2048x32xf32> -> vector<2048x32xf32>
    %cst_5 = arith.constant 0.000000e+00 : f32
    %5 = vector.broadcast %cst_5 : f32 to vector<2048x32xf32>
    %6 = arith.maximumf %4, %5 : vector<2048x32xf32>
    %7 = arith.truncf %6 : vector<2048x32xf32> to vector<2048x32xbf16>
    %c0_6 = arith.constant 0 : index
    %c0_7 = arith.constant 0 : index
    %8 = vector.load %arg2[%c0_6, %c0_7] : memref<8x2048xbf16, #tpu.memory_space<vmem>>, vector<8x2048xbf16>
    %cst_8 = arith.constant dense<0.000000e+00> : vector<8x32xf32>
    %9 = tpu.matmul %8, %7, %cst_8 {dimension_numbers = #tpu.dot_dimension_numbers<[1], [0], [0], [1], [0, 0, 1, 1], [], []>} : vector<8x2048xbf16>, vector<2048x32xbf16>, vector<8x32xf32> -> vector<8x32xf32>
    %10 = arith.truncf %9 : vector<8x32xf32> to vector<8x32xbf16>
    %c0_9 = arith.constant 0 : index
    %c0_10 = arith.constant 0 : index
    %c0_11 = arith.constant 0 : index
    %11 = vector.load %arg4[%c0_9, %c0_10, %c0_11] : memref<1x32x64xbf16, #tpu.memory_space<vmem>>, vector<1x32x64xbf16>
    %12 = vector.shape_cast %11 : vector<1x32x64xbf16> to vector<32x64xbf16>
    %cst_12 = arith.constant dense<0.000000e+00> : vector<8x64xf32>
    %13 = tpu.matmul %10, %12, %cst_12 {dimension_numbers = #tpu.dot_dimension_numbers<[1], [0], [0], [1], [0, 0, 1, 1], [], []>} : vector<8x32xbf16>, vector<32x64xbf16>, vector<8x64xf32> -> vector<8x64xf32>
    %c0_13 = arith.constant 0 : index
    %c0_14 = arith.constant 0 : index
    %c0_15 = arith.constant 0 : index
    %14 = vector.load %arg5[%c0_13, %c0_14, %c0_15] : memref<1x1x64xf32, #tpu.memory_space<vmem>>, vector<1x1x64xf32>
    %15 = vector.shape_cast %14 : vector<1x1x64xf32> to vector<1x64xf32>
    %16 = vector.broadcast %15 : vector<1x64xf32> to vector<8x64xf32>
    %17 = arith.addf %13, %16 : vector<8x64xf32>
    %cst_16 = arith.constant dense<0.000000e+00> : vector<64xf32>
    %18 = vector.multi_reduction <add>, %17, %cst_16 [0] : vector<8x64xf32> to vector<64xf32>
    %19 = vector.shape_cast %18 : vector<64xf32> to vector<1x64xf32>
    %cst_17 = arith.constant 8.000000e+00 : f32
    %20 = vector.broadcast %cst_17 : f32 to vector<1x64xf32>
    %21 = arith.divf %19, %20 : vector<1x64xf32>
    %22 = vector.broadcast %21 : vector<1x64xf32> to vector<8x64xf32>
    %23 = arith.subf %17, %22 : vector<8x64xf32>
    %24 = arith.mulf %23, %23 : vector<8x64xf32>
    %cst_18 = arith.constant dense<0.000000e+00> : vector<64xf32>
    %25 = vector.multi_reduction <add>, %24, %cst_18 [0] : vector<8x64xf32> to vector<64xf32>
    %26 = vector.shape_cast %25 : vector<64xf32> to vector<1x64xf32>
    %cst_19 = arith.constant 8.000000e+00 : f32
    %27 = vector.broadcast %cst_19 : f32 to vector<1x64xf32>
    %28 = arith.divf %26, %27 : vector<1x64xf32>
    %29 = vector.broadcast %21 : vector<1x64xf32> to vector<8x64xf32>
    %30 = arith.subf %17, %29 : vector<8x64xf32>
    %cst_20 = arith.constant 9.99999974E-6 : f32
    %31 = vector.broadcast %cst_20 : f32 to vector<1x64xf32>
    %32 = arith.addf %28, %31 : vector<1x64xf32>
    %33 = math.rsqrt %32 : vector<1x64xf32>
    %34 = vector.broadcast %33 : vector<1x64xf32> to vector<8x64xf32>
    %35 = arith.mulf %30, %34 : vector<8x64xf32>
    %c0_21 = arith.constant 0 : index
    %c0_22 = arith.constant 0 : index
    %c0_23 = arith.constant 0 : index
    %36 = vector.load %arg6[%c0_21, %c0_22, %c0_23] : memref<1x1x64xf32, #tpu.memory_space<vmem>>, vector<1x1x64xf32>
    %37 = vector.shape_cast %36 : vector<1x1x64xf32> to vector<1x64xf32>
    %38 = vector.broadcast %37 : vector<1x64xf32> to vector<8x64xf32>
    %39 = arith.mulf %35, %38 : vector<8x64xf32>
    %c0_24 = arith.constant 0 : index
    %c0_25 = arith.constant 0 : index
    %c0_26 = arith.constant 0 : index
    %40 = vector.load %arg7[%c0_24, %c0_25, %c0_26] : memref<1x1x64xf32, #tpu.memory_space<vmem>>, vector<1x1x64xf32>
    %41 = vector.shape_cast %40 : vector<1x1x64xf32> to vector<1x64xf32>
    %42 = vector.broadcast %41 : vector<1x64xf32> to vector<8x64xf32>
    %43 = arith.addf %39, %42 : vector<8x64xf32>
    %cst_27 = arith.constant 0.000000e+00 : f32
    %44 = vector.broadcast %cst_27 : f32 to vector<8x64xf32>
    %45 = arith.maximumf %43, %44 : vector<8x64xf32>
    %46 = arith.truncf %45 : vector<8x64xf32> to vector<8x64xbf16>
    %c0_28 = arith.constant 0 : index
    %c0_29 = arith.constant 0 : index
    %c0_30 = arith.constant 0 : index
    %47 = vector.load %arg8[%c0_28, %c0_29, %c0_30] : memref<1x64x128xbf16, #tpu.memory_space<vmem>>, vector<1x64x128xbf16>
    %48 = vector.shape_cast %47 : vector<1x64x128xbf16> to vector<64x128xbf16>
    %cst_31 = arith.constant dense<0.000000e+00> : vector<8x128xf32>
    %49 = tpu.matmul %46, %48, %cst_31 {dimension_numbers = #tpu.dot_dimension_numbers<[1], [0], [0], [1], [0, 0, 1, 1], [], []>} : vector<8x64xbf16>, vector<64x128xbf16>, vector<8x128xf32> -> vector<8x128xf32>
    %c0_32 = arith.constant 0 : index
    %c0_33 = arith.constant 0 : index
    %c0_34 = arith.constant 0 : index
    %50 = vector.load %arg9[%c0_32, %c0_33, %c0_34] : memref<1x1x128xf32, #tpu.memory_space<vmem>>, vector<1x1x128xf32>
    %51 = vector.shape_cast %50 : vector<1x1x128xf32> to vector<1x128xf32>
    %52 = vector.broadcast %51 : vector<1x128xf32> to vector<8x128xf32>
    %53 = arith.addf %49, %52 : vector<8x128xf32>
    %cst_35 = arith.constant dense<0.000000e+00> : vector<128xf32>
    %54 = vector.multi_reduction <add>, %53, %cst_35 [0] : vector<8x128xf32> to vector<128xf32>
    %55 = vector.shape_cast %54 : vector<128xf32> to vector<1x128xf32>
    %cst_36 = arith.constant 8.000000e+00 : f32
    %56 = vector.broadcast %cst_36 : f32 to vector<1x128xf32>
    %57 = arith.divf %55, %56 : vector<1x128xf32>
    %58 = vector.broadcast %57 : vector<1x128xf32> to vector<8x128xf32>
    %59 = arith.subf %53, %58 : vector<8x128xf32>
    %60 = arith.mulf %59, %59 : vector<8x128xf32>
    %cst_37 = arith.constant dense<0.000000e+00> : vector<128xf32>
    %61 = vector.multi_reduction <add>, %60, %cst_37 [0] : vector<8x128xf32> to vector<128xf32>
    %62 = vector.shape_cast %61 : vector<128xf32> to vector<1x128xf32>
    %cst_38 = arith.constant 8.000000e+00 : f32
    %63 = vector.broadcast %cst_38 : f32 to vector<1x128xf32>
    %64 = arith.divf %62, %63 : vector<1x128xf32>
    %65 = vector.broadcast %57 : vector<1x128xf32> to vector<8x128xf32>
    %66 = arith.subf %53, %65 : vector<8x128xf32>
    %cst_39 = arith.constant 9.99999974E-6 : f32
    %67 = vector.broadcast %cst_39 : f32 to vector<1x128xf32>
    %68 = arith.addf %64, %67 : vector<1x128xf32>
    %69 = math.rsqrt %68 : vector<1x128xf32>
    %70 = vector.broadcast %69 : vector<1x128xf32> to vector<8x128xf32>
    %71 = arith.mulf %66, %70 : vector<8x128xf32>
    %c0_40 = arith.constant 0 : index
    %c0_41 = arith.constant 0 : index
    %c0_42 = arith.constant 0 : index
    %72 = vector.load %arg10[%c0_40, %c0_41, %c0_42] : memref<1x1x128xf32, #tpu.memory_space<vmem>>, vector<1x1x128xf32>
    %73 = vector.shape_cast %72 : vector<1x1x128xf32> to vector<1x128xf32>
    %74 = vector.broadcast %73 : vector<1x128xf32> to vector<8x128xf32>
    %75 = arith.mulf %71, %74 : vector<8x128xf32>
    %c0_43 = arith.constant 0 : index
    %c0_44 = arith.constant 0 : index
    %c0_45 = arith.constant 0 : index
    %76 = vector.load %arg11[%c0_43, %c0_44, %c0_45] : memref<1x1x128xf32, #tpu.memory_space<vmem>>, vector<1x1x128xf32>
    %77 = vector.shape_cast %76 : vector<1x1x128xf32> to vector<1x128xf32>
    %78 = vector.broadcast %77 : vector<1x128xf32> to vector<8x128xf32>
    %79 = arith.addf %75, %78 : vector<8x128xf32>
    %80 = arith.mulf %79, %79 : vector<8x128xf32>
    %cst_46 = arith.constant dense<0.000000e+00> : vector<8xf32>
    %81 = vector.multi_reduction <add>, %80, %cst_46 [1] : vector<8x128xf32> to vector<8xf32>
    %82 = vector.shape_cast %81 : vector<8xf32> to vector<8x1xf32>
    %83 = math.sqrt %82 : vector<8x1xf32>
    %cst_47 = arith.constant 9.99999996E-13 : f32
    %84 = vector.broadcast %cst_47 : f32 to vector<8x1xf32>
    %85 = arith.maximumf %83, %84 : vector<8x1xf32>
    %86 = vector.broadcast %85 : vector<8x1xf32> to vector<8x128xf32>
    %87 = arith.divf %79, %86 : vector<8x128xf32>
    %c0_48 = arith.constant 0 : index
    %c0_49 = arith.constant 0 : index
    %c0_50 = arith.constant 0 : index
    %88 = vector.load %arg12[%c0_48, %c0_49, %c0_50] : memref<1x8x128xf32, #tpu.memory_space<vmem>>, vector<1x8x128xf32>
    %89 = vector.shape_cast %88 : vector<1x8x128xf32> to vector<8x128xf32>
    %90 = vector.shape_cast %87 : vector<8x128xf32> to vector<1x8x128xf32>
    tpu.vector_store %arg12[%c0_48, %c0_49, %c0_50], %90 {strides = array<i32>} : memref<1x8x128xf32, #tpu.memory_space<vmem>>, vector<1x8x128xf32>,
    return
  }
  func.func @transform_0(%arg0: i32) -> (i32, i32, i32) {
    %c0_i32 = arith.constant 0 : i32
    %c0_i32_0 = arith.constant 0 : i32
    %c0_i32_1 = arith.constant 0 : i32
    return %arg0, %c0_i32, %c0_i32_0 : i32, i32, i32
  }
  func.func @transform_1(%arg0: i32) -> (i32, i32) {
    %c0_i32 = arith.constant 0 : i32
    %c0_i32_0 = arith.constant 0 : i32
    %c0_i32_1 = arith.constant 0 : i32
    return %c0_i32, %c0_i32_0 : i32, i32
  }
  func.func @transform_2(%arg0: i32) -> (i32, i32, i32) {
    %c0_i32 = arith.constant 0 : i32
    %c0_i32_0 = arith.constant 0 : i32
    %c0_i32_1 = arith.constant 0 : i32
    return %arg0, %c0_i32, %c0_i32_0 : i32, i32, i32
  }
  func.func @transform_3(%arg0: i32) -> (i32, i32, i32) {
    %c0_i32 = arith.constant 0 : i32
    %c0_i32_0 = arith.constant 0 : i32
    %c0_i32_1 = arith.constant 0 : i32
    return %arg0, %c0_i32, %c0_i32_0 : i32, i32, i32
  }
  func.func @transform_4(%arg0: i32) -> (i32, i32, i32) {
    %c0_i32 = arith.constant 0 : i32
    %c0_i32_0 = arith.constant 0 : i32
    %c0_i32_1 = arith.constant 0 : i32
    return %arg0, %c0_i32, %c0_i32_0 : i32, i32, i32
  }
  func.func @transform_5(%arg0: i32) -> (i32, i32, i32) {
    %c0_i32 = arith.constant 0 : i32
    %c0_i32_0 = arith.constant 0 : i32
    %c0_i32_1 = arith.constant 0 : i32
    return %arg0, %c0_i32, %c0_i32_0 : i32, i32, i32
  }
  func.func @transform_6(%arg0: i32) -> (i32, i32, i32) {
    %c0_i32 = arith.constant 0 : i32
    %c0_i32_0 = arith.constant 0 : i32
    %c0_i32_1 = arith.constant 0 : i32
    return %arg0, %c0_i32, %c0_i32_0 : i32, i32, i32
  }
  func.func @transform_7(%arg0: i32) -> (i32, i32, i32) {
    %c0_i32 = arith.constant 0 : i32
    %c0_i32_0 = arith.constant 0 : i32
    %c0_i32_1 = arith.constant 0 : i32
    return %arg0, %c0_i32, %c0_i32_0 : i32, i32, i32
  }
  func.func @transform_8(%arg0: i32) -> (i32, i32, i32) {
    %c0_i32 = arith.constant 0 : i32
    %c0_i32_0 = arith.constant 0 : i32
    %c0_i32_1 = arith.constant 0 : i32
    return %arg0, %c0_i32, %c0_i32_0 : i32, i32, i32
  }
  func.func @transform_9(%arg0: i32) -> (i32, i32, i32) {
    %c0_i32 = arith.constant 0 : i32
    %c0_i32_0 = arith.constant 0 : i32
    %c0_i32_1 = arith.constant 0 : i32
    return %arg0, %c0_i32, %c0_i32_0 : i32, i32, i32
  }
  func.func @transform_10(%arg0: i32) -> (i32, i32, i32) {
    %c0_i32 = arith.constant 0 : i32
    %c0_i32_0 = arith.constant 0 : i32
    %c0_i32_1 = arith.constant 0 : i32
    return %arg0, %c0_i32, %c0_i32_0 : i32, i32, i32
  }
  func.func @transform_11(%arg0: i32) -> (i32, i32, i32) {
    %c0_i32 = arith.constant 0 : i32
    %c0_i32_0 = arith.constant 0 : i32
    %c0_i32_1 = arith.constant 0 : i32
    return %arg0, %c0_i32, %c0_i32_0 : i32, i32, i32
  }
}

module attributes {stable_mosaic.version = 11 : i64} {
  func.func @logits_enqueue_kernel(%arg0: memref<1xi32, #tpu.memory_space<smem>>, %arg1: memref<8x128xf32, #tpu.memory_space<vmem>>, %arg2: memref<8x128xf32, #tpu.memory_space<vmem>>, %arg3: memref<256x128xf32, #tpu.memory_space<any>>, %arg4: memref<8x1xf32, #tpu.memory_space<vmem>>, %arg5: memref<8x256xf32, #tpu.memory_space<vmem>>, %arg6: memref<256x128xf32, #tpu.memory_space<any>>, %arg7: memref<256x128xf32, #tpu.memory_space<vmem>>, %arg8: memref<!tpu.dma_semaphore, #tpu.memory_space<semaphore_mem>>, %arg9: memref<!tpu.dma_semaphore, #tpu.memory_space<semaphore_mem>>) attributes {dimension_semantics = [], scalar_prefetch = 0 : i64, scratch_operands = 3 : i64, tpu.core_type = #tpu.core_type<tc>} {
    tpu.enqueue_dma source(%arg3 : memref<256x128xf32, #tpu.memory_space<any>>) target(%arg7 : memref<256x128xf32, #tpu.memory_space<vmem>>) target_semaphore(%arg8 : memref<!tpu.dma_semaphore, #tpu.memory_space<semaphore_mem>>)
    tpu.wait_dma2 semaphore(%arg8 : memref<!tpu.dma_semaphore, #tpu.memory_space<semaphore_mem>>) src(%arg3 : memref<256x128xf32, #tpu.memory_space<any>>) dst(%arg7 : memref<256x128xf32, #tpu.memory_space<vmem>>)
    %c0 = arith.constant 0 : index
    %c0_0 = arith.constant 0 : index
    %0 = vector.load %arg1[%c0, %c0_0] : memref<8x128xf32, #tpu.memory_space<vmem>>, vector<8x128xf32>
    %c0_1 = arith.constant 0 : index
    %c0_2 = arith.constant 0 : index
    %1 = vector.load %arg2[%c0_1, %c0_2] : memref<8x128xf32, #tpu.memory_space<vmem>>, vector<8x128xf32>
    %2 = arith.mulf %0, %1 : vector<8x128xf32>
    %cst = arith.constant dense<0.000000e+00> : vector<8xf32>
    %3 = vector.multi_reduction <add>, %2, %cst [1] : vector<8x128xf32> to vector<8xf32>
    %4 = vector.shape_cast %3 : vector<8xf32> to vector<8x1xf32>
    %cst_3 = arith.constant 14.2857141 : f32
    %5 = vector.broadcast %cst_3 : f32 to vector<8x1xf32>
    %6 = arith.mulf %4, %5 : vector<8x1xf32>
    %c0_4 = arith.constant 0 : index
    %c0_5 = arith.constant 0 : index
    %7 = vector.load %arg4[%c0_4, %c0_5] : memref<8x1xf32, #tpu.memory_space<vmem>>, vector<8x1xf32>
    tpu.vector_store %arg4[%c0_4, %c0_5], %6 {strides = array<i32>} : memref<8x1xf32, #tpu.memory_space<vmem>>, vector<8x1xf32>,
    %8 = arith.truncf %0 : vector<8x128xf32> to vector<8x128xbf16>
    %c0_6 = arith.constant 0 : index
    %c0_7 = arith.constant 0 : index
    %9 = vector.load %arg7[%c0_6, %c0_7] : memref<256x128xf32, #tpu.memory_space<vmem>>, vector<256x128xf32>
    %10 = arith.truncf %9 : vector<256x128xf32> to vector<256x128xbf16>
    %cst_8 = arith.constant dense<0.000000e+00> : vector<8x256xf32>
    %11 = tpu.matmul %8, %10, %cst_8 {dimension_numbers = #tpu.dot_dimension_numbers<[1], [1], [0], [0], [0, 0, 1, 0], [], []>} : vector<8x128xbf16>, vector<256x128xbf16>, vector<8x256xf32> -> vector<8x256xf32>
    %cst_9 = arith.constant 14.2857141 : f32
    %12 = vector.broadcast %cst_9 : f32 to vector<8x256xf32>
    %13 = arith.mulf %11, %12 : vector<8x256xf32>
    %c0_10 = arith.constant 0 : index
    %c0_11 = arith.constant 0 : index
    %14 = vector.load %arg5[%c0_10, %c0_11] : memref<8x256xf32, #tpu.memory_space<vmem>>, vector<8x256xf32>
    tpu.vector_store %arg5[%c0_10, %c0_11], %13 {strides = array<i32>} : memref<8x256xf32, #tpu.memory_space<vmem>>, vector<8x256xf32>,
    %c0_12 = arith.constant 0 : index
    %15 = memref.load %arg0[%c0_12] : memref<1xi32, #tpu.memory_space<smem>>
    %c0_i32 = arith.constant 0 : i32
    %16 = tpu.memref_slice %arg6[%15, %c0_i32] : memref<256x128xf32, #tpu.memory_space<any>> -> memref<8x128xf32, #tpu.memory_space<any>>
    tpu.enqueue_dma source(%arg2 : memref<8x128xf32, #tpu.memory_space<vmem>>) target(%16 : memref<8x128xf32, #tpu.memory_space<any>>) target_semaphore(%arg9 : memref<!tpu.dma_semaphore, #tpu.memory_space<semaphore_mem>>)
    %c0_i32_13 = arith.constant 0 : i32
    %17 = tpu.memref_slice %arg6[%15, %c0_i32_13] : memref<256x128xf32, #tpu.memory_space<any>> -> memref<8x128xf32, #tpu.memory_space<any>>
    tpu.wait_dma2 semaphore(%arg9 : memref<!tpu.dma_semaphore, #tpu.memory_space<semaphore_mem>>) src(%arg2 : memref<8x128xf32, #tpu.memory_space<vmem>>) dst(%17 : memref<8x128xf32, #tpu.memory_space<any>>)
    return
  }
}

</mosaic_0001>

<llo_original>
// kernel: moco_forward.3
$region0: #{moco_forward.3}
  #allocation0 [shape = 'u32[]', space=smem, size = 0x4, offset = 0x4, fixed_abs, tag = 'smem constant byte address 0x4 - core index']
  #allocation1 [shape = 'u32[144,128]{1,0:T(1,128)}', space=vmem, size = 0x12000, scoped, tag = 'internal scratch']
  #allocation2 [shape = 'f32[256,128]{1,0:T(8,128)}', space=vmem, size = 0x20000, scoped, tag = 'scratch operand']
  #allocation3 [shape = 's32[1]{0}', space=sflag, size = 0x4, scoped, tag = 'scratch operand']
  #allocation4 [shape = 's32[1]{0}', space=sflag, size = 0x4, scoped, tag = 'scratch operand']
  #allocation5 [shape = 's32[1]{0:T(128)S(6)}', space=smem, size = 0x200, scoped, tag = 'scoped memory for moco_forward.3']
  #allocation6 [shape = 's32[]', space=sflag, size = 0x4, offset = 0, fixed_abs, tag = 'sflag constant byte address 0x0 - dummy sync flag']
  #allocation7 [shape = 's32[]', space=sflag, size = 0x4, offset = 0, fixed_abs, tag = 'sflag constant byte address 0x0 - dummy sync flag']
  %s0 = inlined_call_operand.<no memory space> [shape: s32[1], index: 0, kind: input, shape index: {}]
  %s1 = inlined_call_operand.vmem [shape: f32[8,128], index: 1, kind: input, shape index: {}]
  %s2 = inlined_call_operand.vmem [shape: f32[8,128], index: 2, kind: input, shape index: {}]
  %s3 = inlined_call_operand.vmem [shape: f32[256,128], index: 3, kind: input, shape index: {}, may-alias: {3,6}]
  %s4 = inlined_call_operand.vmem [shape: f32[8,1], index: 4, kind: output, shape index: {0}]
  %s5 = inlined_call_operand.vmem [shape: f32[8,256], index: 5, kind: output, shape index: {1}]
  %s6 = inlined_call_operand.vmem [shape: f32[256,128], index: 6, kind: output, shape index: {2}, may-alias: {3,6}]
  %7 = xla_tuple %s4, %s5, %s6
  %s8 = sld [smem:[#allocation0]]
  $region98: #{moco_forward.3} parent=0
    _
  %s10 = ssub.s32 1, %s8
  %s11 = scalar_select 0, %s10, %s8
  %12 = sst [smem:[#allocation5]] %s0
  // Predicated region
  $region2: #{moco_forward.3} parent=0 // pred_check
    _
  $region3: #{moco_forward.3} parent=0 // pred_check_branch
    %14 = sbr.rel (0) target = $region5
  $region4: #{moco_forward.3} parent=0 // pred_region
    _
  $region5: #{moco_forward.3} parent=0 // pred_fallthru
    _
  // Predicated region
  $region6: #{moco_forward.3} parent=0 // pred_check
    _
  $region7: #{moco_forward.3} parent=0 // pred_check_branch
    %16 = sbr.rel (0) target = $region9
  $region8: #{moco_forward.3} parent=0 // pred_region
    _
  $region9: #{moco_forward.3} parent=0 // pred_fallthru
    _
  // Predicated region
  $region10: #{moco_forward.3} parent=0 // pred_check
    _
  $region11: #{moco_forward.3} parent=0 // pred_check_branch
    %18 = sbr.rel (0) target = $region13
  $region12: #{moco_forward.3} parent=0 // pred_region
    _
  $region13: #{moco_forward.3} parent=0 // pred_fallthru
    _
  %p21 = scmp.lt.u32.totalorder 256, 8
  %p22 = pneg %p21
  // Predicated region
  $region14: #{moco_forward.3} parent=0 // pred_check
    _
  $region15: #{moco_forward.3} parent=0 // pred_check_branch
    %24 = sbr.rel (%p21) target = $region17
  $region16: #{moco_forward.3} parent=0 // pred_region
    %s39 = sand.u32 256, 7
    %p40 = scmp.eq.s32.totalorder %s39, 0
    // Predicated region
    $region29: #{moco_forward.3} parent=16 // pred_check
      %p41 = pneg %p40
    $region30: #{moco_forward.3} parent=16 // pred_check_branch
      %43 = sbr.rel (%p41) target = $region32
    $region31: #{moco_forward.3} parent=16 // pred_region
      loop: start=0, step=1, limit=1
      $region33: #{moco_forward.3} parent=31 // loop_pre_header
        _
      $region34: #{moco_forward.3} parent=31 // loop_header
        %s45 = sphi 0, %s49
        %p46 = scmp.ge.s32.totalorder %s45, 1
        %s50 = sphi %s3, %s3
        %s51 = sphi [#allocation2], [#allocation2]
      $region35: #{moco_forward.3} parent=31 // loop_header_branch
        %48 = sbr.rel (%p46) target = $region39
      $region36: #{moco_forward.3} parent=31 // loop_body
        %v52 = vld [vmem:[%s50] sm:$0xff]
        %53 = vst [vmem:[%s51] sm:$0xff] %v52
        %v54 = vld [vmem:[%s50 + $0x8] sm:$0xff]
        %55 = vst [vmem:[%s51 + $0x8] sm:$0xff] %v54
        %v56 = vld [vmem:[%s50 + $0x10] sm:$0xff]
        %57 = vst [vmem:[%s51 + $0x10] sm:$0xff] %v56
        %v58 = vld [vmem:[%s50 + $0x18] sm:$0xff]
        %59 = vst [vmem:[%s51 + $0x18] sm:$0xff] %v58
        %v60 = vld [vmem:[%s50 + $0x20] sm:$0xff]
        %61 = vst [vmem:[%s51 + $0x20] sm:$0xff] %v60
        %v62 = vld [vmem:[%s50 + $0x28] sm:$0xff]
        %63 = vst [vmem:[%s51 + $0x28] sm:$0xff] %v62
        %v64 = vld [vmem:[%s50 + $0x30] sm:$0xff]
        %65 = vst [vmem:[%s51 + $0x30] sm:$0xff] %v64
        %v66 = vld [vmem:[%s50 + $0x38] sm:$0xff]
        %67 = vst [vmem:[%s51 + $0x38] sm:$0xff] %v66
        %v68 = vld [vmem:[%s50 + $0x40] sm:$0xff]
        %69 = vst [vmem:[%s51 + $0x40] sm:$0xff] %v68
        %v70 = vld [vmem:[%s50 + $0x48] sm:$0xff]
        %71 = vst [vmem:[%s51 + $0x48] sm:$0xff] %v70
        %v72 = vld [vmem:[%s50 + $0x50] sm:$0xff]
        %73 = vst [vmem:[%s51 + $0x50] sm:$0xff] %v72
        %v74 = vld [vmem:[%s50 + $0x58] sm:$0xff]
        %75 = vst [vmem:[%s51 + $0x58] sm:$0xff] %v74
        %v76 = vld [vmem:[%s50 + $0x60] sm:$0xff]
        %77 = vst [vmem:[%s51 + $0x60] sm:$0xff] %v76
        %v78 = vld [vmem:[%s50 + $0x68] sm:$0xff]
        %79 = vst [vmem:[%s51 + $0x68] sm:$0xff] %v78
        %v80 = vld [vmem:[%s50 + $0x70] sm:$0xff]
        %81 = vst [vmem:[%s51 + $0x70] sm:$0xff] %v80
        %v82 = vld [vmem:[%s50 + $0x78] sm:$0xff]
        %83 = vst [vmem:[%s51 + $0x78] sm:$0xff] %v82
        %v84 = vld [vmem:[%s50 + $0x80] sm:$0xff]
        %85 = vst [vmem:[%s51 + $0x80] sm:$0xff] %v84
        %v86 = vld [vmem:[%s50 + $0x88] sm:$0xff]
        %87 = vst [vmem:[%s51 + $0x88] sm:$0xff] %v86
        %v88 = vld [vmem:[%s50 + $0x90] sm:$0xff]
        %89 = vst [vmem:[%s51 + $0x90] sm:$0xff] %v88
        %v90 = vld [vmem:[%s50 + $0x98] sm:$0xff]
        %91 = vst [vmem:[%s51 + $0x98] sm:$0xff] %v90
        %v92 = vld [vmem:[%s50 + $0xa0] sm:$0xff]
        %93 = vst [vmem:[%s51 + $0xa0] sm:$0xff] %v92
        %v94 = vld [vmem:[%s50 + $0xa8] sm:$0xff]
        %95 = vst [vmem:[%s51 + $0xa8] sm:$0xff] %v94
        %v96 = vld [vmem:[%s50 + $0xb0] sm:$0xff]
        %97 = vst [vmem:[%s51 + $0xb0] sm:$0xff] %v96
        %v98 = vld [vmem:[%s50 + $0xb8] sm:$0xff]
        %99 = vst [vmem:[%s51 + $0xb8] sm:$0xff] %v98
        %v100 = vld [vmem:[%s50 + $0xc0] sm:$0xff]
        %101 = vst [vmem:[%s51 + $0xc0] sm:$0xff] %v100
        %v102 = vld [vmem:[%s50 + $0xc8] sm:$0xff]
        %103 = vst [vmem:[%s51 + $0xc8] sm:$0xff] %v102
        %v104 = vld [vmem:[%s50 + $0xd0] sm:$0xff]
        %105 = vst [vmem:[%s51 + $0xd0] sm:$0xff] %v104
        %v106 = vld [vmem:[%s50 + $0xd8] sm:$0xff]
        %107 = vst [vmem:[%s51 + $0xd8] sm:$0xff] %v106
        %v108 = vld [vmem:[%s50 + $0xe0] sm:$0xff]
        %109 = vst [vmem:[%s51 + $0xe0] sm:$0xff] %v108
        %v110 = vld [vmem:[%s50 + $0xe8] sm:$0xff]
        %111 = vst [vmem:[%s51 + $0xe8] sm:$0xff] %v110
        %v112 = vld [vmem:[%s50 + $0xf0] sm:$0xff]
        %113 = vst [vmem:[%s51 + $0xf0] sm:$0xff] %v112
        %v114 = vld [vmem:[%s50 + $0xf8] sm:$0xff]
        %115 = vst [vmem:[%s51 + $0xf8] sm:$0xff] %v114
      $region37: #{moco_forward.3} parent=31 // loop_footer
        %s49 = sadd.s32 1, %s45
      $region38: #{moco_forward.3} parent=31 // loop_footer_branch
        %44 = sbr.rel target = $region34
      $region39: #{moco_forward.3} parent=31 // loop_exit
        _
    $region32: #{moco_forward.3} parent=16 // pred_fallthru
      _
    %p116 = pneg %p40
    // Predicated region
    $region40: #{moco_forward.3} parent=16 // pred_check
      _
    $region41: #{moco_forward.3} parent=16 // pred_check_branch
      %118 = sbr.rel (%p40) target = $region43
    $region42: #{moco_forward.3} parent=16 // pred_region
      %s119 = sand.u32 256, 7
    $region43: #{moco_forward.3} parent=16 // pred_fallthru
      _
  $region17: #{moco_forward.3} parent=0 // pred_fallthru
    _
  // Predicated region
  $region18: #{moco_forward.3} parent=0 // pred_check
    %p25 = pneg %p21
  $region19: #{moco_forward.3} parent=0 // pred_check_branch
    %27 = sbr.rel (%p25) target = $region21
  $region20: #{moco_forward.3} parent=0 // pred_region
    %s28 = sshllo.u32 0, 256
    loop: start=0, step=1, limit=1
    $region22: #{moco_forward.3} parent=20 // loop_pre_header
      _
    $region23: #{moco_forward.3} parent=20 // loop_header
      %s30 = sphi 0, %s34
      %p31 = scmp.ge.s32.totalorder %s30, 1
      %s35 = sphi %s3, %s3
      %s36 = sphi [#allocation2], [#allocation2]
    $region24: #{moco_forward.3} parent=20 // loop_header_branch
      %33 = sbr.rel (%p31) target = $region28
    $region25: #{moco_forward.3} parent=20 // loop_body
      %v37 = vld [vmem:[%s35] sm:%s28]
      %38 = vst [vmem:[%s36] sm:%s28] %v37
    $region26: #{moco_forward.3} parent=20 // loop_footer
      %s34 = sadd.s32 1, %s30
    $region27: #{moco_forward.3} parent=20 // loop_footer_branch
      %29 = sbr.rel target = $region23
    $region28: #{moco_forward.3} parent=20 // loop_exit
      _
  $region21: #{moco_forward.3} parent=0 // pred_fallthru
    _
  // Predicated region
  $region44: #{moco_forward.3} parent=0 // pred_check
    _
  $region45: #{moco_forward.3} parent=0 // pred_check_branch
    %122 = sbr.rel (0) target = $region47
  $region46: #{moco_forward.3} parent=0 // pred_region
    %123 = vsyncadd [#allocation3], 4096
  $region47: #{moco_forward.3} parent=0 // pred_fallthru
    _
  %s124 = smul.u32 256, 1
  %s125 = sshll.u32 %s124, 4
  %126 = dma.done [#allocation3], %s125
  %v127 = vld [vmem:[%s1] sm:$0xff]
  %v128 = vld [vmem:[%s2] sm:$0xff]
  %v129 = vmul.f32 %v127, %v128
  %130 = vadd.xlane.f32.xlu0 %v129
  %v131 = vpop.xlane.xlu0 %130
  %v132 = vmul.f32 %v131, 14.285714
  %vm133 = vcmask 7168
  %134 = vst.msk [vmem:[%s4] sm:$0xff] %vm133, %v132
  %v135 = vpack.c.bf16 %v127, %v127
  %v136 = vld [vmem:[#allocation2] sm:$0xff]
  %v137 = vld [vmem:[#allocation2 + $0x8] sm:$0xff]
  %v138 = vld [vmem:[#allocation2 + $0x10] sm:$0xff]
  %v139 = vld [vmem:[#allocation2 + $0x18] sm:$0xff]
  %v140 = vld [vmem:[#allocation2 + $0x20] sm:$0xff]
  %v141 = vld [vmem:[#allocation2 + $0x28] sm:$0xff]
  %v142 = vld [vmem:[#allocation2 + $0x30] sm:$0xff]
  %v143 = vld [vmem:[#allocation2 + $0x38] sm:$0xff]
  %v144 = vld [vmem:[#allocation2 + $0x40] sm:$0xff]
  %v145 = vld [vmem:[#allocation2 + $0x48] sm:$0xff]
  %v146 = vld [vmem:[#allocation2 + $0x50] sm:$0xff]
  %v147 = vld [vmem:[#allocation2 + $0x58] sm:$0xff]
  %v148 = vld [vmem:[#allocation2 + $0x60] sm:$0xff]
  %v149 = vld [vmem:[#allocation2 + $0x68] sm:$0xff]
  %v150 = vld [vmem:[#allocation2 + $0x70] sm:$0xff]
  %v151 = vld [vmem:[#allocation2 + $0x78] sm:$0xff]
  %v152 = vld [vmem:[#allocation2 + $0x80] sm:$0xff]
  %v153 = vld [vmem:[#allocation2 + $0x88] sm:$0xff]
  %v154 = vld [vmem:[#allocation2 + $0x90] sm:$0xff]
  %v155 = vld [vmem:[#allocation2 + $0x98] sm:$0xff]
  %v156 = vld [vmem:[#allocation2 + $0xa0] sm:$0xff]
  %v157 = vld [vmem:[#allocation2 + $0xa8] sm:$0xff]
  %v158 = vld [vmem:[#allocation2 + $0xb0] sm:$0xff]
  %v159 = vld [vmem:[#allocation2 + $0xb8] sm:$0xff]
  %v160 = vld [vmem:[#allocation2 + $0xc0] sm:$0xff]
  %v161 = vld [vmem:[#allocation2 + $0xc8] sm:$0xff]
  %v162 = vld [vmem:[#allocation2 + $0xd0] sm:$0xff]
  %v163 = vld [vmem:[#allocation2 + $0xd8] sm:$0xff]
  %v164 = vld [vmem:[#allocation2 + $0xe0] sm:$0xff]
  %v165 = vld [vmem:[#allocation2 + $0xe8] sm:$0xff]
  %v166 = vld [vmem:[#allocation2 + $0xf0] sm:$0xff]
  %v167 = vld [vmem:[#allocation2 + $0xf8] sm:$0xff]
  %v168 = vpack.c.bf16 %v137, %v136
  %v169 = vpack.c.bf16 %v139, %v138
  %v170 = vpack.c.bf16 %v141, %v140
  %v171 = vpack.c.bf16 %v143, %v142
  %v172 = vpack.c.bf16 %v145, %v144
  %v173 = vpack.c.bf16 %v147, %v146
  %v174 = vpack.c.bf16 %v149, %v148
  %v175 = vpack.c.bf16 %v151, %v150
  %v176 = vpack.c.bf16 %v153, %v152
  %v177 = vpack.c.bf16 %v155, %v154
  %v178 = vpack.c.bf16 %v157, %v156
  %v179 = vpack.c.bf16 %v159, %v158
  %v180 = vpack.c.bf16 %v161, %v160
  %v181 = vpack.c.bf16 %v163, %v162
  %v182 = vpack.c.bf16 %v165, %v164
  %v183 = vpack.c.bf16 %v167, %v166
  %184 = vmatprep.subr.bf16.mxu0 0
  %185 = vmatpush1.bf16.xpose.msra.mxu0 %v168
  %186 = vmatprep.subr.bf16.mxu0 0
  %187 = vmatpush1.bf16.xpose.msra.mxu0 %v169
  %188 = vmatprep.subr.bf16.mxu0 0
  %189 = vmatpush1.bf16.xpose.msra.mxu0 %v170
  %190 = vmatprep.subr.bf16.mxu0 0
  %191 = vmatpush1.bf16.xpose.msra.mxu0 %v171
  %192 = vmatprep.subr.bf16.mxu0 0
  %193 = vmatpush1.bf16.xpose.msra.mxu0 %v172
  %194 = vmatprep.subr.bf16.mxu0 0
  %195 = vmatpush1.bf16.xpose.msra.mxu0 %v173
  %196 = vmatprep.subr.bf16.mxu0 0
  %197 = vmatpush1.bf16.xpose.msra.mxu0 %v174
  %198 = vmatprep.subr.bf16.mxu0 0
  %199 = vmatpush1.bf16.xpose.msra.mxu0 %v175
  %200 = vmatprep.subr.bf16.mxu0 0
  %201 = vmatpush1.bf16.xpose.msra.mxu0 %v176
  %202 = vmatprep.subr.bf16.mxu0 0
  %203 = vmatpush1.bf16.xpose.msra.mxu0 %v177
  %204 = vmatprep.subr.bf16.mxu0 0
  %205 = vmatpush1.bf16.xpose.msra.mxu0 %v178
  %206 = vmatprep.subr.bf16.mxu0 0
  %207 = vmatpush1.bf16.xpose.msra.mxu0 %v179
  %208 = vmatprep.subr.bf16.mxu0 0
  %209 = vmatpush1.bf16.xpose.msra.mxu0 %v180
  %210 = vmatprep.subr.bf16.mxu0 0
  %211 = vmatpush1.bf16.xpose.msra.mxu0 %v181
  %212 = vmatprep.subr.bf16.mxu0 0
  %213 = vmatpush1.bf16.xpose.msra.mxu0 %v182
  %214 = vmatprep.subr.bf16.mxu0 0
  %215 = vmatpush1.bf16.xpose.msra.mxu0 %v183
  %216 = vmatprep.mubr.bf16.mxu0 0
  %217 = vmatmul.mubr.bf16.gmra.mrb[0].mxu0 %v135
  %v218 = vpop.f32.mrb[0].mxu0
  %v219 = vadd.f32 0.0, %v218
  %v220 = vpop.f32.mrb[0].mxu0
  %v221 = vadd.f32 0.0, %v220
  %v222 = vpop.f32.mrb[0].mxu0
  %v223 = vpop.f32.mrb[0].mxu0
  %224 = vdwg.mxu0
  %v225 = vmul.f32 %v219, 14.285714
  %v226 = vmul.f32 %v221, 14.285714
  %227 = vst [vmem:[%s5] sm:$0xff] %v225
  %228 = vst [vmem:[%s5 + $0x8] sm:$0xff] %v226
  %s229 = sld [smem:[#allocation5]]
  %s230 = scalar_lea.vmem %s6, %s229
  %p232 = scmp.lt.u32.totalorder 8, 8
  %p233 = pneg %p232
  // Predicated region
  $region48: #{moco_forward.3} parent=0 // pred_check
    _
  $region49: #{moco_forward.3} parent=0 // pred_check_branch
    %235 = sbr.rel (%p232) target = $region51
  $region50: #{moco_forward.3} parent=0 // pred_region
    %s250 = sand.u32 8, 7
    %p251 = scmp.eq.s32.totalorder %s250, 0
    // Predicated region
    $region63: #{moco_forward.3} parent=50 // pred_check
      %p252 = pneg %p251
    $region64: #{moco_forward.3} parent=50 // pred_check_branch
      %254 = sbr.rel (%p252) target = $region66
    $region65: #{moco_forward.3} parent=50 // pred_region
      loop: start=0, step=1, limit=1
      $region67: #{moco_forward.3} parent=65 // loop_pre_header
        _
      $region68: #{moco_forward.3} parent=65 // loop_header
        %s256 = sphi 0, %s260
        %p257 = scmp.ge.s32.totalorder %s256, 1
        %s261 = sphi %s2, %s2
        %s262 = sphi %s230, %s230
      $region69: #{moco_forward.3} parent=65 // loop_header_branch
        %259 = sbr.rel (%p257) target = $region73
      $region70: #{moco_forward.3} parent=65 // loop_body
        %v263 = vld [vmem:[%s261] sm:$0xff]
        %264 = vst [vmem:[%s262] sm:$0xff] %v263
      $region71: #{moco_forward.3} parent=65 // loop_footer
        %s260 = sadd.s32 1, %s256
      $region72: #{moco_forward.3} parent=65 // loop_footer_branch
        %255 = sbr.rel target = $region68
      $region73: #{moco_forward.3} parent=65 // loop_exit
        _
    $region66: #{moco_forward.3} parent=50 // pred_fallthru
      _
    %p265 = pneg %p251
    // Predicated region
    $region74: #{moco_forward.3} parent=50 // pred_check
      _
    $region75: #{moco_forward.3} parent=50 // pred_check_branch
      %267 = sbr.rel (%p251) target = $region77
    $region76: #{moco_forward.3} parent=50 // pred_region
      %s268 = sand.u32 8, 7
    $region77: #{moco_forward.3} parent=50 // pred_fallthru
      _
  $region51: #{moco_forward.3} parent=0 // pred_fallthru
    _
  // Predicated region
  $region52: #{moco_forward.3} parent=0 // pred_check
    %p236 = pneg %p232
  $region53: #{moco_forward.3} parent=0 // pred_check_branch
    %238 = sbr.rel (%p236) target = $region55
  $region54: #{moco_forward.3} parent=0 // pred_region
    %s239 = sshllo.u32 0, 8
    loop: start=0, step=1, limit=1
    $region56: #{moco_forward.3} parent=54 // loop_pre_header
      _
    $region57: #{moco_forward.3} parent=54 // loop_header
      %s241 = sphi 0, %s245
      %p242 = scmp.ge.s32.totalorder %s241, 1
      %s246 = sphi %s2, %s2
      %s247 = sphi %s230, %s230
    $region58: #{moco_forward.3} parent=54 // loop_header_branch
      %244 = sbr.rel (%p242) target = $region62
    $region59: #{moco_forward.3} parent=54 // loop_body
      %v248 = vld [vmem:[%s246] sm:%s239]
      %249 = vst [vmem:[%s247] sm:%s239] %v248
    $region60: #{moco_forward.3} parent=54 // loop_footer
      %s245 = sadd.s32 1, %s241
    $region61: #{moco_forward.3} parent=54 // loop_footer_branch
      %240 = sbr.rel target = $region57
    $region62: #{moco_forward.3} parent=54 // loop_exit
      _
  $region55: #{moco_forward.3} parent=0 // pred_fallthru
    _
  // Predicated region
  $region78: #{moco_forward.3} parent=0 // pred_check
    _
  $region79: #{moco_forward.3} parent=0 // pred_check_branch
    %271 = sbr.rel (0) target = $region81
  $region80: #{moco_forward.3} parent=0 // pred_region
    %272 = vsyncadd [#allocation4], 128
  $region81: #{moco_forward.3} parent=0 // pred_fallthru
    _
  %s273 = smul.u32 8, 1
  %s274 = sshll.u32 %s273, 4
  %275 = dma.done [#allocation4], %s274
  // Predicated region
  $region82: #{moco_forward.3} parent=0 // pred_check
    _
  $region83: #{moco_forward.3} parent=0 // pred_check_branch
    %277 = sbr.rel (0) target = $region85
  $region84: #{moco_forward.3} parent=0 // pred_region
    _
  $region85: #{moco_forward.3} parent=0 // pred_fallthru
    _
  // Predicated region
  $region86: #{moco_forward.3} parent=0 // pred_check
    _
  $region87: #{moco_forward.3} parent=0 // pred_check_branch
    %279 = sbr.rel (0) target = $region89
  $region88: #{moco_forward.3} parent=0 // pred_region
    _
  $region89: #{moco_forward.3} parent=0 // pred_fallthru
    _
  // Predicated region
  $region90: #{moco_forward.3} parent=0 // pred_check
    _
  $region91: #{moco_forward.3} parent=0 // pred_check_branch
    %281 = sbr.rel (0) target = $region93
  $region92: #{moco_forward.3} parent=0 // pred_region
    _
  $region93: #{moco_forward.3} parent=0 // pred_fallthru
    _
  // Predicated region
  $region94: #{moco_forward.3} parent=0 // pred_check
    _
  $region95: #{moco_forward.3} parent=0 // pred_check_branch
    %283 = sbr.rel (0) target = $region97
  $region96: #{moco_forward.3} parent=0 // pred_region
    _
  $region97: #{moco_forward.3} parent=0 // pred_fallthru
    _
  %284 = vsyncmov [#allocation3]
  %s285 = vpop.sfrf %284
  %p286 = scmp.eq.s32.totalorder %s285, 0
  %p287 = pneg %p286
  %289 = shalt.err (%p287)
  %290 = vsyncmov [#allocation4]
  %s291 = vpop.sfrf %290
  %p292 = scmp.eq.s32.totalorder %s291, 0
  %p293 = pneg %p292
  %295 = shalt.err (%p293)

// kernel: moco_forward.2
$region0: #{moco_forward.2}
  #allocation0 [shape = 'u32[]', space=smem, size = 0x4, offset = 0x4, fixed_abs, tag = 'smem constant byte address 0x4 - core index']
  #allocation1 [shape = 'u32[144,128]{1,0:T(1,128)}', space=vmem, size = 0x12000, scoped, tag = 'internal scratch']
  %s0 = inlined_call_operand.vmem [shape: bf16[2,2048,128], index: 0, kind: input, shape index: {}]
  %s1 = inlined_call_operand.vmem [shape: bf16[8,2048], index: 1, kind: input, shape index: {}]
  %s2 = inlined_call_operand.vmem [shape: bf16[2,128,32], index: 2, kind: input, shape index: {}]
  %s3 = inlined_call_operand.vmem [shape: bf16[2,32,64], index: 3, kind: input, shape index: {}]
  %s4 = inlined_call_operand.vmem [shape: f32[2,1,64], index: 4, kind: input, shape index: {}]
  %s5 = inlined_call_operand.vmem [shape: f32[2,1,64], index: 5, kind: input, shape index: {}]
  %s6 = inlined_call_operand.vmem [shape: f32[2,1,64], index: 6, kind: input, shape index: {}]
  %s7 = inlined_call_operand.vmem [shape: bf16[2,64,128], index: 7, kind: input, shape index: {}]
  %s8 = inlined_call_operand.vmem [shape: f32[2,1,128], index: 8, kind: input, shape index: {}]
  %s9 = inlined_call_operand.vmem [shape: f32[2,1,128], index: 9, kind: input, shape index: {}]
  %s10 = inlined_call_operand.vmem [shape: f32[2,1,128], index: 10, kind: input, shape index: {}]
  %s11 = inlined_call_operand.vmem [shape: f32[2,8,128], index: 11, kind: output, shape index: {}]
  %s12 = sld [smem:[#allocation0]]
  $region77: #{moco_forward.2} parent=0
    _
  %s14 = ssub.s32 1, %s12
  %s15 = scalar_select 0, %s14, %s12
  loop: start=0, step=1, limit=4
  $region2: #{moco_forward.2} parent=0 // loop_pre_header
    _
  $region3: #{moco_forward.2} parent=0 // loop_header
    %s17 = sphi 0, %s21
    %p18 = scmp.ge.s32.totalorder %s17, 4
    %s27 = sphi 0, %s29
    %s30 = sphi 0, %s27
    %s31 = sphi 0, %s30
    %s47 = sphi 0, %s31
    %s51 = sphi 0, %s51
    %s53 = sphi 0, %s51
    %s54 = sphi 0, %s53
    %s68 = sphi 0, %s54
    %s74 = sphi 0, %s76
    %s77 = sphi 0, %s74
    %s78 = sphi 0, %s77
    %s94 = sphi 0, %s78
    %s100 = sphi 0, %s102
    %s103 = sphi 0, %s100
    %s104 = sphi 0, %s103
    %s120 = sphi 0, %s104
    %s126 = sphi 0, %s128
    %s129 = sphi 0, %s126
    %s130 = sphi 0, %s129
    %s146 = sphi 0, %s130
    %s152 = sphi 0, %s154
    %s155 = sphi 0, %s152
    %s156 = sphi 0, %s155
    %s172 = sphi 0, %s156
    %s178 = sphi 0, %s180
    %s181 = sphi 0, %s178
    %s182 = sphi 0, %s181
    %s198 = sphi 0, %s182
    %s204 = sphi 0, %s206
    %s207 = sphi 0, %s204
    %s208 = sphi 0, %s207
    %s224 = sphi 0, %s208
    %s230 = sphi 0, %s232
    %s233 = sphi 0, %s230
    %s234 = sphi 0, %s233
    %s250 = sphi 0, %s234
    %s256 = sphi 0, %s258
    %s259 = sphi 0, %s256
    %s260 = sphi 0, %s259
    %s276 = sphi 0, %s260
    %s282 = sphi 0, %s284
    %s285 = sphi 0, %s282
    %s286 = sphi 0, %s285
    %s302 = sphi 0, %s286
    %s308 = sphi 0, %s310
    %s311 = sphi 0, %s308
    %s312 = sphi 0, %s311
    %s328 = sphi 0, %s312
  $region4: #{moco_forward.2} parent=0 // loop_header_branch
    %20 = sbr.rel (%p18) target = $region8
  $region5: #{moco_forward.2} parent=0 // loop_body
    %s22 = ssub.s32 %s17, 1
    %s23 = ssub.s32 %s17, 2
    %s24 = sadd.s32 %s17, 1
    %s25 = ssub.s32 %s17, %s24
    %p26 = scmp.eq.s32.totalorder %s25, 0
    %s28 = sadd.s32 %s27, 1
    %s29 = scalar_select %p26, %s27, %s28
    %p32 = pneg %p26
    %p33 = scmp.eq.s32.totalorder %s17, 1
    %p34 = por %p32, %p33
    %p35 = scmp.ne.s32.totalorder %s27, %s30
    %p36 = scmp.eq.s32.totalorder %s17, 0
    %p37 = por %p35, %p36
    %p38 = scmp.ne.s32.totalorder %s27, %s30
    %p39 = scmp.eq.s32.totalorder %s22, 1
    %p40 = por %p38, %p39
    %p41 = scmp.ne.s32.totalorder %s30, %s31
    %p42 = scmp.eq.s32.totalorder %s22, 0
    %p43 = por %p41, %p42
    %p44 = scmp.ne.s32.totalorder %s30, %s31
    %p45 = scmp.eq.s32.totalorder %s23, 1
    %p46 = por %p44, %p45
    %p48 = scmp.ne.s32.totalorder %s31, %s47
    %p49 = scmp.eq.s32.totalorder %s23, 0
    %p50 = por %p48, %p49
    %s52 = sadd.s32 %s51, 1
    %p55 = scmp.eq.s32.totalorder %s17, 1
    %p56 = scmp.ne.s32.totalorder %s51, %s53
    %p57 = scmp.eq.s32.totalorder %s17, 0
    %p58 = por %p56, %p57
    %p59 = scmp.ne.s32.totalorder %s51, %s53
    %p60 = scmp.eq.s32.totalorder %s22, 1
    %p61 = por %p59, %p60
    %p62 = scmp.ne.s32.totalorder %s53, %s54
    %p63 = scmp.eq.s32.totalorder %s22, 0
    %p64 = por %p62, %p63
    %p65 = scmp.ne.s32.totalorder %s53, %s54
    %p66 = scmp.eq.s32.totalorder %s23, 1
    %p67 = por %p65, %p66
    %p69 = scmp.ne.s32.totalorder %s54, %s68
    %p70 = scmp.eq.s32.totalorder %s23, 0
    %p71 = por %p69, %p70
    %s72 = ssub.s32 %s17, %s24
    %p73 = scmp.eq.s32.totalorder %s72, 0
    %s75 = sadd.s32 %s74, 1
    %s76 = scalar_select %p73, %s74, %s75
    %p79 = pneg %p73
    %p80 = scmp.eq.s32.totalorder %s17, 1
    %p81 = por %p79, %p80
    %p82 = scmp.ne.s32.totalorder %s74, %s77
    %p83 = scmp.eq.s32.totalorder %s17, 0
    %p84 = por %p82, %p83
    %p85 = scmp.ne.s32.totalorder %s74, %s77
    %p86 = scmp.eq.s32.totalorder %s22, 1
    %p87 = por %p85, %p86
    %p88 = scmp.ne.s32.totalorder %s77, %s78
    %p89 = scmp.eq.s32.totalorder %s22, 0
    %p90 = por %p88, %p89
    %p91 = scmp.ne.s32.totalorder %s77, %s78
    %p92 = scmp.eq.s32.totalorder %s23, 1
    %p93 = por %p91, %p92
    %p95 = scmp.ne.s32.totalorder %s78, %s94
    %p96 = scmp.eq.s32.totalorder %s23, 0
    %p97 = por %p95, %p96
    %s98 = ssub.s32 %s17, %s24
    %p99 = scmp.eq.s32.totalorder %s98, 0
    %s101 = sadd.s32 %s100, 1
    %s102 = scalar_select %p99, %s100, %s101
    %p105 = pneg %p99
    %p106 = scmp.eq.s32.totalorder %s17, 1
    %p107 = por %p105, %p106
    %p108 = scmp.ne.s32.totalorder %s100, %s103
    %p109 = scmp.eq.s32.totalorder %s17, 0
    %p110 = por %p108, %p109
    %p111 = scmp.ne.s32.totalorder %s100, %s103
    %p112 = scmp.eq.s32.totalorder %s22, 1
    %p113 = por %p111, %p112
    %p114 = scmp.ne.s32.totalorder %s103, %s104
    %p115 = scmp.eq.s32.totalorder %s22, 0
    %p116 = por %p114, %p115
    %p117 = scmp.ne.s32.totalorder %s103, %s104
    %p118 = scmp.eq.s32.totalorder %s23, 1
    %p119 = por %p117, %p118
    %p121 = scmp.ne.s32.totalorder %s104, %s120
    %p122 = scmp.eq.s32.totalorder %s23, 0
    %p123 = por %p121, %p122
    %s124 = ssub.s32 %s17, %s24
    %p125 = scmp.eq.s32.totalorder %s124, 0
    %s127 = sadd.s32 %s126, 1
    %s128 = scalar_select %p125, %s126, %s127
    %p131 = pneg %p125
    %p132 = scmp.eq.s32.totalorder %s17, 1
    %p133 = por %p131, %p132
    %p134 = scmp.ne.s32.totalorder %s126, %s129
    %p135 = scmp.eq.s32.totalorder %s17, 0
    %p136 = por %p134, %p135
    %p137 = scmp.ne.s32.totalorder %s126, %s129
    %p138 = scmp.eq.s32.totalorder %s22, 1
    %p139 = por %p137, %p138
    %p140 = scmp.ne.s32.totalorder %s129, %s130
    %p141 = scmp.eq.s32.totalorder %s22, 0
    %p142 = por %p140, %p141
    %p143 = scmp.ne.s32.totalorder %s129, %s130
    %p144 = scmp.eq.s32.totalorder %s23, 1
    %p145 = por %p143, %p144
    %p147 = scmp.ne.s32.totalorder %s130, %s146
    %p148 = scmp.eq.s32.totalorder %s23, 0
    %p149 = por %p147, %p148
    %s150 = ssub.s32 %s17, %s24
    %p151 = scmp.eq.s32.totalorder %s150, 0
    %s153 = sadd.s32 %s152, 1
    %s154 = scalar_select %p151, %s152, %s153
    %p157 = pneg %p151
    %p158 = scmp.eq.s32.totalorder %s17, 1
    %p159 = por %p157, %p158
    %p160 = scmp.ne.s32.totalorder %s152, %s155
    %p161 = scmp.eq.s32.totalorder %s17, 0
    %p162 = por %p160, %p161
    %p163 = scmp.ne.s32.totalorder %s152, %s155
    %p164 = scmp.eq.s32.totalorder %s22, 1
    %p165 = por %p163, %p164
    %p166 = scmp.ne.s32.totalorder %s155, %s156
    %p167 = scmp.eq.s32.totalorder %s22, 0
    %p168 = por %p166, %p167
    %p169 = scmp.ne.s32.totalorder %s155, %s156
    %p170 = scmp.eq.s32.totalorder %s23, 1
    %p171 = por %p169, %p170
    %p173 = scmp.ne.s32.totalorder %s156, %s172
    %p174 = scmp.eq.s32.totalorder %s23, 0
    %p175 = por %p173, %p174
    %s176 = ssub.s32 %s17, %s24
    %p177 = scmp.eq.s32.totalorder %s176, 0
    %s179 = sadd.s32 %s178, 1
    %s180 = scalar_select %p177, %s178, %s179
    %p183 = pneg %p177
    %p184 = scmp.eq.s32.totalorder %s17, 1
    %p185 = por %p183, %p184
    %p186 = scmp.ne.s32.totalorder %s178, %s181
    %p187 = scmp.eq.s32.totalorder %s17, 0
    %p188 = por %p186, %p187
    %p189 = scmp.ne.s32.totalorder %s178, %s181
    %p190 = scmp.eq.s32.totalorder %s22, 1
    %p191 = por %p189, %p190
    %p192 = scmp.ne.s32.totalorder %s181, %s182
    %p193 = scmp.eq.s32.totalorder %s22, 0
    %p194 = por %p192, %p193
    %p195 = scmp.ne.s32.totalorder %s181, %s182
    %p196 = scmp.eq.s32.totalorder %s23, 1
    %p197 = por %p195, %p196
    %p199 = scmp.ne.s32.totalorder %s182, %s198
    %p200 = scmp.eq.s32.totalorder %s23, 0
    %p201 = por %p199, %p200
    %s202 = ssub.s32 %s17, %s24
    %p203 = scmp.eq.s32.totalorder %s202, 0
    %s205 = sadd.s32 %s204, 1
    %s206 = scalar_select %p203, %s204, %s205
    %p209 = pneg %p203
    %p210 = scmp.eq.s32.totalorder %s17, 1
    %p211 = por %p209, %p210
    %p212 = scmp.ne.s32.totalorder %s204, %s207
    %p213 = scmp.eq.s32.totalorder %s17, 0
    %p214 = por %p212, %p213
    %p215 = scmp.ne.s32.totalorder %s204, %s207
    %p216 = scmp.eq.s32.totalorder %s22, 1
    %p217 = por %p215, %p216
    %p218 = scmp.ne.s32.totalorder %s207, %s208
    %p219 = scmp.eq.s32.totalorder %s22, 0
    %p220 = por %p218, %p219
    %p221 = scmp.ne.s32.totalorder %s207, %s208
    %p222 = scmp.eq.s32.totalorder %s23, 1
    %p223 = por %p221, %p222
    %p225 = scmp.ne.s32.totalorder %s208, %s224
    %p226 = scmp.eq.s32.totalorder %s23, 0
    %p227 = por %p225, %p226
    %s228 = ssub.s32 %s17, %s24
    %p229 = scmp.eq.s32.totalorder %s228, 0
    %s231 = sadd.s32 %s230, 1
    %s232 = scalar_select %p229, %s230, %s231
    %p235 = pneg %p229
    %p236 = scmp.eq.s32.totalorder %s17, 1
    %p237 = por %p235, %p236
    %p238 = scmp.ne.s32.totalorder %s230, %s233
    %p239 = scmp.eq.s32.totalorder %s17, 0
    %p240 = por %p238, %p239
    %p241 = scmp.ne.s32.totalorder %s230, %s233
    %p242 = scmp.eq.s32.totalorder %s22, 1
    %p243 = por %p241, %p242
    %p244 = scmp.ne.s32.totalorder %s233, %s234
    %p245 = scmp.eq.s32.totalorder %s22, 0
    %p246 = por %p244, %p245
    %p247 = scmp.ne.s32.totalorder %s233, %s234
    %p248 = scmp.eq.s32.totalorder %s23, 1
    %p249 = por %p247, %p248
    %p251 = scmp.ne.s32.totalorder %s234, %s250
    %p252 = scmp.eq.s32.totalorder %s23, 0
    %p253 = por %p251, %p252
    %s254 = ssub.s32 %s17, %s24
    %p255 = scmp.eq.s32.totalorder %s254, 0
    %s257 = sadd.s32 %s256, 1
    %s258 = scalar_select %p255, %s256, %s257
    %p261 = pneg %p255
    %p262 = scmp.eq.s32.totalorder %s17, 1
    %p263 = por %p261, %p262
    %p264 = scmp.ne.s32.totalorder %s256, %s259
    %p265 = scmp.eq.s32.totalorder %s17, 0
    %p266 = por %p264, %p265
    %p267 = scmp.ne.s32.totalorder %s256, %s259
    %p268 = scmp.eq.s32.totalorder %s22, 1
    %p269 = por %p267, %p268
    %p270 = scmp.ne.s32.totalorder %s259, %s260
    %p271 = scmp.eq.s32.totalorder %s22, 0
    %p272 = por %p270, %p271
    %p273 = scmp.ne.s32.totalorder %s259, %s260
    %p274 = scmp.eq.s32.totalorder %s23, 1
    %p275 = por %p273, %p274
    %p277 = scmp.ne.s32.totalorder %s260, %s276
    %p278 = scmp.eq.s32.totalorder %s23, 0
    %p279 = por %p277, %p278
    %s280 = ssub.s32 %s17, %s24
    %p281 = scmp.eq.s32.totalorder %s280, 0
    %s283 = sadd.s32 %s282, 1
    %s284 = scalar_select %p281, %s282, %s283
    %p287 = pneg %p281
    %p288 = scmp.eq.s32.totalorder %s17, 1
    %p289 = por %p287, %p288
    %p290 = scmp.ne.s32.totalorder %s282, %s285
    %p291 = scmp.eq.s32.totalorder %s17, 0
    %p292 = por %p290, %p291
    %p293 = scmp.ne.s32.totalorder %s282, %s285
    %p294 = scmp.eq.s32.totalorder %s22, 1
    %p295 = por %p293, %p294
    %p296 = scmp.ne.s32.totalorder %s285, %s286
    %p297 = scmp.eq.s32.totalorder %s22, 0
    %p298 = por %p296, %p297
    %p299 = scmp.ne.s32.totalorder %s285, %s286
    %p300 = scmp.eq.s32.totalorder %s23, 1
    %p301 = por %p299, %p300
    %p303 = scmp.ne.s32.totalorder %s286, %s302
    %p304 = scmp.eq.s32.totalorder %s23, 0
    %p305 = por %p303, %p304
    %s306 = ssub.s32 %s17, %s24
    %p307 = scmp.eq.s32.totalorder %s306, 0
    %s309 = sadd.s32 %s308, 1
    %s310 = scalar_select %p307, %s308, %s309
    %p313 = pneg %p307
    %p314 = scmp.eq.s32.totalorder %s17, 1
    %p315 = por %p313, %p314
    %p316 = scmp.ne.s32.totalorder %s308, %s311
    %p317 = scmp.eq.s32.totalorder %s17, 0
    %p318 = por %p316, %p317
    %p319 = scmp.ne.s32.totalorder %s308, %s311
    %p320 = scmp.eq.s32.totalorder %s22, 1
    %p321 = por %p319, %p320
    %p322 = scmp.ne.s32.totalorder %s311, %s312
    %p323 = scmp.eq.s32.totalorder %s22, 0
    %p324 = por %p322, %p323
    %p325 = scmp.ne.s32.totalorder %s311, %s312
    %p326 = scmp.eq.s32.totalorder %s23, 1
    %p327 = por %p325, %p326
    %p329 = scmp.ne.s32.totalorder %s312, %s328
    %p330 = scmp.eq.s32.totalorder %s23, 0
    %p331 = por %p329, %p330
    %p332 = scmp.le.s32.totalorder 1, %s17
    %p333 = scmp.lt.s32.totalorder %s17, 3
    %p334 = pnand %p332, %p333
    %p335 = pneg %p334
    // Predicated region
    $region9: #{moco_forward.2} parent=5 // pred_check
      _
    $region10: #{moco_forward.2} parent=5 // pred_check_branch
      %337 = sbr.rel (%p334) target = $region12
    $region11: #{moco_forward.2} parent=5 // pred_region
      %s338 = ssub.s32 %s17, 1
      // Predicated region
      $region13: #{moco_forward.2} parent=11 // pred_check
        %p339 = pneg %p64
      $region14: #{moco_forward.2} parent=11 // pred_check_branch
        %341 = sbr.rel (%p339) target = $region16
      $region15: #{moco_forward.2} parent=11 // pred_region
        _
      $region16: #{moco_forward.2} parent=11 // pred_fallthru
        _
    $region12: #{moco_forward.2} parent=5 // pred_fallthru
      _
    %p342 = scmp.lt.s32.totalorder %s17, 2
    // Predicated region
    $region17: #{moco_forward.2} parent=5 // pred_check
      %p343 = pneg %p342
    $region18: #{moco_forward.2} parent=5 // pred_check_branch
      %345 = sbr.rel (%p343) target = $region20
    $region19: #{moco_forward.2} parent=5 // pred_region
      // Predicated region
      $region21: #{moco_forward.2} parent=19 // pred_check
        %p346 = pneg %p37
      $region22: #{moco_forward.2} parent=19 // pred_check_branch
        %348 = sbr.rel (%p346) target = $region24
      $region23: #{moco_forward.2} parent=19 // pred_region
        %p349 = scmp.lt.s32.totalorder %s17, 1
        %s350 = scalar_select %p349, %s17, 1
        %s351 = smul.addr %s350, 256
        %s352 = smul.addr %s351, 4
        %s353 = scalar_lea.vmem %s0, %s352
      $region24: #{moco_forward.2} parent=19 // pred_fallthru
        _
      // Predicated region
      $region25: #{moco_forward.2} parent=19 // pred_check
        %p354 = pneg %p84
      $region26: #{moco_forward.2} parent=19 // pred_check_branch
        %356 = sbr.rel (%p354) target = $region28
      $region27: #{moco_forward.2} parent=19 // pred_region
        %p357 = scmp.lt.s32.totalorder %s17, 1
        %s358 = scalar_select %p357, %s17, 1
        %s359 = smul.addr %s358, 16
        %s360 = smul.addr %s359, 4
        %s361 = scalar_lea.vmem %s2, %s360
      $region28: #{moco_forward.2} parent=19 // pred_fallthru
        _
      // Predicated region
      $region29: #{moco_forward.2} parent=19 // pred_check
        %p362 = pneg %p110
      $region30: #{moco_forward.2} parent=19 // pred_check_branch
        %364 = sbr.rel (%p362) target = $region32
      $region31: #{moco_forward.2} parent=19 // pred_region
        %p365 = scmp.lt.s32.totalorder %s17, 1
        %s366 = scalar_select %p365, %s17, 1
        %s367 = smul.addr %s366, 4
        %s368 = smul.addr %s367, 4
        %s369 = scalar_lea.vmem %s3, %s368
      $region32: #{moco_forward.2} parent=19 // pred_fallthru
        _
      // Predicated region
      $region33: #{moco_forward.2} parent=19 // pred_check
        %p370 = pneg %p136
      $region34: #{moco_forward.2} parent=19 // pred_check_branch
        %372 = sbr.rel (%p370) target = $region36
      $region35: #{moco_forward.2} parent=19 // pred_region
        %p373 = scmp.lt.s32.totalorder %s17, 1
        %s374 = scalar_select %p373, %s17, 1
        %s375 = scalar_lea.vmem %s4, %s374
      $region36: #{moco_forward.2} parent=19 // pred_fallthru
        _
      // Predicated region
      $region37: #{moco_forward.2} parent=19 // pred_check
        %p376 = pneg %p162
      $region38: #{moco_forward.2} parent=19 // pred_check_branch
        %378 = sbr.rel (%p376) target = $region40
      $region39: #{moco_forward.2} parent=19 // pred_region
        %p379 = scmp.lt.s32.totalorder %s17, 1
        %s380 = scalar_select %p379, %s17, 1
        %s381 = scalar_lea.vmem %s5, %s380
      $region40: #{moco_forward.2} parent=19 // pred_fallthru
        _
      // Predicated region
      $region41: #{moco_forward.2} parent=19 // pred_check
        %p382 = pneg %p188
      $region42: #{moco_forward.2} parent=19 // pred_check_branch
        %384 = sbr.rel (%p382) target = $region44
      $region43: #{moco_forward.2} parent=19 // pred_region
        %p385 = scmp.lt.s32.totalorder %s17, 1
        %s386 = scalar_select %p385, %s17, 1
        %s387 = scalar_lea.vmem %s6, %s386
      $region44: #{moco_forward.2} parent=19 // pred_fallthru
        _
      // Predicated region
      $region45: #{moco_forward.2} parent=19 // pred_check
        %p388 = pneg %p214
      $region46: #{moco_forward.2} parent=19 // pred_check_branch
        %390 = sbr.rel (%p388) target = $region48
      $region47: #{moco_forward.2} parent=19 // pred_region
        %p391 = scmp.lt.s32.totalorder %s17, 1
        %s392 = scalar_select %p391, %s17, 1
        %s393 = smul.addr %s392, 8
        %s394 = smul.addr %s393, 4
        %s395 = scalar_lea.vmem %s7, %s394
      $region48: #{moco_forward.2} parent=19 // pred_fallthru
        _
      // Predicated region
      $region49: #{moco_forward.2} parent=19 // pred_check
        %p396 = pneg %p240
      $region50: #{moco_forward.2} parent=19 // pred_check_branch
        %398 = sbr.rel (%p396) target = $region52
      $region51: #{moco_forward.2} parent=19 // pred_region
        %p399 = scmp.lt.s32.totalorder %s17, 1
        %s400 = scalar_select %p399, %s17, 1
        %s401 = scalar_lea.vmem %s8, %s400
      $region52: #{moco_forward.2} parent=19 // pred_fallthru
        _
      // Predicated region
      $region53: #{moco_forward.2} parent=19 // pred_check
        %p402 = pneg %p266
      $region54: #{moco_forward.2} parent=19 // pred_check_branch
        %404 = sbr.rel (%p402) target = $region56
      $region55: #{moco_forward.2} parent=19 // pred_region
        %p405 = scmp.lt.s32.totalorder %s17, 1
        %s406 = scalar_select %p405, %s17, 1
        %s407 = scalar_lea.vmem %s9, %s406
      $region56: #{moco_forward.2} parent=19 // pred_fallthru
        _
      // Predicated region
      $region57: #{moco_forward.2} parent=19 // pred_check
        %p408 = pneg %p292
      $region58: #{moco_forward.2} parent=19 // pred_check_branch
        %410 = sbr.rel (%p408) target = $region60
      $region59: #{moco_forward.2} parent=19 // pred_region
        %p411 = scmp.lt.s32.totalorder %s17, 1
        %s412 = scalar_select %p411, %s17, 1
        %s413 = scalar_lea.vmem %s10, %s412
      $region60: #{moco_forward.2} parent=19 // pred_fallthru
        _
    $region20: #{moco_forward.2} parent=5 // pred_fallthru
      _
    %p414 = scmp.le.s32.totalorder 1, %s17
    %p415 = scmp.lt.s32.totalorder %s17, 3
    %p416 = pnand %p414, %p415
    %p417 = pneg %p416
    // Predicated region
    $region61: #{moco_forward.2} parent=5 // pred_check
      _
    $region62: #{moco_forward.2} parent=5 // pred_check_branch
      %419 = sbr.rel (%p416) target = $region64
    $region63: #{moco_forward.2} parent=5 // pred_region
      %s420 = ssub.s32 %s17, 1
      %p421 = scmp.lt.s32.totalorder %s22, 1
      %s422 = scalar_select %p421, %s22, 1
      %s423 = smul.addr %s422, 256
      %s424 = smul.addr %s423, 4
      %s425 = scalar_lea.vmem %s0, %s424
      %p426 = pneg %p43
      %p427 = pneg %p40
      %p428 = pneg %p64
      %p429 = pneg %p61
      %p430 = scmp.lt.s32.totalorder %s22, 1
      %s431 = scalar_select %p430, %s22, 1
      %s432 = smul.addr %s431, 16
      %s433 = smul.addr %s432, 4
      %s434 = scalar_lea.vmem %s2, %s433
      %p435 = pneg %p90
      %p436 = pneg %p87
      %p437 = scmp.lt.s32.totalorder %s22, 1
      %s438 = scalar_select %p437, %s22, 1
      %s439 = smul.addr %s438, 4
      %s440 = smul.addr %s439, 4
      %s441 = scalar_lea.vmem %s3, %s440
      %p442 = pneg %p116
      %p443 = pneg %p113
      %p444 = scmp.lt.s32.totalorder %s22, 1
      %s445 = scalar_select %p444, %s22, 1
      %s446 = scalar_lea.vmem %s4, %s445
      %p447 = pneg %p142
      %p448 = pneg %p139
      %p449 = scmp.lt.s32.totalorder %s22, 1
      %s450 = scalar_select %p449, %s22, 1
      %s451 = scalar_lea.vmem %s5, %s450
      %p452 = pneg %p168
      %p453 = pneg %p165
      %p454 = scmp.lt.s32.totalorder %s22, 1
      %s455 = scalar_select %p454, %s22, 1
      %s456 = scalar_lea.vmem %s6, %s455
      %p457 = pneg %p194
      %p458 = pneg %p191
      %p459 = scmp.lt.s32.totalorder %s22, 1
      %s460 = scalar_select %p459, %s22, 1
      %s461 = smul.addr %s460, 8
      %s462 = smul.addr %s461, 4
      %s463 = scalar_lea.vmem %s7, %s462
      %p464 = pneg %p220
      %p465 = pneg %p217
      %p466 = scmp.lt.s32.totalorder %s22, 1
      %s467 = scalar_select %p466, %s22, 1
      %s468 = scalar_lea.vmem %s8, %s467
      %p469 = pneg %p246
      %p470 = pneg %p243
      %p471 = scmp.lt.s32.totalorder %s22, 1
      %s472 = scalar_select %p471, %s22, 1
      %s473 = scalar_lea.vmem %s9, %s472
      %p474 = pneg %p272
      %p475 = pneg %p269
      %p476 = scmp.lt.s32.totalorder %s22, 1
      %s477 = scalar_select %p476, %s22, 1
      %s478 = scalar_lea.vmem %s10, %s477
      %p479 = pneg %p298
      %p480 = pneg %p295
      %p481 = pneg %p324
      %p482 = pneg %p321
      %p483 = scmp.lt.s32.totalorder %s22, 1
      %s484 = scalar_select %p483, %s22, 1
      %s485 = smul.addr %s484, 8
      %s486 = scalar_lea.vmem %s11, %s485
      %p487 = scmp.lt.s32.totalorder %s22, 1
      %s488 = scalar_select %p487, %s22, 1
      %s489 = smul.addr %s488, 256
      %s490 = smul.addr %s489, 4
      %s491 = scalar_lea.vmem %s0, %s490
      %p492 = scmp.lt.s32.totalorder %s22, 1
      %s493 = scalar_select %p492, %s22, 1
      %s494 = smul.addr %s493, 16
      %s495 = smul.addr %s494, 4
      %s496 = scalar_lea.vmem %s2, %s495
      %p497 = scmp.lt.s32.totalorder %s22, 1
      %s498 = scalar_select %p497, %s22, 1
      %s499 = smul.addr %s498, 4
      %s500 = smul.addr %s499, 4
      %s501 = scalar_lea.vmem %s3, %s500
      %p502 = scmp.lt.s32.totalorder %s22, 1
      %s503 = scalar_select %p502, %s22, 1
      %s504 = scalar_lea.vmem %s4, %s503
      %p505 = scmp.lt.s32.totalorder %s22, 1
      %s506 = scalar_select %p505, %s22, 1
      %s507 = scalar_lea.vmem %s5, %s506
      %p508 = scmp.lt.s32.totalorder %s22, 1
      %s509 = scalar_select %p508, %s22, 1
      %s510 = scalar_lea.vmem %s6, %s509
      %p511 = scmp.lt.s32.totalorder %s22, 1
      %s512 = scalar_select %p511, %s22, 1
      %s513 = smul.addr %s512, 8
      %s514 = smul.addr %s513, 4
      %s515 = scalar_lea.vmem %s7, %s514
      %p516 = scmp.lt.s32.totalorder %s22, 1
      %s517 = scalar_select %p516, %s22, 1
      %s518 = scalar_lea.vmem %s8, %s517
      %p519 = scmp.lt.s32.totalorder %s22, 1
      %s520 = scalar_select %p519, %s22, 1
      %s521 = scalar_lea.vmem %s9, %s520
      %p522 = scmp.lt.s32.totalorder %s22, 1
      %s523 = scalar_select %p522, %s22, 1
      %s524 = scalar_lea.vmem %s10, %s523
      %p525 = scmp.lt.s32.totalorder %s22, 1
      %s526 = scalar_select %p525, %s22, 1
      %s527 = smul.addr %s526, 8
      %s528 = scalar_lea.vmem %s11, %s527
      %v530 = vld [vmem:[%s491] sm:$0xf]
      %v531 = vld [vmem:[%s491 + $0x4] sm:$0xf]
      %v532 = vld [vmem:[%s491 + $0x8] sm:$0xf]
      %v533 = vld [vmem:[%s491 + $0xc] sm:$0xf]
      %v534 = vld [vmem:[%s491 + $0x10] sm:$0xf]
      %v535 = vld [vmem:[%s491 + $0x14] sm:$0xf]
      %v536 = vld [vmem:[%s491 + $0x18] sm:$0xf]
      %v537 = vld [vmem:[%s491 + $0x1c] sm:$0xf]
      %v538 = vld [vmem:[%s491 + $0x20] sm:$0xf]
      %v539 = vld [vmem:[%s491 + $0x24] sm:$0xf]
      %v540 = vld [vmem:[%s491 + $0x28] sm:$0xf]
      %v541 = vld [vmem:[%s491 + $0x2c] sm:$0xf]
      %v542 = vld [vmem:[%s491 + $0x30] sm:$0xf]
      %v543 = vld [vmem:[%s491 + $0x34] sm:$0xf]
      %v544 = vld [vmem:[%s491 + $0x38] sm:$0xf]
      %v545 = vld [vmem:[%s491 + $0x3c] sm:$0xf]
      %v546 = vld [vmem:[%s491 + $0x40] sm:$0xf]
      %v547 = vld [vmem:[%s491 + $0x44] sm:$0xf]
      %v548 = vld [vmem:[%s491 + $0x48] sm:$0xf]
      %v549 = vld [vmem:[%s491 + $0x4c] sm:$0xf]
      %v550 = vld [vmem:[%s491 + $0x50] sm:$0xf]
      %v551 = vld [vmem:[%s491 + $0x54] sm:$0xf]
      %v552 = vld [vmem:[%s491 + $0x58] sm:$0xf]
      %v553 = vld [vmem:[%s491 + $0x5c] sm:$0xf]
      %v554 = vld [vmem:[%s491 + $0x60] sm:$0xf]
      %v555 = vld [vmem:[%s491 + $0x64] sm:$0xf]
      %v556 = vld [vmem:[%s491 + $0x68] sm:$0xf]
      %v557 = vld [vmem:[%s491 + $0x6c] sm:$0xf]
      %v558 = vld [vmem:[%s491 + $0x70] sm:$0xf]
      %v559 = vld [vmem:[%s491 + $0x74] sm:$0xf]
      %v560 = vld [vmem:[%s491 + $0x78] sm:$0xf]
      %v561 = vld [vmem:[%s491 + $0x7c] sm:$0xf]
      %v562 = vld [vmem:[%s491 + $0x80] sm:$0xf]
      %v563 = vld [vmem:[%s491 + $0x84] sm:$0xf]
      %v564 = vld [vmem:[%s491 + $0x88] sm:$0xf]
      %v565 = vld [vmem:[%s491 + $0x8c] sm:$0xf]
      %v566 = vld [vmem:[%s491 + $0x90] sm:$0xf]
      %v567 = vld [vmem:[%s491 + $0x94] sm:$0xf]
      %v568 = vld [vmem:[%s491 + $0x98] sm:$0xf]
      %v569 = vld [vmem:[%s491 + $0x9c] sm:$0xf]
      %v570 = vld [vmem:[%s491 + $0xa0] sm:$0xf]
      %v571 = vld [vmem:[%s491 + $0xa4] sm:$0xf]
      %v572 = vld [vmem:[%s491 + $0xa8] sm:$0xf]
      %v573 = vld [vmem:[%s491 + $0xac] sm:$0xf]
      %v574 = vld [vmem:[%s491 + $0xb0] sm:$0xf]
      %v575 = vld [vmem:[%s491 + $0xb4] sm:$0xf]
      %v576 = vld [vmem:[%s491 + $0xb8] sm:$0xf]
      %v577 = vld [vmem:[%s491 + $0xbc] sm:$0xf]
      %v578 = vld [vmem:[%s491 + $0xc0] sm:$0xf]
      %v579 = vld [vmem:[%s491 + $0xc4] sm:$0xf]
      %v580 = vld [vmem:[%s491 + $0xc8] sm:$0xf]
      %v581 = vld [vmem:[%s491 + $0xcc] sm:$0xf]
      %v582 = vld [vmem:[%s491 + $0xd0] sm:$0xf]
      %v583 = vld [vmem:[%s491 + $0xd4] sm:$0xf]
      %v584 = vld [vmem:[%s491 + $0xd8] sm:$0xf]
      %v585 = vld [vmem:[%s491 + $0xdc] sm:$0xf]
      %v586 = vld [vmem:[%s491 + $0xe0] sm:$0xf]
      %v587 = vld [vmem:[%s491 + $0xe4] sm:$0xf]
      %v588 = vld [vmem:[%s491 + $0xe8] sm:$0xf]
      %v589 = vld [vmem:[%s491 + $0xec] sm:$0xf]
      %v590 = vld [vmem:[%s491 + $0xf0] sm:$0xf]
      %v591 = vld [vmem:[%s491 + $0xf4] sm:$0xf]
      %v592 = vld [vmem:[%s491 + $0xf8] sm:$0xf]
      %v593 = vld [vmem:[%s491 + $0xfc] sm:$0xf]
      %v594 = vld [vmem:[%s491 + $0x100] sm:$0xf]
      %v595 = vld [vmem:[%s491 + $0x104] sm:$0xf]
      %v596 = vld [vmem:[%s491 + $0x108] sm:$0xf]
      %v597 = vld [vmem:[%s491 + $0x10c] sm:$0xf]
      %v598 = vld [vmem:[%s491 + $0x110] sm:$0xf]
      %v599 = vld [vmem:[%s491 + $0x114] sm:$0xf]
      %v600 = vld [vmem:[%s491 + $0x118] sm:$0xf]
      %v601 = vld [vmem:[%s491 + $0x11c] sm:$0xf]
      %v602 = vld [vmem:[%s491 + $0x120] sm:$0xf]
      %v603 = vld [vmem:[%s491 + $0x124] sm:$0xf]
      %v604 = vld [vmem:[%s491 + $0x128] sm:$0xf]
      %v605 = vld [vmem:[%s491 + $0x12c] sm:$0xf]
      %v606 = vld [vmem:[%s491 + $0x130] sm:$0xf]
      %v607 = vld [vmem:[%s491 + $0x134] sm:$0xf]
      %v608 = vld [vmem:[%s491 + $0x138] sm:$0xf]
      %v609 = vld [vmem:[%s491 + $0x13c] sm:$0xf]
      %v610 = vld [vmem:[%s491 + $0x140] sm:$0xf]
      %v611 = vld [vmem:[%s491 + $0x144] sm:$0xf]
      %v612 = vld [vmem:[%s491 + $0x148] sm:$0xf]
      %v613 = vld [vmem:[%s491 + $0x14c] sm:$0xf]
      %v614 = vld [vmem:[%s491 + $0x150] sm:$0xf]
      %v615 = vld [vmem:[%s491 + $0x154] sm:$0xf]
      %v616 = vld [vmem:[%s491 + $0x158] sm:$0xf]
      %v617 = vld [vmem:[%s491 + $0x15c] sm:$0xf]
      %v618 = vld [vmem:[%s491 + $0x160] sm:$0xf]
      %v619 = vld [vmem:[%s491 + $0x164] sm:$0xf]
      %v620 = vld [vmem:[%s491 + $0x168] sm:$0xf]
      %v621 = vld [vmem:[%s491 + $0x16c] sm:$0xf]
      %v622 = vld [vmem:[%s491 + $0x170] sm:$0xf]
      %v623 = vld [vmem:[%s491 + $0x174] sm:$0xf]
      %v624 = vld [vmem:[%s491 + $0x178] sm:$0xf]
      %v625 = vld [vmem:[%s491 + $0x17c] sm:$0xf]
      %v626 = vld [vmem:[%s491 + $0x180] sm:$0xf]
      %v627 = vld [vmem:[%s491 + $0x184] sm:$0xf]
      %v628 = vld [vmem:[%s491 + $0x188] sm:$0xf]
      %v629 = vld [vmem:[%s491 + $0x18c] sm:$0xf]
      %v630 = vld [vmem:[%s491 + $0x190] sm:$0xf]
      %v631 = vld [vmem:[%s491 + $0x194] sm:$0xf]
      %v632 = vld [vmem:[%s491 + $0x198] sm:$0xf]
      %v633 = vld [vmem:[%s491 + $0x19c] sm:$0xf]
      %v634 = vld [vmem:[%s491 + $0x1a0] sm:$0xf]
      %v635 = vld [vmem:[%s491 + $0x1a4] sm:$0xf]
      %v636 = vld [vmem:[%s491 + $0x1a8] sm:$0xf]
      %v637 = vld [vmem:[%s491 + $0x1ac] sm:$0xf]
      %v638 = vld [vmem:[%s491 + $0x1b0] sm:$0xf]
      %v639 = vld [vmem:[%s491 + $0x1b4] sm:$0xf]
      %v640 = vld [vmem:[%s491 + $0x1b8] sm:$0xf]
      %v641 = vld [vmem:[%s491 + $0x1bc] sm:$0xf]
      %v642 = vld [vmem:[%s491 + $0x1c0] sm:$0xf]
      %v643 = vld [vmem:[%s491 + $0x1c4] sm:$0xf]
      %v644 = vld [vmem:[%s491 + $0x1c8] sm:$0xf]
      %v645 = vld [vmem:[%s491 + $0x1cc] sm:$0xf]
      %v646 = vld [vmem:[%s491 + $0x1d0] sm:$0xf]
      %v647 = vld [vmem:[%s491 + $0x1d4] sm:$0xf]
      %v648 = vld [vmem:[%s491 + $0x1d8] sm:$0xf]
      %v649 = vld [vmem:[%s491 + $0x1dc] sm:$0xf]
      %v650 = vld [vmem:[%s491 + $0x1e0] sm:$0xf]
      %v651 = vld [vmem:[%s491 + $0x1e4] sm:$0xf]
      %v652 = vld [vmem:[%s491 + $0x1e8] sm:$0xf]
      %v653 = vld [vmem:[%s491 + $0x1ec] sm:$0xf]
      %v654 = vld [vmem:[%s491 + $0x1f0] sm:$0xf]
      %v655 = vld [vmem:[%s491 + $0x1f4] sm:$0xf]
      %v656 = vld [vmem:[%s491 + $0x1f8] sm:$0xf]
      %v657 = vld [vmem:[%s491 + $0x1fc] sm:$0xf]
      %v658 = vld [vmem:[%s491 + $0x200] sm:$0xf]
      %v659 = vld [vmem:[%s491 + $0x204] sm:$0xf]
      %v660 = vld [vmem:[%s491 + $0x208] sm:$0xf]
      %v661 = vld [vmem:[%s491 + $0x20c] sm:$0xf]
      %v662 = vld [vmem:[%s491 + $0x210] sm:$0xf]
      %v663 = vld [vmem:[%s491 + $0x214] sm:$0xf]
      %v664 = vld [vmem:[%s491 + $0x218] sm:$0xf]
      %v665 = vld [vmem:[%s491 + $0x21c] sm:$0xf]
      %v666 = vld [vmem:[%s491 + $0x220] sm:$0xf]
      %v667 = vld [vmem:[%s491 + $0x224] sm:$0xf]
      %v668 = vld [vmem:[%s491 + $0x228] sm:$0xf]
      %v669 = vld [vmem:[%s491 + $0x22c] sm:$0xf]
      %v670 = vld [vmem:[%s491 + $0x230] sm:$0xf]
      %v671 = vld [vmem:[%s491 + $0x234] sm:$0xf]
      %v672 = vld [vmem:[%s491 + $0x238] sm:$0xf]
      %v673 = vld [vmem:[%s491 + $0x23c] sm:$0xf]
      %v674 = vld [vmem:[%s491 + $0x240] sm:$0xf]
      %v675 = vld [vmem:[%s491 + $0x244] sm:$0xf]
      %v676 = vld [vmem:[%s491 + $0x248] sm:$0xf]
      %v677 = vld [vmem:[%s491 + $0x24c] sm:$0xf]
      %v678 = vld [vmem:[%s491 + $0x250] sm:$0xf]
      %v679 = vld [vmem:[%s491 + $0x254] sm:$0xf]
      %v680 = vld [vmem:[%s491 + $0x258] sm:$0xf]
      %v681 = vld [vmem:[%s491 + $0x25c] sm:$0xf]
      %v682 = vld [vmem:[%s491 + $0x260] sm:$0xf]
      %v683 = vld [vmem:[%s491 + $0x264] sm:$0xf]
      %v684 = vld [vmem:[%s491 + $0x268] sm:$0xf]
      %v685 = vld [vmem:[%s491 + $0x26c] sm:$0xf]
      %v686 = vld [vmem:[%s491 + $0x270] sm:$0xf]
      %v687 = vld [vmem:[%s491 + $0x274] sm:$0xf]
      %v688 = vld [vmem:[%s491 + $0x278] sm:$0xf]
      %v689 = vld [vmem:[%s491 + $0x27c] sm:$0xf]
      %v690 = vld [vmem:[%s491 + $0x280] sm:$0xf]
      %v691 = vld [vmem:[%s491 + $0x284] sm:$0xf]
      %v692 = vld [vmem:[%s491 + $0x288] sm:$0xf]
      %v693 = vld [vmem:[%s491 + $0x28c] sm:$0xf]
      %v694 = vld [vmem:[%s491 + $0x290] sm:$0xf]
      %v695 = vld [vmem:[%s491 + $0x294] sm:$0xf]
      %v696 = vld [vmem:[%s491 + $0x298] sm:$0xf]
      %v697 = vld [vmem:[%s491 + $0x29c] sm:$0xf]
      %v698 = vld [vmem:[%s491 + $0x2a0] sm:$0xf]
      %v699 = vld [vmem:[%s491 + $0x2a4] sm:$0xf]
      %v700 = vld [vmem:[%s491 + $0x2a8] sm:$0xf]
      %v701 = vld [vmem:[%s491 + $0x2ac] sm:$0xf]
      %v702 = vld [vmem:[%s491 + $0x2b0] sm:$0xf]
      %v703 = vld [vmem:[%s491 + $0x2b4] sm:$0xf]
      %v704 = vld [vmem:[%s491 + $0x2b8] sm:$0xf]
      %v705 = vld [vmem:[%s491 + $0x2bc] sm:$0xf]
      %v706 = vld [vmem:[%s491 + $0x2c0] sm:$0xf]
      %v707 = vld [vmem:[%s491 + $0x2c4] sm:$0xf]
      %v708 = vld [vmem:[%s491 + $0x2c8] sm:$0xf]
      %v709 = vld [vmem:[%s491 + $0x2cc] sm:$0xf]
      %v710 = vld [vmem:[%s491 + $0x2d0] sm:$0xf]
      %v711 = vld [vmem:[%s491 + $0x2d4] sm:$0xf]
      %v712 = vld [vmem:[%s491 + $0x2d8] sm:$0xf]
      %v713 = vld [vmem:[%s491 + $0x2dc] sm:$0xf]
      %v714 = vld [vmem:[%s491 + $0x2e0] sm:$0xf]
      %v715 = vld [vmem:[%s491 + $0x2e4] sm:$0xf]
      %v716 = vld [vmem:[%s491 + $0x2e8] sm:$0xf]
      %v717 = vld [vmem:[%s491 + $0x2ec] sm:$0xf]
      %v718 = vld [vmem:[%s491 + $0x2f0] sm:$0xf]
      %v719 = vld [vmem:[%s491 + $0x2f4] sm:$0xf]
      %v720 = vld [vmem:[%s491 + $0x2f8] sm:$0xf]
      %v721 = vld [vmem:[%s491 + $0x2fc] sm:$0xf]
      %v722 = vld [vmem:[%s491 + $0x300] sm:$0xf]
      %v723 = vld [vmem:[%s491 + $0x304] sm:$0xf]
      %v724 = vld [vmem:[%s491 + $0x308] sm:$0xf]
      %v725 = vld [vmem:[%s491 + $0x30c] sm:$0xf]
      %v726 = vld [vmem:[%s491 + $0x310] sm:$0xf]
      %v727 = vld [vmem:[%s491 + $0x314] sm:$0xf]
      %v728 = vld [vmem:[%s491 + $0x318] sm:$0xf]
      %v729 = vld [vmem:[%s491 + $0x31c] sm:$0xf]
      %v730 = vld [vmem:[%s491 + $0x320] sm:$0xf]
      %v731 = vld [vmem:[%s491 + $0x324] sm:$0xf]
      %v732 = vld [vmem:[%s491 + $0x328] sm:$0xf]
      %v733 = vld [vmem:[%s491 + $0x32c] sm:$0xf]
      %v734 = vld [vmem:[%s491 + $0x330] sm:$0xf]
      %v735 = vld [vmem:[%s491 + $0x334] sm:$0xf]
      %v736 = vld [vmem:[%s491 + $0x338] sm:$0xf]
      %v737 = vld [vmem:[%s491 + $0x33c] sm:$0xf]
      %v738 = vld [vmem:[%s491 + $0x340] sm:$0xf]
      %v739 = vld [vmem:[%s491 + $0x344] sm:$0xf]
      %v740 = vld [vmem:[%s491 + $0x348] sm:$0xf]
      %v741 = vld [vmem:[%s491 + $0x34c] sm:$0xf]
      %v742 = vld [vmem:[%s491 + $0x350] sm:$0xf]
      %v743 = vld [vmem:[%s491 + $0x354] sm:$0xf]
      %v744 = vld [vmem:[%s491 + $0x358] sm:$0xf]
      %v745 = vld [vmem:[%s491 + $0x35c] sm:$0xf]
      %v746 = vld [vmem:[%s491 + $0x360] sm:$0xf]
      %v747 = vld [vmem:[%s491 + $0x364] sm:$0xf]
      %v748 = vld [vmem:[%s491 + $0x368] sm:$0xf]
      %v749 = vld [vmem:[%s491 + $0x36c] sm:$0xf]
      %v750 = vld [vmem:[%s491 + $0x370] sm:$0xf]
      %v751 = vld [vmem:[%s491 + $0x374] sm:$0xf]
      %v752 = vld [vmem:[%s491 + $0x378] sm:$0xf]
      %v753 = vld [vmem:[%s491 + $0x37c] sm:$0xf]
      %v754 = vld [vmem:[%s491 + $0x380] sm:$0xf]
      %v755 = vld [vmem:[%s491 + $0x384] sm:$0xf]
      %v756 = vld [vmem:[%s491 + $0x388] sm:$0xf]
      %v757 = vld [vmem:[%s491 + $0x38c] sm:$0xf]
      %v758 = vld [vmem:[%s491 + $0x390] sm:$0xf]
      %v759 = vld [vmem:[%s491 + $0x394] sm:$0xf]
      %v760 = vld [vmem:[%s491 + $0x398] sm:$0xf]
      %v761 = vld [vmem:[%s491 + $0x39c] sm:$0xf]
      %v762 = vld [vmem:[%s491 + $0x3a0] sm:$0xf]
      %v763 = vld [vmem:[%s491 + $0x3a4] sm:$0xf]
      %v764 = vld [vmem:[%s491 + $0x3a8] sm:$0xf]
      %v765 = vld [vmem:[%s491 + $0x3ac] sm:$0xf]
      %v766 = vld [vmem:[%s491 + $0x3b0] sm:$0xf]
      %v767 = vld [vmem:[%s491 + $0x3b4] sm:$0xf]
      %v768 = vld [vmem:[%s491 + $0x3b8] sm:$0xf]
      %v769 = vld [vmem:[%s491 + $0x3bc] sm:$0xf]
      %v770 = vld [vmem:[%s491 + $0x3c0] sm:$0xf]
      %v771 = vld [vmem:[%s491 + $0x3c4] sm:$0xf]
      %v772 = vld [vmem:[%s491 + $0x3c8] sm:$0xf]
      %v773 = vld [vmem:[%s491 + $0x3cc] sm:$0xf]
      %v774 = vld [vmem:[%s491 + $0x3d0] sm:$0xf]
      %v775 = vld [vmem:[%s491 + $0x3d4] sm:$0xf]
      %v776 = vld [vmem:[%s491 + $0x3d8] sm:$0xf]
      %v777 = vld [vmem:[%s491 + $0x3dc] sm:$0xf]
      %v778 = vld [vmem:[%s491 + $0x3e0] sm:$0xf]
      %v779 = vld [vmem:[%s491 + $0x3e4] sm:$0xf]
      %v780 = vld [vmem:[%s491 + $0x3e8] sm:$0xf]
      %v781 = vld [vmem:[%s491 + $0x3ec] sm:$0xf]
      %v782 = vld [vmem:[%s491 + $0x3f0] sm:$0xf]
      %v783 = vld [vmem:[%s491 + $0x3f4] sm:$0xf]
      %v784 = vld [vmem:[%s491 + $0x3f8] sm:$0xf]
      %v785 = vld [vmem:[%s491 + $0x3fc] sm:$0xf]
      %v786 = vld [vmem:[%s496] sm:$0xf]
      %v787 = vld [vmem:[%s496 + $0x4] sm:$0xf]
      %v788 = vld [vmem:[%s496 + $0x8] sm:$0xf]
      %v789 = vld [vmem:[%s496 + $0xc] sm:$0xf]
      %v790 = vld [vmem:[%s496 + $0x10] sm:$0xf]
      %v791 = vld [vmem:[%s496 + $0x14] sm:$0xf]
      %v792 = vld [vmem:[%s496 + $0x18] sm:$0xf]
      %v793 = vld [vmem:[%s496 + $0x1c] sm:$0xf]
      %v794 = vld [vmem:[%s496 + $0x20] sm:$0xf]
      %v795 = vld [vmem:[%s496 + $0x24] sm:$0xf]
      %v796 = vld [vmem:[%s496 + $0x28] sm:$0xf]
      %v797 = vld [vmem:[%s496 + $0x2c] sm:$0xf]
      %v798 = vld [vmem:[%s496 + $0x30] sm:$0xf]
      %v799 = vld [vmem:[%s496 + $0x34] sm:$0xf]
      %v800 = vld [vmem:[%s496 + $0x38] sm:$0xf]
      %v801 = vld [vmem:[%s496 + $0x3c] sm:$0xf]
      %v1058 = vunpack.c.l.b16 %v530
      %v1059 = vunpack.c.l.b16 %v531
      %v1060 = vunpack.c.l.b16 %v532
      %v1061 = vunpack.c.l.b16 %v533
      %v1062 = vunpack.c.l.b16 %v534
      %v1063 = vunpack.c.l.b16 %v535
      %v1064 = vunpack.c.l.b16 %v536
      %v1065 = vunpack.c.l.b16 %v537
      %v1066 = vunpack.c.l.b16 %v538
      %v1067 = vunpack.c.l.b16 %v539
      %v1068 = vunpack.c.l.b16 %v540
      %v1069 = vunpack.c.l.b16 %v541
      %v1070 = vunpack.c.l.b16 %v542
      %v1071 = vunpack.c.l.b16 %v543
      %v1072 = vunpack.c.l.b16 %v544
      %v1073 = vunpack.c.l.b16 %v545
      %v1074 = vunpack.c.l.b16 %v546
      %v1075 = vunpack.c.l.b16 %v547
      %v1076 = vunpack.c.l.b16 %v548
      %v1077 = vunpack.c.l.b16 %v549
      %v1078 = vunpack.c.l.b16 %v550
      %v1079 = vunpack.c.l.b16 %v551
      %v1080 = vunpack.c.l.b16 %v552
      %v1081 = vunpack.c.l.b16 %v553
      %v1082 = vunpack.c.l.b16 %v554
      %v1083 = vunpack.c.l.b16 %v555
      %v1084 = vunpack.c.l.b16 %v556
      %v1085 = vunpack.c.l.b16 %v557
      %v1086 = vunpack.c.l.b16 %v558
      %v1087 = vunpack.c.l.b16 %v559
      %v1088 = vunpack.c.l.b16 %v560
      %v1089 = vunpack.c.l.b16 %v561
      %v1090 = vunpack.c.l.b16 %v562
      %v1091 = vunpack.c.l.b16 %v563
      %v1092 = vunpack.c.l.b16 %v564
      %v1093 = vunpack.c.l.b16 %v565
      %v1094 = vunpack.c.l.b16 %v566
      %v1095 = vunpack.c.l.b16 %v567
      %v1096 = vunpack.c.l.b16 %v568
      %v1097 = vunpack.c.l.b16 %v569
      %v1098 = vunpack.c.l.b16 %v570
      %v1099 = vunpack.c.l.b16 %v571
      %v1100 = vunpack.c.l.b16 %v572
      %v1101 = vunpack.c.l.b16 %v573
      %v1102 = vunpack.c.l.b16 %v574
      %v1103 = vunpack.c.l.b16 %v575
      %v1104 = vunpack.c.l.b16 %v576
      %v1105 = vunpack.c.l.b16 %v577
      %v1106 = vunpack.c.l.b16 %v578
      %v1107 = vunpack.c.l.b16 %v579
      %v1108 = vunpack.c.l.b16 %v580
      %v1109 = vunpack.c.l.b16 %v581
      %v1110 = vunpack.c.l.b16 %v582
      %v1111 = vunpack.c.l.b16 %v583
      %v1112 = vunpack.c.l.b16 %v584
      %v1113 = vunpack.c.l.b16 %v585
      %v1114 = vunpack.c.l.b16 %v586
      %v1115 = vunpack.c.l.b16 %v587
      %v1116 = vunpack.c.l.b16 %v588
      %v1117 = vunpack.c.l.b16 %v589
      %v1118 = vunpack.c.l.b16 %v590
      %v1119 = vunpack.c.l.b16 %v591
      %v1120 = vunpack.c.l.b16 %v592
      %v1121 = vunpack.c.l.b16 %v593
      %v1122 = vunpack.c.l.b16 %v594
      %v1123 = vunpack.c.l.b16 %v595
      %v1124 = vunpack.c.l.b16 %v596
      %v1125 = vunpack.c.l.b16 %v597
      %v1126 = vunpack.c.l.b16 %v598
      %v1127 = vunpack.c.l.b16 %v599
      %v1128 = vunpack.c.l.b16 %v600
      %v1129 = vunpack.c.l.b16 %v601
      %v1130 = vunpack.c.l.b16 %v602
      %v1131 = vunpack.c.l.b16 %v603
      %v1132 = vunpack.c.l.b16 %v604
      %v1133 = vunpack.c.l.b16 %v605
      %v1134 = vunpack.c.l.b16 %v606
      %v1135 = vunpack.c.l.b16 %v607
      %v1136 = vunpack.c.l.b16 %v608
      %v1137 = vunpack.c.l.b16 %v609
      %v1138 = vunpack.c.l.b16 %v610
      %v1139 = vunpack.c.l.b16 %v611
      %v1140 = vunpack.c.l.b16 %v612
      %v1141 = vunpack.c.l.b16 %v613
      %v1142 = vunpack.c.l.b16 %v614
      %v1143 = vunpack.c.l.b16 %v615
      %v1144 = vunpack.c.l.b16 %v616
      %v1145 = vunpack.c.l.b16 %v617
      %v1146 = vunpack.c.l.b16 %v618
      %v1147 = vunpack.c.l.b16 %v619
      %v1148 = vunpack.c.l.b16 %v620
      %v1149 = vunpack.c.l.b16 %v621
      %v1150 = vunpack.c.l.b16 %v622
      %v1151 = vunpack.c.l.b16 %v623
      %v1152 = vunpack.c.l.b16 %v624
      %v1153 = vunpack.c.l.b16 %v625
      %v1154 = vunpack.c.l.b16 %v626
      %v1155 = vunpack.c.l.b16 %v627
      %v1156 = vunpack.c.l.b16 %v628
      %v1157 = vunpack.c.l.b16 %v629
      %v1158 = vunpack.c.l.b16 %v630
      %v1159 = vunpack.c.l.b16 %v631
      %v1160 = vunpack.c.l.b16 %v632
      %v1161 = vunpack.c.l.b16 %v633
      %v1162 = vunpack.c.l.b16 %v634
      %v1163 = vunpack.c.l.b16 %v635
      %v1164 = vunpack.c.l.b16 %v636
      %v1165 = vunpack.c.l.b16 %v637
      %v1166 = vunpack.c.l.b16 %v638
      %v1167 = vunpack.c.l.b16 %v639
      %v1168 = vunpack.c.l.b16 %v640
      %v1169 = vunpack.c.l.b16 %v641
      %v1170 = vunpack.c.l.b16 %v642
      %v1171 = vunpack.c.l.b16 %v643
      %v1172 = vunpack.c.l.b16 %v644
      %v1173 = vunpack.c.l.b16 %v645
      %v1174 = vunpack.c.l.b16 %v646
      %v1175 = vunpack.c.l.b16 %v647
      %v1176 = vunpack.c.l.b16 %v648
      %v1177 = vunpack.c.l.b16 %v649
      %v1178 = vunpack.c.l.b16 %v650
      %v1179 = vunpack.c.l.b16 %v651
      %v1180 = vunpack.c.l.b16 %v652
      %v1181 = vunpack.c.l.b16 %v653
      %v1182 = vunpack.c.l.b16 %v654
      %v1183 = vunpack.c.l.b16 %v655
      %v1184 = vunpack.c.l.b16 %v656
      %v1185 = vunpack.c.l.b16 %v657
      %v1186 = vunpack.c.l.b16 %v658
      %v1187 = vunpack.c.l.b16 %v659
      %v1188 = vunpack.c.l.b16 %v660
      %v1189 = vunpack.c.l.b16 %v661
      %v1190 = vunpack.c.l.b16 %v662
      %v1191 = vunpack.c.l.b16 %v663
      %v1192 = vunpack.c.l.b16 %v664
      %v1193 = vunpack.c.l.b16 %v665
      %v1194 = vunpack.c.l.b16 %v666
      %v1195 = vunpack.c.l.b16 %v667
      %v1196 = vunpack.c.l.b16 %v668
      %v1197 = vunpack.c.l.b16 %v669
      %v1198 = vunpack.c.l.b16 %v670
      %v1199 = vunpack.c.l.b16 %v671
      %v1200 = vunpack.c.l.b16 %v672
      %v1201 = vunpack.c.l.b16 %v673
      %v1202 = vunpack.c.l.b16 %v674
      %v1203 = vunpack.c.l.b16 %v675
      %v1204 = vunpack.c.l.b16 %v676
      %v1205 = vunpack.c.l.b16 %v677
      %v1206 = vunpack.c.l.b16 %v678
      %v1207 = vunpack.c.l.b16 %v679
      %v1208 = vunpack.c.l.b16 %v680
      %v1209 = vunpack.c.l.b16 %v681
      %v1210 = vunpack.c.l.b16 %v682
      %v1211 = vunpack.c.l.b16 %v683
      %v1212 = vunpack.c.l.b16 %v684
      %v1213 = vunpack.c.l.b16 %v685
      %v1214 = vunpack.c.l.b16 %v686
      %v1215 = vunpack.c.l.b16 %v687
      %v1216 = vunpack.c.l.b16 %v688
      %v1217 = vunpack.c.l.b16 %v689
      %v1218 = vunpack.c.l.b16 %v690
      %v1219 = vunpack.c.l.b16 %v691
      %v1220 = vunpack.c.l.b16 %v692
      %v1221 = vunpack.c.l.b16 %v693
      %v1222 = vunpack.c.l.b16 %v694
      %v1223 = vunpack.c.l.b16 %v695
      %v1224 = vunpack.c.l.b16 %v696
      %v1225 = vunpack.c.l.b16 %v697
      %v1226 = vunpack.c.l.b16 %v698
      %v1227 = vunpack.c.l.b16 %v699
      %v1228 = vunpack.c.l.b16 %v700
      %v1229 = vunpack.c.l.b16 %v701
      %v1230 = vunpack.c.l.b16 %v702
      %v1231 = vunpack.c.l.b16 %v703
      %v1232 = vunpack.c.l.b16 %v704
      %v1233 = vunpack.c.l.b16 %v705
      %v1234 = vunpack.c.l.b16 %v706
      %v1235 = vunpack.c.l.b16 %v707
      %v1236 = vunpack.c.l.b16 %v708
      %v1237 = vunpack.c.l.b16 %v709
      %v1238 = vunpack.c.l.b16 %v710
      %v1239 = vunpack.c.l.b16 %v711
      %v1240 = vunpack.c.l.b16 %v712
      %v1241 = vunpack.c.l.b16 %v713
      %v1242 = vunpack.c.l.b16 %v714
      %v1243 = vunpack.c.l.b16 %v715
      %v1244 = vunpack.c.l.b16 %v716
      %v1245 = vunpack.c.l.b16 %v717
      %v1246 = vunpack.c.l.b16 %v718
      %v1247 = vunpack.c.l.b16 %v719
      %v1248 = vunpack.c.l.b16 %v720
      %v1249 = vunpack.c.l.b16 %v721
      %v1250 = vunpack.c.l.b16 %v722
      %v1251 = vunpack.c.l.b16 %v723
      %v1252 = vunpack.c.l.b16 %v724
      %v1253 = vunpack.c.l.b16 %v725
      %v1254 = vunpack.c.l.b16 %v726
      %v1255 = vunpack.c.l.b16 %v727
      %v1256 = vunpack.c.l.b16 %v728
      %v1257 = vunpack.c.l.b16 %v729
      %v1258 = vunpack.c.l.b16 %v730
      %v1259 = vunpack.c.l.b16 %v731
      %v1260 = vunpack.c.l.b16 %v732
      %v1261 = vunpack.c.l.b16 %v733
      %v1262 = vunpack.c.l.b16 %v734
      %v1263 = vunpack.c.l.b16 %v735
      %v1264 = vunpack.c.l.b16 %v736
      %v1265 = vunpack.c.l.b16 %v737
      %v1266 = vunpack.c.l.b16 %v738
      %v1267 = vunpack.c.l.b16 %v739
      %v1268 = vunpack.c.l.b16 %v740
      %v1269 = vunpack.c.l.b16 %v741
      %v1270 = vunpack.c.l.b16 %v742
      %v1271 = vunpack.c.l.b16 %v743
      %v1272 = vunpack.c.l.b16 %v744
      %v1273 = vunpack.c.l.b16 %v745
      %v1274 = vunpack.c.l.b16 %v746
      %v1275 = vunpack.c.l.b16 %v747
      %v1276 = vunpack.c.l.b16 %v748
      %v1277 = vunpack.c.l.b16 %v749
      %v1278 = vunpack.c.l.b16 %v750
      %v1279 = vunpack.c.l.b16 %v751
      %v1280 = vunpack.c.l.b16 %v752
      %v1281 = vunpack.c.l.b16 %v753
      %v1282 = vunpack.c.l.b16 %v754
      %v1283 = vunpack.c.l.b16 %v755
      %v1284 = vunpack.c.l.b16 %v756
      %v1285 = vunpack.c.l.b16 %v757
      %v1286 = vunpack.c.l.b16 %v758
      %v1287 = vunpack.c.l.b16 %v759
      %v1288 = vunpack.c.l.b16 %v760
      %v1289 = vunpack.c.l.b16 %v761
      %v1290 = vunpack.c.l.b16 %v762
      %v1291 = vunpack.c.l.b16 %v763
      %v1292 = vunpack.c.l.b16 %v764
      %v1293 = vunpack.c.l.b16 %v765
      %v1294 = vunpack.c.l.b16 %v766
      %v1295 = vunpack.c.l.b16 %v767
      %v1296 = vunpack.c.l.b16 %v768
      %v1297 = vunpack.c.l.b16 %v769
      %v1298 = vunpack.c.l.b16 %v770
      %v1299 = vunpack.c.l.b16 %v771
      %v1300 = vunpack.c.l.b16 %v772
      %v1301 = vunpack.c.l.b16 %v773
      %v1302 = vunpack.c.l.b16 %v774
      %v1303 = vunpack.c.l.b16 %v775
      %v1304 = vunpack.c.l.b16 %v776
      %v1305 = vunpack.c.l.b16 %v777
      %v1306 = vunpack.c.l.b16 %v778
      %v1307 = vunpack.c.l.b16 %v779
      %v1308 = vunpack.c.l.b16 %v780
      %v1309 = vunpack.c.l.b16 %v781
      %v1310 = vunpack.c.l.b16 %v782
      %v1311 = vunpack.c.l.b16 %v783
      %v1312 = vunpack.c.l.b16 %v784
      %v1313 = vunpack.c.l.b16 %v785
      %v1314 = vpack.c.b16 %v1059, %v1058
      %v1315 = vpack.c.b16 %v1061, %v1060
      %v1316 = vpack.c.b16 %v1063, %v1062
      %v1317 = vpack.c.b16 %v1065, %v1064
      %v1318 = vpack.c.b16 %v1067, %v1066
      %v1319 = vpack.c.b16 %v1069, %v1068
      %v1320 = vpack.c.b16 %v1071, %v1070
      %v1321 = vpack.c.b16 %v1073, %v1072
      %v1322 = vpack.c.b16 %v1075, %v1074
      %v1323 = vpack.c.b16 %v1077, %v1076
      %v1324 = vpack.c.b16 %v1079, %v1078
      %v1325 = vpack.c.b16 %v1081, %v1080
      %v1326 = vpack.c.b16 %v1083, %v1082
      %v1327 = vpack.c.b16 %v1085, %v1084
      %v1328 = vpack.c.b16 %v1087, %v1086
      %v1329 = vpack.c.b16 %v1089, %v1088
      %v1330 = vpack.c.b16 %v1091, %v1090
      %v1331 = vpack.c.b16 %v1093, %v1092
      %v1332 = vpack.c.b16 %v1095, %v1094
      %v1333 = vpack.c.b16 %v1097, %v1096
      %v1334 = vpack.c.b16 %v1099, %v1098
      %v1335 = vpack.c.b16 %v1101, %v1100
      %v1336 = vpack.c.b16 %v1103, %v1102
      %v1337 = vpack.c.b16 %v1105, %v1104
      %v1338 = vpack.c.b16 %v1107, %v1106
      %v1339 = vpack.c.b16 %v1109, %v1108
      %v1340 = vpack.c.b16 %v1111, %v1110
      %v1341 = vpack.c.b16 %v1113, %v1112
      %v1342 = vpack.c.b16 %v1115, %v1114
      %v1343 = vpack.c.b16 %v1117, %v1116
      %v1344 = vpack.c.b16 %v1119, %v1118
      %v1345 = vpack.c.b16 %v1121, %v1120
      %v1346 = vpack.c.b16 %v1123, %v1122
      %v1347 = vpack.c.b16 %v1125, %v1124
      %v1348 = vpack.c.b16 %v1127, %v1126
      %v1349 = vpack.c.b16 %v1129, %v1128
      %v1350 = vpack.c.b16 %v1131, %v1130
      %v1351 = vpack.c.b16 %v1133, %v1132
      %v1352 = vpack.c.b16 %v1135, %v1134
      %v1353 = vpack.c.b16 %v1137, %v1136
      %v1354 = vpack.c.b16 %v1139, %v1138
      %v1355 = vpack.c.b16 %v1141, %v1140
      %v1356 = vpack.c.b16 %v1143, %v1142
      %v1357 = vpack.c.b16 %v1145, %v1144
      %v1358 = vpack.c.b16 %v1147, %v1146
      %v1359 = vpack.c.b16 %v1149, %v1148
      %v1360 = vpack.c.b16 %v1151, %v1150
      %v1361 = vpack.c.b16 %v1153, %v1152
      %v1362 = vpack.c.b16 %v1155, %v1154
      %v1363 = vpack.c.b16 %v1157, %v1156
      %v1364 = vpack.c.b16 %v1159, %v1158
      %v1365 = vpack.c.b16 %v1161, %v1160
      %v1366 = vpack.c.b16 %v1163, %v1162
      %v1367 = vpack.c.b16 %v1165, %v1164
      %v1368 = vpack.c.b16 %v1167, %v1166
      %v1369 = vpack.c.b16 %v1169, %v1168
      %v1370 = vpack.c.b16 %v1171, %v1170
      %v1371 = vpack.c.b16 %v1173, %v1172
      %v1372 = vpack.c.b16 %v1175, %v1174
      %v1373 = vpack.c.b16 %v1177, %v1176
      %v1374 = vpack.c.b16 %v1179, %v1178
      %v1375 = vpack.c.b16 %v1181, %v1180
      %v1376 = vpack.c.b16 %v1183, %v1182
      %v1377 = vpack.c.b16 %v1185, %v1184
      %v1378 = vpack.c.b16 %v1187, %v1186
      %v1379 = vpack.c.b16 %v1189, %v1188
      %v1380 = vpack.c.b16 %v1191, %v1190
      %v1381 = vpack.c.b16 %v1193, %v1192
      %v1382 = vpack.c.b16 %v1195, %v1194
      %v1383 = vpack.c.b16 %v1197, %v1196
      %v1384 = vpack.c.b16 %v1199, %v1198
      %v1385 = vpack.c.b16 %v1201, %v1200
      %v1386 = vpack.c.b16 %v1203, %v1202
      %v1387 = vpack.c.b16 %v1205, %v1204
      %v1388 = vpack.c.b16 %v1207, %v1206
      %v1389 = vpack.c.b16 %v1209, %v1208
      %v1390 = vpack.c.b16 %v1211, %v1210
      %v1391 = vpack.c.b16 %v1213, %v1212
      %v1392 = vpack.c.b16 %v1215, %v1214
      %v1393 = vpack.c.b16 %v1217, %v1216
      %v1394 = vpack.c.b16 %v1219, %v1218
      %v1395 = vpack.c.b16 %v1221, %v1220
      %v1396 = vpack.c.b16 %v1223, %v1222
      %v1397 = vpack.c.b16 %v1225, %v1224
      %v1398 = vpack.c.b16 %v1227, %v1226
      %v1399 = vpack.c.b16 %v1229, %v1228
      %v1400 = vpack.c.b16 %v1231, %v1230
      %v1401 = vpack.c.b16 %v1233, %v1232
      %v1402 = vpack.c.b16 %v1235, %v1234
      %v1403 = vpack.c.b16 %v1237, %v1236
      %v1404 = vpack.c.b16 %v1239, %v1238
      %v1405 = vpack.c.b16 %v1241, %v1240
      %v1406 = vpack.c.b16 %v1243, %v1242
      %v1407 = vpack.c.b16 %v1245, %v1244
      %v1408 = vpack.c.b16 %v1247, %v1246
      %v1409 = vpack.c.b16 %v1249, %v1248
      %v1410 = vpack.c.b16 %v1251, %v1250
      %v1411 = vpack.c.b16 %v1253, %v1252
      %v1412 = vpack.c.b16 %v1255, %v1254
      %v1413 = vpack.c.b16 %v1257, %v1256
      %v1414 = vpack.c.b16 %v1259, %v1258
      %v1415 = vpack.c.b16 %v1261, %v1260
      %v1416 = vpack.c.b16 %v1263, %v1262
      %v1417 = vpack.c.b16 %v1265, %v1264
      %v1418 = vpack.c.b16 %v1267, %v1266
      %v1419 = vpack.c.b16 %v1269, %v1268
      %v1420 = vpack.c.b16 %v1271, %v1270
      %v1421 = vpack.c.b16 %v1273, %v1272
      %v1422 = vpack.c.b16 %v1275, %v1274
      %v1423 = vpack.c.b16 %v1277, %v1276
      %v1424 = vpack.c.b16 %v1279, %v1278
      %v1425 = vpack.c.b16 %v1281, %v1280
      %v1426 = vpack.c.b16 %v1283, %v1282
      %v1427 = vpack.c.b16 %v1285, %v1284
      %v1428 = vpack.c.b16 %v1287, %v1286
      %v1429 = vpack.c.b16 %v1289, %v1288
      %v1430 = vpack.c.b16 %v1291, %v1290
      %v1431 = vpack.c.b16 %v1293, %v1292
      %v1432 = vpack.c.b16 %v1295, %v1294
      %v1433 = vpack.c.b16 %v1297, %v1296
      %v1434 = vpack.c.b16 %v1299, %v1298
      %v1435 = vpack.c.b16 %v1301, %v1300
      %v1436 = vpack.c.b16 %v1303, %v1302
      %v1437 = vpack.c.b16 %v1305, %v1304
      %v1438 = vpack.c.b16 %v1307, %v1306
      %v1439 = vpack.c.b16 %v1309, %v1308
      %v1440 = vpack.c.b16 %v1311, %v1310
      %v1441 = vpack.c.b16 %v1313, %v1312
      %v1586 = vunpack.c.l.b16 %v786
      %v1587 = vunpack.c.l.b16 %v787
      %v1588 = vunpack.c.l.b16 %v788
      %v1589 = vunpack.c.l.b16 %v789
      %v1590 = vunpack.c.l.b16 %v790
      %v1591 = vunpack.c.l.b16 %v791
      %v1592 = vunpack.c.l.b16 %v792
      %v1593 = vunpack.c.l.b16 %v793
      %v1594 = vunpack.c.l.b16 %v794
      %v1595 = vunpack.c.l.b16 %v795
      %v1596 = vunpack.c.l.b16 %v796
      %v1597 = vunpack.c.l.b16 %v797
      %v1598 = vunpack.c.l.b16 %v798
      %v1599 = vunpack.c.l.b16 %v799
      %v1600 = vunpack.c.l.b16 %v800
      %v1601 = vunpack.c.l.b16 %v801
      %v1602 = vpack.c.b16 %v1587, %v1586
      %v1603 = vpack.c.b16 %v1589, %v1588
      %v1604 = vpack.c.b16 %v1591, %v1590
      %v1605 = vpack.c.b16 %v1593, %v1592
      %v1606 = vpack.c.b16 %v1595, %v1594
      %v1607 = vpack.c.b16 %v1597, %v1596
      %v1608 = vpack.c.b16 %v1599, %v1598
      %v1609 = vpack.c.b16 %v1601, %v1600
      %1618 = vmatprep.subr.bf16.mxu0 0
      %1619 = vmatpush1.bf16.msra.mxu0 %v1602
      %1620 = vmatprep.subr.bf16.mxu0 0
      %1621 = vmatpush1.bf16.msra.mxu0 %v1603
      %1622 = vmatprep.subr.bf16.mxu0 0
      %1623 = vmatpush1.bf16.msra.mxu0 %v1604
      %1624 = vmatprep.subr.bf16.mxu0 0
      %1625 = vmatpush1.bf16.msra.mxu0 %v1605
      %1626 = vmatprep.subr.bf16.mxu0 0
      %1627 = vmatpush1.bf16.msra.mxu0 %v1606
      %1628 = vmatprep.subr.bf16.mxu0 0
      %1629 = vmatpush1.bf16.msra.mxu0 %v1607
      %1630 = vmatprep.subr.bf16.mxu0 0
      %1631 = vmatpush1.bf16.msra.mxu0 %v1608
      %1632 = vmatprep.subr.bf16.mxu0 0
      %1633 = vmatpush1.bf16.msra.mxu0 %v1609
      %1634 = vmatprep.subr.bf16.mxu0 0
      %1635 = vmatpush1.bf16.msra.mxu0 0
      %1636 = vmatprep.subr.bf16.mxu0 0
      %1637 = vmatpush1.bf16.msra.mxu0 0
      %1638 = vmatprep.subr.bf16.mxu0 0
      %1639 = vmatpush1.bf16.msra.mxu0 0
      %1640 = vmatprep.subr.bf16.mxu0 0
      %1641 = vmatpush1.bf16.msra.mxu0 0
      %1642 = vmatprep.subr.bf16.mxu0 0
      %1643 = vmatpush1.bf16.msra.mxu0 0
      %1644 = vmatprep.subr.bf16.mxu0 0
      %1645 = vmatpush1.bf16.msra.mxu0 0
      %1646 = vmatprep.subr.bf16.mxu0 0
      %1647 = vmatpush1.bf16.msra.mxu0 0
      %1648 = vmatprep.subr.bf16.mxu0 0
      %1649 = vmatpush1.bf16.msra.mxu0 0
      %1650 = vmatprep.mubr.bf16.mxu0 0
      %1651 = vmatmul.mubr.bf16.gmra.mrb[0].mxu0 %v1314
      %v1652 = vpop.f32.mrb[0].mxu0
      %v1653 = vadd.f32 0.0, %v1652
      %v1654 = vpop.f32.mrb[0].mxu0
      %v1655 = vpop.f32.mrb[0].mxu0
      %v1656 = vadd.f32 0.0, %v1655
      %v1657 = vpop.f32.mrb[0].mxu0
      %1658 = vmatprep.mubr.bf16.mxu0 0
      %1659 = vmatmul.mubr.bf16.gmra.mrb[0].mxu0 %v1315
      %v1660 = vpop.f32.mrb[0].mxu0
      %v1661 = vadd.f32 0.0, %v1660
      %v1662 = vpop.f32.mrb[0].mxu0
      %v1663 = vpop.f32.mrb[0].mxu0
      %v1664 = vadd.f32 0.0, %v1663
      %v1665 = vpop.f32.mrb[0].mxu0
      %1666 = vmatprep.mubr.bf16.mxu0 0
      %1667 = vmatmul.mubr.bf16.gmra.mrb[0].mxu0 %v1316
      %v1668 = vpop.f32.mrb[0].mxu0
      %v1669 = vadd.f32 0.0, %v1668
      %v1670 = vpop.f32.mrb[0].mxu0
      %v1671 = vpop.f32.mrb[0].mxu0
      %v1672 = vadd.f32 0.0, %v1671
      %v1673 = vpop.f32.mrb[0].mxu0
      %1674 = vmatprep.mubr.bf16.mxu0 0
      %1675 = vmatmul.mubr.bf16.gmra.mrb[0].mxu0 %v1317
      %v1676 = vpop.f32.mrb[0].mxu0
      %v1677 = vadd.f32 0.0, %v1676
      %v1678 = vpop.f32.mrb[0].mxu0
      %v1679 = vpop.f32.mrb[0].mxu0
      %v1680 = vadd.f32 0.0, %v1679
      %v1681 = vpop.f32.mrb[0].mxu0
      %1682 = vmatprep.mubr.bf16.mxu0 0
      %1683 = vmatmul.mubr.bf16.gmra.mrb[0].mxu0 %v1318
      %v1684 = vpop.f32.mrb[0].mxu0
      %v1685 = vadd.f32 0.0, %v1684
      %v1686 = vpop.f32.mrb[0].mxu0
      %v1687 = vpop.f32.mrb[0].mxu0
      %v1688 = vadd.f32 0.0, %v1687
      %v1689 = vpop.f32.mrb[0].mxu0
      %1690 = vmatprep.mubr.bf16.mxu0 0
      %1691 = vmatmul.mubr.bf16.gmra.mrb[0].mxu0 %v1319
      %v1692 = vpop.f32.mrb[0].mxu0
      %v1693 = vadd.f32 0.0, %v1692
      %v1694 = vpop.f32.mrb[0].mxu0
      %v1695 = vpop.f32.mrb[0].mxu0
      %v1696 = vadd.f32 0.0, %v1695
      %v1697 = vpop.f32.mrb[0].mxu0
      %1698 = vmatprep.mubr.bf16.mxu0 0
      %1699 = vmatmul.mubr.bf16.gmra.mrb[0].mxu0 %v1320
      %v1700 = vpop.f32.mrb[0].mxu0
      %v1701 = vadd.f32 0.0, %v1700
      %v1702 = vpop.f32.mrb[0].mxu0
      %v1703 = vpop.f32.mrb[0].mxu0
      %v1704 = vadd.f32 0.0, %v1703
      %v1705 = vpop.f32.mrb[0].mxu0
      %1706 = vmatprep.mubr.bf16.mxu0 0
      %1707 = vmatmul.mubr.bf16.gmra.mrb[0].mxu0 %v1321
      %v1708 = vpop.f32.mrb[0].mxu0
      %v1709 = vadd.f32 0.0, %v1708
      %v1710 = vpop.f32.mrb[0].mxu0
      %v1711 = vpop.f32.mrb[0].mxu0
      %v1712 = vadd.f32 0.0, %v1711
      %v1713 = vpop.f32.mrb[0].mxu0
      %1714 = vmatprep.mubr.bf16.mxu0 0
      %1715 = vmatmul.mubr.bf16.gmra.mrb[0].mxu0 %v1322
      %v1716 = vpop.f32.mrb[0].mxu0
      %v1717 = vadd.f32 0.0, %v1716
      %v1718 = vpop.f32.mrb[0].mxu0
      %v1719 = vpop.f32.mrb[0].mxu0
      %v1720 = vadd.f32 0.0, %v1719
      %v1721 = vpop.f32.mrb[0].mxu0
      %1722 = vmatprep.mubr.bf16.mxu0 0
      %1723 = vmatmul.mubr.bf16.gmra.mrb[0].mxu0 %v1323
      %v1724 = vpop.f32.mrb[0].mxu0
      %v1725 = vadd.f32 0.0, %v1724
      %v1726 = vpop.f32.mrb[0].mxu0
      %v1727 = vpop.f32.mrb[0].mxu0
      %v1728 = vadd.f32 0.0, %v1727
      %v1729 = vpop.f32.mrb[0].mxu0
      %1730 = vmatprep.mubr.bf16.mxu0 0
      %1731 = vmatmul.mubr.bf16.gmra.mrb[0].mxu0 %v1324
      %v1732 = vpop.f32.mrb[0].mxu0
      %v1733 = vadd.f32 0.0, %v1732
      %v1734 = vpop.f32.mrb[0].mxu0
      %v1735 = vpop.f32.mrb[0].mxu0
      %v1736 = vadd.f32 0.0, %v1735
      %v1737 = vpop.f32.mrb[0].mxu0
      %1738 = vmatprep.mubr.bf16.mxu0 0
      %1739 = vmatmul.mubr.bf16.gmra.mrb[0].mxu0 %v1325
      %v1740 = vpop.f32.mrb[0].mxu0
      %v1741 = vadd.f32 0.0, %v1740
      %v1742 = vpop.f32.mrb[0].mxu0
      %v1743 = vpop.f32.mrb[0].mxu0
      %v1744 = vadd.f32 0.0, %v1743
      %v1745 = vpop.f32.mrb[0].mxu0
      %1746 = vmatprep.mubr.bf16.mxu0 0
      %1747 = vmatmul.mubr.bf16.gmra.mrb[0].mxu0 %v1326
      %v1748 = vpop.f32.mrb[0].mxu0
      %v1749 = vadd.f32 0.0, %v1748
      %v1750 = vpop.f32.mrb[0].mxu0
      %v1751 = vpop.f32.mrb[0].mxu0
      %v1752 = vadd.f32 0.0, %v1751
      %v1753 = vpop.f32.mrb[0].mxu0
      %1754 = vmatprep.mubr.bf16.mxu0 0
      %1755 = vmatmul.mubr.bf16.gmra.mrb[0].mxu0 %v1327
      %v1756 = vpop.f32.mrb[0].mxu0
      %v1757 = vadd.f32 0.0, %v1756
      %v1758 = vpop.f32.mrb[0].mxu0
      %v1759 = vpop.f32.mrb[0].mxu0
      %v1760 = vadd.f32 0.0, %v1759
      %v1761 = vpop.f32.mrb[0].mxu0
      %1762 = vmatprep.mubr.bf16.mxu0 0
      %1763 = vmatmul.mubr.bf16.gmra.mrb[0].mxu0 %v1328
      %v1764 = vpop.f32.mrb[0].mxu0
      %v1765 = vadd.f32 0.0, %v1764
      %v1766 = vpop.f32.mrb[0].mxu0
      %v1767 = vpop.f32.mrb[0].mxu0
      %v1768 = vadd.f32 0.0, %v1767
      %v1769 = vpop.f32.mrb[0].mxu0
      %1770 = vmatprep.mubr.bf16.mxu0 0
      %1771 = vmatmul.mubr.bf16.gmra.mrb[0].mxu0 %v1329
      %v1772 = vpop.f32.mrb[0].mxu0
      %v1773 = vadd.f32 0.0, %v1772
      %v1774 = vpop.f32.mrb[0].mxu0
      %v1775 = vpop.f32.mrb[0].mxu0
      %v1776 = vadd.f32 0.0, %v1775
      %v1777 = vpop.f32.mrb[0].mxu0
      %1778 = vmatprep.mubr.bf16.mxu0 0
      %1779 = vmatmul.mubr.bf16.gmra.mrb[0].mxu0 %v1330
      %v1780 = vpop.f32.mrb[0].mxu0
      %v1781 = vadd.f32 0.0, %v1780
      %v1782 = vpop.f32.mrb[0].mxu0
      %v1783 = vpop.f32.mrb[0].mxu0
      %v1784 = vadd.f32 0.0, %v1783
      %v1785 = vpop.f32.mrb[0].mxu0
      %1786 = vmatprep.mubr.bf16.mxu0 0
      %1787 = vmatmul.mubr.bf16.gmra.mrb[0].mxu0 %v1331
      %v1788 = vpop.f32.mrb[0].mxu0
      %v1789 = vadd.f32 0.0, %v1788
      %v1790 = vpop.f32.mrb[0].mxu0
      %v1791 = vpop.f32.mrb[0].mxu0
      %v1792 = vadd.f32 0.0, %v1791
      %v1793 = vpop.f32.mrb[0].mxu0
      %1794 = vmatprep.mubr.bf16.mxu0 0
      %1795 = vmatmul.mubr.bf16.gmra.mrb[0].mxu0 %v1332
      %v1796 = vpop.f32.mrb[0].mxu0
      %v1797 = vadd.f32 0.0, %v1796
      %v1798 = vpop.f32.mrb[0].mxu0
      %v1799 = vpop.f32.mrb[0].mxu0
      %v1800 = vadd.f32 0.0, %v1799
      %v1801 = vpop.f32.mrb[0].mxu0
      %1802 = vmatprep.mubr.bf16.mxu0 0
      %1803 = vmatmul.mubr.bf16.gmra.mrb[0].mxu0 %v1333
      %v1804 = vpop.f32.mrb[0].mxu0
      %v1805 = vadd.f32 0.0, %v1804
      %v1806 = vpop.f32.mrb[0].mxu0
      %v1807 = vpop.f32.mrb[0].mxu0
      %v1808 = vadd.f32 0.0, %v1807
      %v1809 = vpop.f32.mrb[0].mxu0
      %1810 = vmatprep.mubr.bf16.mxu0 0
      %1811 = vmatmul.mubr.bf16.gmra.mrb[0].mxu0 %v1334
      %v1812 = vpop.f32.mrb[0].mxu0
      %v1813 = vadd.f32 0.0, %v1812
      %v1814 = vpop.f32.mrb[0].mxu0
      %v1815 = vpop.f32.mrb[0].mxu0
      %v1816 = vadd.f32 0.0, %v1815
      %v1817 = vpop.f32.mrb[0].mxu0
      %1818 = vmatprep.mubr.bf16.mxu0 0
      %1819 = vmatmul.mubr.bf16.gmra.mrb[0].mxu0 %v1335
      %v1820 = vpop.f32.mrb[0].mxu0
      %v1821 = vadd.f32 0.0, %v1820
      %v1822 = vpop.f32.mrb[0].mxu0
      %v1823 = vpop.f32.mrb[0].mxu0
      %v1824 = vadd.f32 0.0, %v1823
      %v1825 = vpop.f32.mrb[0].mxu0
      %1826 = vmatprep.mubr.bf16.mxu0 0
      %1827 = vmatmul.mubr.bf16.gmra.mrb[0].mxu0 %v1336
      %v1828 = vpop.f32.mrb[0].mxu0
      %v1829 = vadd.f32 0.0, %v1828
      %v1830 = vpop.f32.mrb[0].mxu0
      %v1831 = vpop.f32.mrb[0].mxu0
      %v1832 = vadd.f32 0.0, %v1831
      %v1833 = vpop.f32.mrb[0].mxu0
      %1834 = vmatprep.mubr.bf16.mxu0 0
      %1835 = vmatmul.mubr.bf16.gmra.mrb[0].mxu0 %v1337
      %v1836 = vpop.f32.mrb[0].mxu0
      %v1837 = vadd.f32 0.0, %v1836
      %v1838 = vpop.f32.mrb[0].mxu0
      %v1839 = vpop.f32.mrb[0].mxu0
      %v1840 = vadd.f32 0.0, %v1839
      %v1841 = vpop.f32.mrb[0].mxu0
      %1842 = vmatprep.mubr.bf16.mxu0 0
      %1843 = vmatmul.mubr.bf16.gmra.mrb[0].mxu0 %v1338
      %v1844 = vpop.f32.mrb[0].mxu0
      %v1845 = vadd.f32 0.0, %v1844
      %v1846 = vpop.f32.mrb[0].mxu0
      %v1847 = vpop.f32.mrb[0].mxu0
      %v1848 = vadd.f32 0.0, %v1847
      %v1849 = vpop.f32.mrb[0].mxu0
      %1850 = vmatprep.mubr.bf16.mxu0 0
      %1851 = vmatmul.mubr.bf16.gmra.mrb[0].mxu0 %v1339
      %v1852 = vpop.f32.mrb[0].mxu0
      %v1853 = vadd.f32 0.0, %v1852
      %v1854 = vpop.f32.mrb[0].mxu0
      %v1855 = vpop.f32.mrb[0].mxu0
      %v1856 = vadd.f32 0.0, %v1855
      %v1857 = vpop.f32.mrb[0].mxu0
      %1858 = vmatprep.mubr.bf16.mxu0 0
      %1859 = vmatmul.mubr.bf16.gmra.mrb[0].mxu0 %v1340
      %v1860 = vpop.f32.mrb[0].mxu0
      %v1861 = vadd.f32 0.0, %v1860
      %v1862 = vpop.f32.mrb[0].mxu0
      %v1863 = vpop.f32.mrb[0].mxu0
      %v1864 = vadd.f32 0.0, %v1863
      %v1865 = vpop.f32.mrb[0].mxu0
      %1866 = vmatprep.mubr.bf16.mxu0 0
      %1867 = vmatmul.mubr.bf16.gmra.mrb[0].mxu0 %v1341
      %v1868 = vpop.f32.mrb[0].mxu0
      %v1869 = vadd.f32 0.0, %v1868
      %v1870 = vpop.f32.mrb[0].mxu0
      %v1871 = vpop.f32.mrb[0].mxu0
      %v1872 = vadd.f32 0.0, %v1871
      %v1873 = vpop.f32.mrb[0].mxu0
      %1874 = vmatprep.mubr.bf16.mxu0 0
      %1875 = vmatmul.mubr.bf16.gmra.mrb[0].mxu0 %v1342
      %v1876 = vpop.f32.mrb[0].mxu0
      %v1877 = vadd.f32 0.0, %v1876
      %v1878 = vpop.f32.mrb[0].mxu0
      %v1879 = vpop.f32.mrb[0].mxu0
      %v1880 = vadd.f32 0.0, %v1879
      %v1881 = vpop.f32.mrb[0].mxu0
      %1882 = vmatprep.mubr.bf16.mxu0 0
      %1883 = vmatmul.mubr.bf16.gmra.mrb[0].mxu0 %v1343
      %v1884 = vpop.f32.mrb[0].mxu0
      %v1885 = vadd.f32 0.0, %v1884
      %v1886 = vpop.f32.mrb[0].mxu0
      %v1887 = vpop.f32.mrb[0].mxu0
      %v1888 = vadd.f32 0.0, %v1887
      %v1889 = vpop.f32.mrb[0].mxu0
      %1890 = vmatprep.mubr.bf16.mxu0 0
      %1891 = vmatmul.mubr.bf16.gmra.mrb[0].mxu0 %v1344
      %v1892 = vpop.f32.mrb[0].mxu0
      %v1893 = vadd.f32 0.0, %v1892
      %v1894 = vpop.f32.mrb[0].mxu0
      %v1895 = vpop.f32.mrb[0].mxu0
      %v1896 = vadd.f32 0.0, %v1895
      %v1897 = vpop.f32.mrb[0].mxu0
      %1898 = vmatprep.mubr.bf16.mxu0 0
      %1899 = vmatmul.mubr.bf16.gmra.mrb[0].mxu0 %v1345
      %v1900 = vpop.f32.mrb[0].mxu0
      %v1901 = vadd.f32 0.0, %v1900
      %v1902 = vpop.f32.mrb[0].mxu0
      %v1903 = vpop.f32.mrb[0].mxu0
      %v1904 = vadd.f32 0.0, %v1903
      %v1905 = vpop.f32.mrb[0].mxu0
      %1906 = vmatprep.mubr.bf16.mxu0 0
      %1907 = vmatmul.mubr.bf16.gmra.mrb[0].mxu0 %v1346
      %v1908 = vpop.f32.mrb[0].mxu0
      %v1909 = vadd.f32 0.0, %v1908
      %v1910 = vpop.f32.mrb[0].mxu0
      %v1911 = vpop.f32.mrb[0].mxu0
      %v1912 = vadd.f32 0.0, %v1911
      %v1913 = vpop.f32.mrb[0].mxu0
      %1914 = vmatprep.mubr.bf16.mxu0 0
      %1915 = vmatmul.mubr.bf16.gmra.mrb[0].mxu0 %v1347
      %v1916 = vpop.f32.mrb[0].mxu0
      %v1917 = vadd.f32 0.0, %v1916
      %v1918 = vpop.f32.mrb[0].mxu0
      %v1919 = vpop.f32.mrb[0].mxu0
      %v1920 = vadd.f32 0.0, %v1919
      %v1921 = vpop.f32.mrb[0].mxu0
      %1922 = vmatprep.mubr.bf16.mxu0 0
      %1923 = vmatmul.mubr.bf16.gmra.mrb[0].mxu0 %v1348
      %v1924 = vpop.f32.mrb[0].mxu0
      %v1925 = vadd.f32 0.0, %v1924
      %v1926 = vpop.f32.mrb[0].mxu0
      %v1927 = vpop.f32.mrb[0].mxu0
      %v1928 = vadd.f32 0.0, %v1927
      %v1929 = vpop.f32.mrb[0].mxu0
      %1930 = vmatprep.mubr.bf16.mxu0 0
      %1931 = vmatmul.mubr.bf16.gmra.mrb[0].mxu0 %v1349
      %v1932 = vpop.f32.mrb[0].mxu0
      %v1933 = vadd.f32 0.0, %v1932
      %v1934 = vpop.f32.mrb[0].mxu0
      %v1935 = vpop.f32.mrb[0].mxu0
      %v1936 = vadd.f32 0.0, %v1935
      %v1937 = vpop.f32.mrb[0].mxu0
      %1938 = vmatprep.mubr.bf16.mxu0 0
      %1939 = vmatmul.mubr.bf16.gmra.mrb[0].mxu0 %v1350
      %v1940 = vpop.f32.mrb[0].mxu0
      %v1941 = vadd.f32 0.0, %v1940
      %v1942 = vpop.f32.mrb[0].mxu0
      %v1943 = vpop.f32.mrb[0].mxu0
      %v1944 = vadd.f32 0.0, %v1943
      %v1945 = vpop.f32.mrb[0].mxu0
      %1946 = vmatprep.mubr.bf16.mxu0 0
      %1947 = vmatmul.mubr.bf16.gmra.mrb[0].mxu0 %v1351
      %v1948 = vpop.f32.mrb[0].mxu0
      %v1949 = vadd.f32 0.0, %v1948
      %v1950 = vpop.f32.mrb[0].mxu0
      %v1951 = vpop.f32.mrb[0].mxu0
      %v1952 = vadd.f32 0.0, %v1951
      %v1953 = vpop.f32.mrb[0].mxu0
      %1954 = vmatprep.mubr.bf16.mxu0 0
      %1955 = vmatmul.mubr.bf16.gmra.mrb[0].mxu0 %v1352
      %v1956 = vpop.f32.mrb[0].mxu0
      %v1957 = vadd.f32 0.0, %v1956
      %v1958 = vpop.f32.mrb[0].mxu0
      %v1959 = vpop.f32.mrb[0].mxu0
      %v1960 = vadd.f32 0.0, %v1959
      %v1961 = vpop.f32.mrb[0].mxu0
      %1962 = vmatprep.mubr.bf16.mxu0 0
      %1963 = vmatmul.mubr.bf16.gmra.mrb[0].mxu0 %v1353
      %v1964 = vpop.f32.mrb[0].mxu0
      %v1965 = vadd.f32 0.0, %v1964
      %v1966 = vpop.f32.mrb[0].mxu0
      %v1967 = vpop.f32.mrb[0].mxu0
      %v1968 = vadd.f32 0.0, %v1967
      %v1969 = vpop.f32.mrb[0].mxu0
      %1970 = vmatprep.mubr.bf16.mxu0 0
      %1971 = vmatmul.mubr.bf16.gmra.mrb[0].mxu0 %v1354
      %v1972 = vpop.f32.mrb[0].mxu0
      %v1973 = vadd.f32 0.0, %v1972
      %v1974 = vpop.f32.mrb[0].mxu0
      %v1975 = vpop.f32.mrb[0].mxu0
      %v1976 = vadd.f32 0.0, %v1975
      %v1977 = vpop.f32.mrb[0].mxu0
      %1978 = vmatprep.mubr.bf16.mxu0 0
      %1979 = vmatmul.mubr.bf16.gmra.mrb[0].mxu0 %v1355
      %v1980 = vpop.f32.mrb[0].mxu0
      %v1981 = vadd.f32 0.0, %v1980
      %v1982 = vpop.f32.mrb[0].mxu0
      %v1983 = vpop.f32.mrb[0].mxu0
      %v1984 = vadd.f32 0.0, %v1983
      %v1985 = vpop.f32.mrb[0].mxu0
      %1986 = vmatprep.mubr.bf16.mxu0 0
      %1987 = vmatmul.mubr.bf16.gmra.mrb[0].mxu0 %v1356
      %v1988 = vpop.f32.mrb[0].mxu0
      %v1989 = vadd.f32 0.0, %v1988
      %v1990 = vpop.f32.mrb[0].mxu0
      %v1991 = vpop.f32.mrb[0].mxu0
      %v1992 = vadd.f32 0.0, %v1991
      %v1993 = vpop.f32.mrb[0].mxu0
      %1994 = vmatprep.mubr.bf16.mxu0 0
      %1995 = vmatmul.mubr.bf16.gmra.mrb[0].mxu0 %v1357
      %v1996 = vpop.f32.mrb[0].mxu0
      %v1997 = vadd.f32 0.0, %v1996
      %v1998 = vpop.f32.mrb[0].mxu0
      %v1999 = vpop.f32.mrb[0].mxu0
      %v2000 = vadd.f32 0.0, %v1999
      %v2001 = vpop.f32.mrb[0].mxu0
      %2002 = vmatprep.mubr.bf16.mxu0 0
      %2003 = vmatmul.mubr.bf16.gmra.mrb[0].mxu0 %v1358
      %v2004 = vpop.f32.mrb[0].mxu0
      %v2005 = vadd.f32 0.0, %v2004
      %v2006 = vpop.f32.mrb[0].mxu0
      %v2007 = vpop.f32.mrb[0].mxu0
      %v2008 = vadd.f32 0.0, %v2007
      %v2009 = vpop.f32.mrb[0].mxu0
      %2010 = vmatprep.mubr.bf16.mxu0 0
      %2011 = vmatmul.mubr.bf16.gmra.mrb[0].mxu0 %v1359
      %v2012 = vpop.f32.mrb[0].mxu0
      %v2013 = vadd.f32 0.0, %v2012
      %v2014 = vpop.f32.mrb[0].mxu0
      %v2015 = vpop.f32.mrb[0].mxu0
      %v2016 = vadd.f32 0.0, %v2015
      %v2017 = vpop.f32.mrb[0].mxu0
      %2018 = vmatprep.mubr.bf16.mxu0 0
      %2019 = vmatmul.mubr.bf16.gmra.mrb[0].mxu0 %v1360
      %v2020 = vpop.f32.mrb[0].mxu0
      %v2021 = vadd.f32 0.0, %v2020
      %v2022 = vpop.f32.mrb[0].mxu0
      %v2023 = vpop.f32.mrb[0].mxu0
      %v2024 = vadd.f32 0.0, %v2023
      %v2025 = vpop.f32.mrb[0].mxu0
      %2026 = vmatprep.mubr.bf16.mxu0 0
      %2027 = vmatmul.mubr.bf16.gmra.mrb[0].mxu0 %v1361
      %v2028 = vpop.f32.mrb[0].mxu0
      %v2029 = vadd.f32 0.0, %v2028
      %v2030 = vpop.f32.mrb[0].mxu0
      %v2031 = vpop.f32.mrb[0].mxu0
      %v2032 = vadd.f32 0.0, %v2031
      %v2033 = vpop.f32.mrb[0].mxu0
      %2034 = vmatprep.mubr.bf16.mxu0 0
      %2035 = vmatmul.mubr.bf16.gmra.mrb[0].mxu0 %v1362
      %v2036 = vpop.f32.mrb[0].mxu0
      %v2037 = vadd.f32 0.0, %v2036
      %v2038 = vpop.f32.mrb[0].mxu0
      %v2039 = vpop.f32.mrb[0].mxu0
      %v2040 = vadd.f32 0.0, %v2039
      %v2041 = vpop.f32.mrb[0].mxu0
      %2042 = vmatprep.mubr.bf16.mxu0 0
      %2043 = vmatmul.mubr.bf16.gmra.mrb[0].mxu0 %v1363
      %v2044 = vpop.f32.mrb[0].mxu0
      %v2045 = vadd.f32 0.0, %v2044
      %v2046 = vpop.f32.mrb[0].mxu0
      %v2047 = vpop.f32.mrb[0].mxu0
      %v2048 = vadd.f32 0.0, %v2047
      %v2049 = vpop.f32.mrb[0].mxu0
      %2050 = vmatprep.mubr.bf16.mxu0 0
      %2051 = vmatmul.mubr.bf16.gmra.mrb[0].mxu0 %v1364
      %v2052 = vpop.f32.mrb[0].mxu0
      %v2053 = vadd.f32 0.0, %v2052
      %v2054 = vpop.f32.mrb[0].mxu0
      %v2055 = vpop.f32.mrb[0].mxu0
      %v2056 = vadd.f32 0.0, %v2055
      %v2057 = vpop.f32.mrb[0].mxu0
      %2058 = vmatprep.mubr.bf16.mxu0 0
      %2059 = vmatmul.mubr.bf16.gmra.mrb[0].mxu0 %v1365
      %v2060 = vpop.f32.mrb[0].mxu0
      %v2061 = vadd.f32 0.0, %v2060
      %v2062 = vpop.f32.mrb[0].mxu0
      %v2063 = vpop.f32.mrb[0].mxu0
      %v2064 = vadd.f32 0.0, %v2063
      %v2065 = vpop.f32.mrb[0].mxu0
      %2066 = vmatprep.mubr.bf16.mxu0 0
      %2067 = vmatmul.mubr.bf16.gmra.mrb[0].mxu0 %v1366
      %v2068 = vpop.f32.mrb[0].mxu0
      %v2069 = vadd.f32 0.0, %v2068
      %v2070 = vpop.f32.mrb[0].mxu0
      %v2071 = vpop.f32.mrb[0].mxu0
      %v2072 = vadd.f32 0.0, %v2071
      %v2073 = vpop.f32.mrb[0].mxu0
      %2074 = vmatprep.mubr.bf16.mxu0 0
      %2075 = vmatmul.mubr.bf16.gmra.mrb[0].mxu0 %v1367
      %v2076 = vpop.f32.mrb[0].mxu0
      %v2077 = vadd.f32 0.0, %v2076
      %v2078 = vpop.f32.mrb[0].mxu0
      %v2079 = vpop.f32.mrb[0].mxu0
      %v2080 = vadd.f32 0.0, %v2079
      %v2081 = vpop.f32.mrb[0].mxu0
      %2082 = vmatprep.mubr.bf16.mxu0 0
      %2083 = vmatmul.mubr.bf16.gmra.mrb[0].mxu0 %v1368
      %v2084 = vpop.f32.mrb[0].mxu0
      %v2085 = vadd.f32 0.0, %v2084
      %v2086 = vpop.f32.mrb[0].mxu0
      %v2087 = vpop.f32.mrb[0].mxu0
      %v2088 = vadd.f32 0.0, %v2087
      %v2089 = vpop.f32.mrb[0].mxu0
      %2090 = vmatprep.mubr.bf16.mxu0 0
      %2091 = vmatmul.mubr.bf16.gmra.mrb[0].mxu0 %v1369
      %v2092 = vpop.f32.mrb[0].mxu0
      %v2093 = vadd.f32 0.0, %v2092
      %v2094 = vpop.f32.mrb[0].mxu0
      %v2095 = vpop.f32.mrb[0].mxu0
      %v2096 = vadd.f32 0.0, %v2095
      %v2097 = vpop.f32.mrb[0].mxu0
      %2098 = vmatprep.mubr.bf16.mxu0 0
      %2099 = vmatmul.mubr.bf16.gmra.mrb[0].mxu0 %v1370
      %v2100 = vpop.f32.mrb[0].mxu0
      %v2101 = vadd.f32 0.0, %v2100
      %v2102 = vpop.f32.mrb[0].mxu0
      %v2103 = vpop.f32.mrb[0].mxu0
      %v2104 = vadd.f32 0.0, %v2103
      %v2105 = vpop.f32.mrb[0].mxu0
      %2106 = vmatprep.mubr.bf16.mxu0 0
      %2107 = vmatmul.mubr.bf16.gmra.mrb[0].mxu0 %v1371
      %v2108 = vpop.f32.mrb[0].mxu0
      %v2109 = vadd.f32 0.0, %v2108
      %v2110 = vpop.f32.mrb[0].mxu0
      %v2111 = vpop.f32.mrb[0].mxu0
      %v2112 = vadd.f32 0.0, %v2111
      %v2113 = vpop.f32.mrb[0].mxu0
      %2114 = vmatprep.mubr.bf16.mxu0 0
      %2115 = vmatmul.mubr.bf16.gmra.mrb[0].mxu0 %v1372
      %v2116 = vpop.f32.mrb[0].mxu0
      %v2117 = vadd.f32 0.0, %v2116
      %v2118 = vpop.f32.mrb[0].mxu0
      %v2119 = vpop.f32.mrb[0].mxu0
      %v2120 = vadd.f32 0.0, %v2119
      %v2121 = vpop.f32.mrb[0].mxu0
      %2122 = vmatprep.mubr.bf16.mxu0 0
      %2123 = vmatmul.mubr.bf16.gmra.mrb[0].mxu0 %v1373
      %v2124 = vpop.f32.mrb[0].mxu0
      %v2125 = vadd.f32 0.0, %v2124
      %v2126 = vpop.f32.mrb[0].mxu0
      %v2127 = vpop.f32.mrb[0].mxu0
      %v2128 = vadd.f32 0.0, %v2127
      %v2129 = vpop.f32.mrb[0].mxu0
      %2130 = vmatprep.mubr.bf16.mxu0 0
      %2131 = vmatmul.mubr.bf16.gmra.mrb[0].mxu0 %v1374
      %v2132 = vpop.f32.mrb[0].mxu0
      %v2133 = vadd.f32 0.0, %v2132
      %v2134 = vpop.f32.mrb[0].mxu0
      %v2135 = vpop.f32.mrb[0].mxu0
      %v2136 = vadd.f32 0.0, %v2135
      %v2137 = vpop.f32.mrb[0].mxu0
      %2138 = vmatprep.mubr.bf16.mxu0 0
      %2139 = vmatmul.mubr.bf16.gmra.mrb[0].mxu0 %v1375
      %v2140 = vpop.f32.mrb[0].mxu0
      %v2141 = vadd.f32 0.0, %v2140
      %v2142 = vpop.f32.mrb[0].mxu0
      %v2143 = vpop.f32.mrb[0].mxu0
      %v2144 = vadd.f32 0.0, %v2143
      %v2145 = vpop.f32.mrb[0].mxu0
      %2146 = vmatprep.mubr.bf16.mxu0 0
      %2147 = vmatmul.mubr.bf16.gmra.mrb[0].mxu0 %v1376
      %v2148 = vpop.f32.mrb[0].mxu0
      %v2149 = vadd.f32 0.0, %v2148
      %v2150 = vpop.f32.mrb[0].mxu0
      %v2151 = vpop.f32.mrb[0].mxu0
      %v2152 = vadd.f32 0.0, %v2151
      %v2153 = vpop.f32.mrb[0].mxu0
      %2154 = vmatprep.mubr.bf16.mxu0 0
      %2155 = vmatmul.mubr.bf16.gmra.mrb[0].mxu0 %v1377
      %v2156 = vpop.f32.mrb[0].mxu0
      %v2157 = vadd.f32 0.0, %v2156
      %v2158 = vpop.f32.mrb[0].mxu0
      %v2159 = vpop.f32.mrb[0].mxu0
      %v2160 = vadd.f32 0.0, %v2159
      %v2161 = vpop.f32.mrb[0].mxu0
      %2162 = vmatprep.mubr.bf16.mxu0 0
      %2163 = vmatmul.mubr.bf16.gmra.mrb[0].mxu0 %v1378
      %v2164 = vpop.f32.mrb[0].mxu0
      %v2165 = vadd.f32 0.0, %v2164
      %v2166 = vpop.f32.mrb[0].mxu0
      %v2167 = vpop.f32.mrb[0].mxu0
      %v2168 = vadd.f32 0.0, %v2167
      %v2169 = vpop.f32.mrb[0].mxu0
      %2170 = vmatprep.mubr.bf16.mxu0 0
      %2171 = vmatmul.mubr.bf16.gmra.mrb[0].mxu0 %v1379
      %v2172 = vpop.f32.mrb[0].mxu0
      %v2173 = vadd.f32 0.0, %v2172
      %v2174 = vpop.f32.mrb[0].mxu0
      %v2175 = vpop.f32.mrb[0].mxu0
      %v2176 = vadd.f32 0.0, %v2175
      %v2177 = vpop.f32.mrb[0].mxu0
      %2178 = vmatprep.mubr.bf16.mxu0 0
      %2179 = vmatmul.mubr.bf16.gmra.mrb[0].mxu0 %v1380
      %v2180 = vpop.f32.mrb[0].mxu0
      %v2181 = vadd.f32 0.0, %v2180
      %v2182 = vpop.f32.mrb[0].mxu0
      %v2183 = vpop.f32.mrb[0].mxu0
      %v2184 = vadd.f32 0.0, %v2183
      %v2185 = vpop.f32.mrb[0].mxu0
      %2186 = vmatprep.mubr.bf16.mxu0 0
      %2187 = vmatmul.mubr.bf16.gmra.mrb[0].mxu0 %v1381
      %v2188 = vpop.f32.mrb[0].mxu0
      %v2189 = vadd.f32 0.0, %v2188
      %v2190 = vpop.f32.mrb[0].mxu0
      %v2191 = vpop.f32.mrb[0].mxu0
      %v2192 = vadd.f32 0.0, %v2191
      %v2193 = vpop.f32.mrb[0].mxu0
      %2194 = vmatprep.mubr.bf16.mxu0 0
      %2195 = vmatmul.mubr.bf16.gmra.mrb[0].mxu0 %v1382
      %v2196 = vpop.f32.mrb[0].mxu0
      %v2197 = vadd.f32 0.0, %v2196
      %v2198 = vpop.f32.mrb[0].mxu0
      %v2199 = vpop.f32.mrb[0].mxu0
      %v2200 = vadd.f32 0.0, %v2199
      %v2201 = vpop.f32.mrb[0].mxu0
      %2202 = vmatprep.mubr.bf16.mxu0 0
      %2203 = vmatmul.mubr.bf16.gmra.mrb[0].mxu0 %v1383
      %v2204 = vpop.f32.mrb[0].mxu0
      %v2205 = vadd.f32 0.0, %v2204
      %v2206 = vpop.f32.mrb[0].mxu0
      %v2207 = vpop.f32.mrb[0].mxu0
      %v2208 = vadd.f32 0.0, %v2207
      %v2209 = vpop.f32.mrb[0].mxu0
      %2210 = vmatprep.mubr.bf16.mxu0 0
      %2211 = vmatmul.mubr.bf16.gmra.mrb[0].mxu0 %v1384
      %v2212 = vpop.f32.mrb[0].mxu0
      %v2213 = vadd.f32 0.0, %v2212
      %v2214 = vpop.f32.mrb[0].mxu0
      %v2215 = vpop.f32.mrb[0].mxu0
      %v2216 = vadd.f32 0.0, %v2215
      %v2217 = vpop.f32.mrb[0].mxu0
      %2218 = vmatprep.mubr.bf16.mxu0 0
      %2219 = vmatmul.mubr.bf16.gmra.mrb[0].mxu0 %v1385
      %v2220 = vpop.f32.mrb[0].mxu0
      %v2221 = vadd.f32 0.0, %v2220
      %v2222 = vpop.f32.mrb[0].mxu0
      %v2223 = vpop.f32.mrb[0].mxu0
      %v2224 = vadd.f32 0.0, %v2223
      %v2225 = vpop.f32.mrb[0].mxu0
      %2226 = vmatprep.mubr.bf16.mxu0 0
      %2227 = vmatmul.mubr.bf16.gmra.mrb[0].mxu0 %v1386
      %v2228 = vpop.f32.mrb[0].mxu0
      %v2229 = vadd.f32 0.0, %v2228
      %v2230 = vpop.f32.mrb[0].mxu0
      %v2231 = vpop.f32.mrb[0].mxu0
      %v2232 = vadd.f32 0.0, %v2231
      %v2233 = vpop.f32.mrb[0].mxu0
      %2234 = vmatprep.mubr.bf16.mxu0 0
      %2235 = vmatmul.mubr.bf16.gmra.mrb[0].mxu0 %v1387
      %v2236 = vpop.f32.mrb[0].mxu0
      %v2237 = vadd.f32 0.0, %v2236
      %v2238 = vpop.f32.mrb[0].mxu0
      %v2239 = vpop.f32.mrb[0].mxu0
      %v2240 = vadd.f32 0.0, %v2239
      %v2241 = vpop.f32.mrb[0].mxu0
      %2242 = vmatprep.mubr.bf16.mxu0 0
      %2243 = vmatmul.mubr.bf16.gmra.mrb[0].mxu0 %v1388
      %v2244 = vpop.f32.mrb[0].mxu0
      %v2245 = vadd.f32 0.0, %v2244
      %v2246 = vpop.f32.mrb[0].mxu0
      %v2247 = vpop.f32.mrb[0].mxu0
      %v2248 = vadd.f32 0.0, %v2247
      %v2249 = vpop.f32.mrb[0].mxu0
      %2250 = vmatprep.mubr.bf16.mxu0 0
      %2251 = vmatmul.mubr.bf16.gmra.mrb[0].mxu0 %v1389
      %v2252 = vpop.f32.mrb[0].mxu0
      %v2253 = vadd.f32 0.0, %v2252
      %v2254 = vpop.f32.mrb[0].mxu0
      %v2255 = vpop.f32.mrb[0].mxu0
      %v2256 = vadd.f32 0.0, %v2255
      %v2257 = vpop.f32.mrb[0].mxu0
      %2258 = vmatprep.mubr.bf16.mxu0 0
      %2259 = vmatmul.mubr.bf16.gmra.mrb[0].mxu0 %v1390
      %v2260 = vpop.f32.mrb[0].mxu0
      %v2261 = vadd.f32 0.0, %v2260
      %v2262 = vpop.f32.mrb[0].mxu0
      %v2263 = vpop.f32.mrb[0].mxu0
      %v2264 = vadd.f32 0.0, %v2263
      %v2265 = vpop.f32.mrb[0].mxu0
      %2266 = vmatprep.mubr.bf16.mxu0 0
      %2267 = vmatmul.mubr.bf16.gmra.mrb[0].mxu0 %v1391
      %v2268 = vpop.f32.mrb[0].mxu0
      %v2269 = vadd.f32 0.0, %v2268
      %v2270 = vpop.f32.mrb[0].mxu0
      %v2271 = vpop.f32.mrb[0].mxu0
      %v2272 = vadd.f32 0.0, %v2271
      %v2273 = vpop.f32.mrb[0].mxu0
      %2274 = vmatprep.mubr.bf16.mxu0 0
      %2275 = vmatmul.mubr.bf16.gmra.mrb[0].mxu0 %v1392
      %v2276 = vpop.f32.mrb[0].mxu0
      %v2277 = vadd.f32 0.0, %v2276
      %v2278 = vpop.f32.mrb[0].mxu0
      %v2279 = vpop.f32.mrb[0].mxu0
      %v2280 = vadd.f32 0.0, %v2279
      %v2281 = vpop.f32.mrb[0].mxu0
      %2282 = vmatprep.mubr.bf16.mxu0 0
      %2283 = vmatmul.mubr.bf16.gmra.mrb[0].mxu0 %v1393
      %v2284 = vpop.f32.mrb[0].mxu0
      %v2285 = vadd.f32 0.0, %v2284
      %v2286 = vpop.f32.mrb[0].mxu0
      %v2287 = vpop.f32.mrb[0].mxu0
      %v2288 = vadd.f32 0.0, %v2287
      %v2289 = vpop.f32.mrb[0].mxu0
      %2290 = vmatprep.mubr.bf16.mxu0 0
      %2291 = vmatmul.mubr.bf16.gmra.mrb[0].mxu0 %v1394
      %v2292 = vpop.f32.mrb[0].mxu0
      %v2293 = vadd.f32 0.0, %v2292
      %v2294 = vpop.f32.mrb[0].mxu0
      %v2295 = vpop.f32.mrb[0].mxu0
      %v2296 = vadd.f32 0.0, %v2295
      %v2297 = vpop.f32.mrb[0].mxu0
      %2298 = vmatprep.mubr.bf16.mxu0 0
      %2299 = vmatmul.mubr.bf16.gmra.mrb[0].mxu0 %v1395
      %v2300 = vpop.f32.mrb[0].mxu0
      %v2301 = vadd.f32 0.0, %v2300
      %v2302 = vpop.f32.mrb[0].mxu0
      %v2303 = vpop.f32.mrb[0].mxu0
      %v2304 = vadd.f32 0.0, %v2303
      %v2305 = vpop.f32.mrb[0].mxu0
      %2306 = vmatprep.mubr.bf16.mxu0 0
      %2307 = vmatmul.mubr.bf16.gmra.mrb[0].mxu0 %v1396
      %v2308 = vpop.f32.mrb[0].mxu0
      %v2309 = vadd.f32 0.0, %v2308
      %v2310 = vpop.f32.mrb[0].mxu0
      %v2311 = vpop.f32.mrb[0].mxu0
      %v2312 = vadd.f32 0.0, %v2311
      %v2313 = vpop.f32.mrb[0].mxu0
      %2314 = vmatprep.mubr.bf16.mxu0 0
      %2315 = vmatmul.mubr.bf16.gmra.mrb[0].mxu0 %v1397
      %v2316 = vpop.f32.mrb[0].mxu0
      %v2317 = vadd.f32 0.0, %v2316
      %v2318 = vpop.f32.mrb[0].mxu0
      %v2319 = vpop.f32.mrb[0].mxu0
      %v2320 = vadd.f32 0.0, %v2319
      %v2321 = vpop.f32.mrb[0].mxu0
      %2322 = vmatprep.mubr.bf16.mxu0 0
      %2323 = vmatmul.mubr.bf16.gmra.mrb[0].mxu0 %v1398
      %v2324 = vpop.f32.mrb[0].mxu0
      %v2325 = vadd.f32 0.0, %v2324
      %v2326 = vpop.f32.mrb[0].mxu0
      %v2327 = vpop.f32.mrb[0].mxu0
      %v2328 = vadd.f32 0.0, %v2327
      %v2329 = vpop.f32.mrb[0].mxu0
      %2330 = vmatprep.mubr.bf16.mxu0 0
      %2331 = vmatmul.mubr.bf16.gmra.mrb[0].mxu0 %v1399
      %v2332 = vpop.f32.mrb[0].mxu0
      %v2333 = vadd.f32 0.0, %v2332
      %v2334 = vpop.f32.mrb[0].mxu0
      %v2335 = vpop.f32.mrb[0].mxu0
      %v2336 = vadd.f32 0.0, %v2335
      %v2337 = vpop.f32.mrb[0].mxu0
      %2338 = vmatprep.mubr.bf16.mxu0 0
      %2339 = vmatmul.mubr.bf16.gmra.mrb[0].mxu0 %v1400
      %v2340 = vpop.f32.mrb[0].mxu0
      %v2341 = vadd.f32 0.0, %v2340
      %v2342 = vpop.f32.mrb[0].mxu0
      %v2343 = vpop.f32.mrb[0].mxu0
      %v2344 = vadd.f32 0.0, %v2343
      %v2345 = vpop.f32.mrb[0].mxu0
      %2346 = vmatprep.mubr.bf16.mxu0 0
      %2347 = vmatmul.mubr.bf16.gmra.mrb[0].mxu0 %v1401
      %v2348 = vpop.f32.mrb[0].mxu0
      %v2349 = vadd.f32 0.0, %v2348
      %v2350 = vpop.f32.mrb[0].mxu0
      %v2351 = vpop.f32.mrb[0].mxu0
      %v2352 = vadd.f32 0.0, %v2351
      %v2353 = vpop.f32.mrb[0].mxu0
      %2354 = vmatprep.mubr.bf16.mxu0 0
      %2355 = vmatmul.mubr.bf16.gmra.mrb[0].mxu0 %v1402
      %v2356 = vpop.f32.mrb[0].mxu0
      %v2357 = vadd.f32 0.0, %v2356
      %v2358 = vpop.f32.mrb[0].mxu0
      %v2359 = vpop.f32.mrb[0].mxu0
      %v2360 = vadd.f32 0.0, %v2359
      %v2361 = vpop.f32.mrb[0].mxu0
      %2362 = vmatprep.mubr.bf16.mxu0 0
      %2363 = vmatmul.mubr.bf16.gmra.mrb[0].mxu0 %v1403
      %v2364 = vpop.f32.mrb[0].mxu0
      %v2365 = vadd.f32 0.0, %v2364
      %v2366 = vpop.f32.mrb[0].mxu0
      %v2367 = vpop.f32.mrb[0].mxu0
      %v2368 = vadd.f32 0.0, %v2367
      %v2369 = vpop.f32.mrb[0].mxu0
      %2370 = vmatprep.mubr.bf16.mxu0 0
      %2371 = vmatmul.mubr.bf16.gmra.mrb[0].mxu0 %v1404
      %v2372 = vpop.f32.mrb[0].mxu0
      %v2373 = vadd.f32 0.0, %v2372
      %v2374 = vpop.f32.mrb[0].mxu0
      %v2375 = vpop.f32.mrb[0].mxu0
      %v2376 = vadd.f32 0.0, %v2375
      %v2377 = vpop.f32.mrb[0].mxu0
      %2378 = vmatprep.mubr.bf16.mxu0 0
      %2379 = vmatmul.mubr.bf16.gmra.mrb[0].mxu0 %v1405
      %v2380 = vpop.f32.mrb[0].mxu0
      %v2381 = vadd.f32 0.0, %v2380
      %v2382 = vpop.f32.mrb[0].mxu0
      %v2383 = vpop.f32.mrb[0].mxu0
      %v2384 = vadd.f32 0.0, %v2383
      %v2385 = vpop.f32.mrb[0].mxu0
      %2386 = vmatprep.mubr.bf16.mxu0 0
      %2387 = vmatmul.mubr.bf16.gmra.mrb[0].mxu0 %v1406
      %v2388 = vpop.f32.mrb[0].mxu0
      %v2389 = vadd.f32 0.0, %v2388
      %v2390 = vpop.f32.mrb[0].mxu0
      %v2391 = vpop.f32.mrb[0].mxu0
      %v2392 = vadd.f32 0.0, %v2391
      %v2393 = vpop.f32.mrb[0].mxu0
      %2394 = vmatprep.mubr.bf16.mxu0 0
      %2395 = vmatmul.mubr.bf16.gmra.mrb[0].mxu0 %v1407
      %v2396 = vpop.f32.mrb[0].mxu0
      %v2397 = vadd.f32 0.0, %v2396
      %v2398 = vpop.f32.mrb[0].mxu0
      %v2399 = vpop.f32.mrb[0].mxu0
      %v2400 = vadd.f32 0.0, %v2399
      %v2401 = vpop.f32.mrb[0].mxu0
      %2402 = vmatprep.mubr.bf16.mxu0 0
      %2403 = vmatmul.mubr.bf16.gmra.mrb[0].mxu0 %v1408
      %v2404 = vpop.f32.mrb[0].mxu0
      %v2405 = vadd.f32 0.0, %v2404
      %v2406 = vpop.f32.mrb[0].mxu0
      %v2407 = vpop.f32.mrb[0].mxu0
      %v2408 = vadd.f32 0.0, %v2407
      %v2409 = vpop.f32.mrb[0].mxu0
      %2410 = vmatprep.mubr.bf16.mxu0 0
      %2411 = vmatmul.mubr.bf16.gmra.mrb[0].mxu0 %v1409
      %v2412 = vpop.f32.mrb[0].mxu0
      %v2413 = vadd.f32 0.0, %v2412
      %v2414 = vpop.f32.mrb[0].mxu0
      %v2415 = vpop.f32.mrb[0].mxu0
      %v2416 = vadd.f32 0.0, %v2415
      %v2417 = vpop.f32.mrb[0].mxu0
      %2418 = vmatprep.mubr.bf16.mxu0 0
      %2419 = vmatmul.mubr.bf16.gmra.mrb[0].mxu0 %v1410
      %v2420 = vpop.f32.mrb[0].mxu0
      %v2421 = vadd.f32 0.0, %v2420
      %v2422 = vpop.f32.mrb[0].mxu0
      %v2423 = vpop.f32.mrb[0].mxu0
      %v2424 = vadd.f32 0.0, %v2423
      %v2425 = vpop.f32.mrb[0].mxu0
      %2426 = vmatprep.mubr.bf16.mxu0 0
      %2427 = vmatmul.mubr.bf16.gmra.mrb[0].mxu0 %v1411
      %v2428 = vpop.f32.mrb[0].mxu0
      %v2429 = vadd.f32 0.0, %v2428
      %v2430 = vpop.f32.mrb[0].mxu0
      %v2431 = vpop.f32.mrb[0].mxu0
      %v2432 = vadd.f32 0.0, %v2431
      %v2433 = vpop.f32.mrb[0].mxu0
      %2434 = vmatprep.mubr.bf16.mxu0 0
      %2435 = vmatmul.mubr.bf16.gmra.mrb[0].mxu0 %v1412
      %v2436 = vpop.f32.mrb[0].mxu0
      %v2437 = vadd.f32 0.0, %v2436
      %v2438 = vpop.f32.mrb[0].mxu0
      %v2439 = vpop.f32.mrb[0].mxu0
      %v2440 = vadd.f32 0.0, %v2439
      %v2441 = vpop.f32.mrb[0].mxu0
      %2442 = vmatprep.mubr.bf16.mxu0 0
      %2443 = vmatmul.mubr.bf16.gmra.mrb[0].mxu0 %v1413
      %v2444 = vpop.f32.mrb[0].mxu0
      %v2445 = vadd.f32 0.0, %v2444
      %v2446 = vpop.f32.mrb[0].mxu0
      %v2447 = vpop.f32.mrb[0].mxu0
      %v2448 = vadd.f32 0.0, %v2447
      %v2449 = vpop.f32.mrb[0].mxu0
      %2450 = vmatprep.mubr.bf16.mxu0 0
      %2451 = vmatmul.mubr.bf16.gmra.mrb[0].mxu0 %v1414
      %v2452 = vpop.f32.mrb[0].mxu0
      %v2453 = vadd.f32 0.0, %v2452
      %v2454 = vpop.f32.mrb[0].mxu0
      %v2455 = vpop.f32.mrb[0].mxu0
      %v2456 = vadd.f32 0.0, %v2455
      %v2457 = vpop.f32.mrb[0].mxu0
      %2458 = vmatprep.mubr.bf16.mxu0 0
      %2459 = vmatmul.mubr.bf16.gmra.mrb[0].mxu0 %v1415
      %v2460 = vpop.f32.mrb[0].mxu0
      %v2461 = vadd.f32 0.0, %v2460
      %v2462 = vpop.f32.mrb[0].mxu0
      %v2463 = vpop.f32.mrb[0].mxu0
      %v2464 = vadd.f32 0.0, %v2463
      %v2465 = vpop.f32.mrb[0].mxu0
      %2466 = vmatprep.mubr.bf16.mxu0 0
      %2467 = vmatmul.mubr.bf16.gmra.mrb[0].mxu0 %v1416
      %v2468 = vpop.f32.mrb[0].mxu0
      %v2469 = vadd.f32 0.0, %v2468
      %v2470 = vpop.f32.mrb[0].mxu0
      %v2471 = vpop.f32.mrb[0].mxu0
      %v2472 = vadd.f32 0.0, %v2471
      %v2473 = vpop.f32.mrb[0].mxu0
      %2474 = vmatprep.mubr.bf16.mxu0 0
      %2475 = vmatmul.mubr.bf16.gmra.mrb[0].mxu0 %v1417
      %v2476 = vpop.f32.mrb[0].mxu0
      %v2477 = vadd.f32 0.0, %v2476
      %v2478 = vpop.f32.mrb[0].mxu0
      %v2479 = vpop.f32.mrb[0].mxu0
      %v2480 = vadd.f32 0.0, %v2479
      %v2481 = vpop.f32.mrb[0].mxu0
      %2482 = vmatprep.mubr.bf16.mxu0 0
      %2483 = vmatmul.mubr.bf16.gmra.mrb[0].mxu0 %v1418
      %v2484 = vpop.f32.mrb[0].mxu0
      %v2485 = vadd.f32 0.0, %v2484
      %v2486 = vpop.f32.mrb[0].mxu0
      %v2487 = vpop.f32.mrb[0].mxu0
      %v2488 = vadd.f32 0.0, %v2487
      %v2489 = vpop.f32.mrb[0].mxu0
      %2490 = vmatprep.mubr.bf16.mxu0 0
      %2491 = vmatmul.mubr.bf16.gmra.mrb[0].mxu0 %v1419
      %v2492 = vpop.f32.mrb[0].mxu0
      %v2493 = vadd.f32 0.0, %v2492
      %v2494 = vpop.f32.mrb[0].mxu0
      %v2495 = vpop.f32.mrb[0].mxu0
      %v2496 = vadd.f32 0.0, %v2495
      %v2497 = vpop.f32.mrb[0].mxu0
      %2498 = vmatprep.mubr.bf16.mxu0 0
      %2499 = vmatmul.mubr.bf16.gmra.mrb[0].mxu0 %v1420
      %v2500 = vpop.f32.mrb[0].mxu0
      %v2501 = vadd.f32 0.0, %v2500
      %v2502 = vpop.f32.mrb[0].mxu0
      %v2503 = vpop.f32.mrb[0].mxu0
      %v2504 = vadd.f32 0.0, %v2503
      %v2505 = vpop.f32.mrb[0].mxu0
      %2506 = vmatprep.mubr.bf16.mxu0 0
      %2507 = vmatmul.mubr.bf16.gmra.mrb[0].mxu0 %v1421
      %v2508 = vpop.f32.mrb[0].mxu0
      %v2509 = vadd.f32 0.0, %v2508
      %v2510 = vpop.f32.mrb[0].mxu0
      %v2511 = vpop.f32.mrb[0].mxu0
      %v2512 = vadd.f32 0.0, %v2511
      %v2513 = vpop.f32.mrb[0].mxu0
      %2514 = vmatprep.mubr.bf16.mxu0 0
      %2515 = vmatmul.mubr.bf16.gmra.mrb[0].mxu0 %v1422
      %v2516 = vpop.f32.mrb[0].mxu0
      %v2517 = vadd.f32 0.0, %v2516
      %v2518 = vpop.f32.mrb[0].mxu0
      %v2519 = vpop.f32.mrb[0].mxu0
      %v2520 = vadd.f32 0.0, %v2519
      %v2521 = vpop.f32.mrb[0].mxu0
      %2522 = vmatprep.mubr.bf16.mxu0 0
      %2523 = vmatmul.mubr.bf16.gmra.mrb[0].mxu0 %v1423
      %v2524 = vpop.f32.mrb[0].mxu0
      %v2525 = vadd.f32 0.0, %v2524
      %v2526 = vpop.f32.mrb[0].mxu0
      %v2527 = vpop.f32.mrb[0].mxu0
      %v2528 = vadd.f32 0.0, %v2527
      %v2529 = vpop.f32.mrb[0].mxu0
      %2530 = vmatprep.mubr.bf16.mxu0 0
      %2531 = vmatmul.mubr.bf16.gmra.mrb[0].mxu0 %v1424
      %v2532 = vpop.f32.mrb[0].mxu0
      %v2533 = vadd.f32 0.0, %v2532
      %v2534 = vpop.f32.mrb[0].mxu0
      %v2535 = vpop.f32.mrb[0].mxu0
      %v2536 = vadd.f32 0.0, %v2535
      %v2537 = vpop.f32.mrb[0].mxu0
      %2538 = vmatprep.mubr.bf16.mxu0 0
      %2539 = vmatmul.mubr.bf16.gmra.mrb[0].mxu0 %v1425
      %v2540 = vpop.f32.mrb[0].mxu0
      %v2541 = vadd.f32 0.0, %v2540
      %v2542 = vpop.f32.mrb[0].mxu0
      %v2543 = vpop.f32.mrb[0].mxu0
      %v2544 = vadd.f32 0.0, %v2543
      %v2545 = vpop.f32.mrb[0].mxu0
      %2546 = vmatprep.mubr.bf16.mxu0 0
      %2547 = vmatmul.mubr.bf16.gmra.mrb[0].mxu0 %v1426
      %v2548 = vpop.f32.mrb[0].mxu0
      %v2549 = vadd.f32 0.0, %v2548
      %v2550 = vpop.f32.mrb[0].mxu0
      %v2551 = vpop.f32.mrb[0].mxu0
      %v2552 = vadd.f32 0.0, %v2551
      %v2553 = vpop.f32.mrb[0].mxu0
      %2554 = vmatprep.mubr.bf16.mxu0 0
      %2555 = vmatmul.mubr.bf16.gmra.mrb[0].mxu0 %v1427
      %v2556 = vpop.f32.mrb[0].mxu0
      %v2557 = vadd.f32 0.0, %v2556
      %v2558 = vpop.f32.mrb[0].mxu0
      %v2559 = vpop.f32.mrb[0].mxu0
      %v2560 = vadd.f32 0.0, %v2559
      %v2561 = vpop.f32.mrb[0].mxu0
      %2562 = vmatprep.mubr.bf16.mxu0 0
      %2563 = vmatmul.mubr.bf16.gmra.mrb[0].mxu0 %v1428
      %v2564 = vpop.f32.mrb[0].mxu0
      %v2565 = vadd.f32 0.0, %v2564
      %v2566 = vpop.f32.mrb[0].mxu0
      %v2567 = vpop.f32.mrb[0].mxu0
      %v2568 = vadd.f32 0.0, %v2567
      %v2569 = vpop.f32.mrb[0].mxu0
      %2570 = vmatprep.mubr.bf16.mxu0 0
      %2571 = vmatmul.mubr.bf16.gmra.mrb[0].mxu0 %v1429
      %v2572 = vpop.f32.mrb[0].mxu0
      %v2573 = vadd.f32 0.0, %v2572
      %v2574 = vpop.f32.mrb[0].mxu0
      %v2575 = vpop.f32.mrb[0].mxu0
      %v2576 = vadd.f32 0.0, %v2575
      %v2577 = vpop.f32.mrb[0].mxu0
      %2578 = vmatprep.mubr.bf16.mxu0 0
      %2579 = vmatmul.mubr.bf16.gmra.mrb[0].mxu0 %v1430
      %v2580 = vpop.f32.mrb[0].mxu0
      %v2581 = vadd.f32 0.0, %v2580
      %v2582 = vpop.f32.mrb[0].mxu0
      %v2583 = vpop.f32.mrb[0].mxu0
      %v2584 = vadd.f32 0.0, %v2583
      %v2585 = vpop.f32.mrb[0].mxu0
      %2586 = vmatprep.mubr.bf16.mxu0 0
      %2587 = vmatmul.mubr.bf16.gmra.mrb[0].mxu0 %v1431
      %v2588 = vpop.f32.mrb[0].mxu0
      %v2589 = vadd.f32 0.0, %v2588
      %v2590 = vpop.f32.mrb[0].mxu0
      %v2591 = vpop.f32.mrb[0].mxu0
      %v2592 = vadd.f32 0.0, %v2591
      %v2593 = vpop.f32.mrb[0].mxu0
      %2594 = vmatprep.mubr.bf16.mxu0 0
      %2595 = vmatmul.mubr.bf16.gmra.mrb[0].mxu0 %v1432
      %v2596 = vpop.f32.mrb[0].mxu0
      %v2597 = vadd.f32 0.0, %v2596
      %v2598 = vpop.f32.mrb[0].mxu0
      %v2599 = vpop.f32.mrb[0].mxu0
      %v2600 = vadd.f32 0.0, %v2599
      %v2601 = vpop.f32.mrb[0].mxu0
      %2602 = vmatprep.mubr.bf16.mxu0 0
      %2603 = vmatmul.mubr.bf16.gmra.mrb[0].mxu0 %v1433
      %v2604 = vpop.f32.mrb[0].mxu0
      %v2605 = vadd.f32 0.0, %v2604
      %v2606 = vpop.f32.mrb[0].mxu0
      %v2607 = vpop.f32.mrb[0].mxu0
      %v2608 = vadd.f32 0.0, %v2607
      %v2609 = vpop.f32.mrb[0].mxu0
      %2610 = vmatprep.mubr.bf16.mxu0 0
      %2611 = vmatmul.mubr.bf16.gmra.mrb[0].mxu0 %v1434
      %v2612 = vpop.f32.mrb[0].mxu0
      %v2613 = vadd.f32 0.0, %v2612
      %v2614 = vpop.f32.mrb[0].mxu0
      %v2615 = vpop.f32.mrb[0].mxu0
      %v2616 = vadd.f32 0.0, %v2615
      %v2617 = vpop.f32.mrb[0].mxu0
      %2618 = vmatprep.mubr.bf16.mxu0 0
      %2619 = vmatmul.mubr.bf16.gmra.mrb[0].mxu0 %v1435
      %v2620 = vpop.f32.mrb[0].mxu0
      %v2621 = vadd.f32 0.0, %v2620
      %v2622 = vpop.f32.mrb[0].mxu0
      %v2623 = vpop.f32.mrb[0].mxu0
      %v2624 = vadd.f32 0.0, %v2623
      %v2625 = vpop.f32.mrb[0].mxu0
      %2626 = vmatprep.mubr.bf16.mxu0 0
      %2627 = vmatmul.mubr.bf16.gmra.mrb[0].mxu0 %v1436
      %v2628 = vpop.f32.mrb[0].mxu0
      %v2629 = vadd.f32 0.0, %v2628
      %v2630 = vpop.f32.mrb[0].mxu0
      %v2631 = vpop.f32.mrb[0].mxu0
      %v2632 = vadd.f32 0.0, %v2631
      %v2633 = vpop.f32.mrb[0].mxu0
      %2634 = vmatprep.mubr.bf16.mxu0 0
      %2635 = vmatmul.mubr.bf16.gmra.mrb[0].mxu0 %v1437
      %v2636 = vpop.f32.mrb[0].mxu0
      %v2637 = vadd.f32 0.0, %v2636
      %v2638 = vpop.f32.mrb[0].mxu0
      %v2639 = vpop.f32.mrb[0].mxu0
      %v2640 = vadd.f32 0.0, %v2639
      %v2641 = vpop.f32.mrb[0].mxu0
      %2642 = vmatprep.mubr.bf16.mxu0 0
      %2643 = vmatmul.mubr.bf16.gmra.mrb[0].mxu0 %v1438
      %v2644 = vpop.f32.mrb[0].mxu0
      %v2645 = vadd.f32 0.0, %v2644
      %v2646 = vpop.f32.mrb[0].mxu0
      %v2647 = vpop.f32.mrb[0].mxu0
      %v2648 = vadd.f32 0.0, %v2647
      %v2649 = vpop.f32.mrb[0].mxu0
      %2650 = vmatprep.mubr.bf16.mxu0 0
      %2651 = vmatmul.mubr.bf16.gmra.mrb[0].mxu0 %v1439
      %v2652 = vpop.f32.mrb[0].mxu0
      %v2653 = vadd.f32 0.0, %v2652
      %v2654 = vpop.f32.mrb[0].mxu0
      %v2655 = vpop.f32.mrb[0].mxu0
      %v2656 = vadd.f32 0.0, %v2655
      %v2657 = vpop.f32.mrb[0].mxu0
      %2658 = vmatprep.mubr.bf16.mxu0 0
      %2659 = vmatmul.mubr.bf16.gmra.mrb[0].mxu0 %v1440
      %v2660 = vpop.f32.mrb[0].mxu0
      %v2661 = vadd.f32 0.0, %v2660
      %v2662 = vpop.f32.mrb[0].mxu0
      %v2663 = vpop.f32.mrb[0].mxu0
      %v2664 = vadd.f32 0.0, %v2663
      %v2665 = vpop.f32.mrb[0].mxu0
      %2666 = vmatprep.mubr.bf16.mxu0 0
      %2667 = vmatmul.mubr.bf16.gmra.mrb[0].mxu0 %v1441
      %v2668 = vpop.f32.mrb[0].mxu0
      %v2669 = vadd.f32 0.0, %v2668
      %v2670 = vpop.f32.mrb[0].mxu0
      %v2671 = vpop.f32.mrb[0].mxu0
      %v2672 = vadd.f32 0.0, %v2671
      %v2673 = vpop.f32.mrb[0].mxu0
      %2674 = vdwg.mxu0
      %v2675 = vmax.f32 %v1653, 0.0
      %v2676 = vmax.f32 %v1656, 0.0
      %v2677 = vmax.f32 %v1661, 0.0
      %v2678 = vmax.f32 %v1664, 0.0
      %v2679 = vmax.f32 %v1669, 0.0
      %v2680 = vmax.f32 %v1672, 0.0
      %v2681 = vmax.f32 %v1677, 0.0
      %v2682 = vmax.f32 %v1680, 0.0
      %v2683 = vmax.f32 %v1685, 0.0
      %v2684 = vmax.f32 %v1688, 0.0
      %v2685 = vmax.f32 %v1693, 0.0
      %v2686 = vmax.f32 %v1696, 0.0
      %v2687 = vmax.f32 %v1701, 0.0
      %v2688 = vmax.f32 %v1704, 0.0
      %v2689 = vmax.f32 %v1709, 0.0
      %v2690 = vmax.f32 %v1712, 0.0
      %v2691 = vmax.f32 %v1717, 0.0
      %v2692 = vmax.f32 %v1720, 0.0
      %v2693 = vmax.f32 %v1725, 0.0
      %v2694 = vmax.f32 %v1728, 0.0
      %v2695 = vmax.f32 %v1733, 0.0
      %v2696 = vmax.f32 %v1736, 0.0
      %v2697 = vmax.f32 %v1741, 0.0
      %v2698 = vmax.f32 %v1744, 0.0
      %v2699 = vmax.f32 %v1749, 0.0
      %v2700 = vmax.f32 %v1752, 0.0
      %v2701 = vmax.f32 %v1757, 0.0
      %v2702 = vmax.f32 %v1760, 0.0
      %v2703 = vmax.f32 %v1765, 0.0
      %v2704 = vmax.f32 %v1768, 0.0
      %v2705 = vmax.f32 %v1773, 0.0
      %v2706 = vmax.f32 %v1776, 0.0
      %v2707 = vmax.f32 %v1781, 0.0
      %v2708 = vmax.f32 %v1784, 0.0
      %v2709 = vmax.f32 %v1789, 0.0
      %v2710 = vmax.f32 %v1792, 0.0
      %v2711 = vmax.f32 %v1797, 0.0
      %v2712 = vmax.f32 %v1800, 0.0
      %v2713 = vmax.f32 %v1805, 0.0
      %v2714 = vmax.f32 %v1808, 0.0
      %v2715 = vmax.f32 %v1813, 0.0
      %v2716 = vmax.f32 %v1816, 0.0
      %v2717 = vmax.f32 %v1821, 0.0
      %v2718 = vmax.f32 %v1824, 0.0
      %v2719 = vmax.f32 %v1829, 0.0
      %v2720 = vmax.f32 %v1832, 0.0
      %v2721 = vmax.f32 %v1837, 0.0
      %v2722 = vmax.f32 %v1840, 0.0
      %v2723 = vmax.f32 %v1845, 0.0
      %v2724 = vmax.f32 %v1848, 0.0
      %v2725 = vmax.f32 %v1853, 0.0
      %v2726 = vmax.f32 %v1856, 0.0
      %v2727 = vmax.f32 %v1861, 0.0
      %v2728 = vmax.f32 %v1864, 0.0
      %v2729 = vmax.f32 %v1869, 0.0
      %v2730 = vmax.f32 %v1872, 0.0
      %v2731 = vmax.f32 %v1877, 0.0
      %v2732 = vmax.f32 %v1880, 0.0
      %v2733 = vmax.f32 %v1885, 0.0
      %v2734 = vmax.f32 %v1888, 0.0
      %v2735 = vmax.f32 %v1893, 0.0
      %v2736 = vmax.f32 %v1896, 0.0
      %v2737 = vmax.f32 %v1901, 0.0
      %v2738 = vmax.f32 %v1904, 0.0
      %v2739 = vmax.f32 %v1909, 0.0
      %v2740 = vmax.f32 %v1912, 0.0
      %v2741 = vmax.f32 %v1917, 0.0
      %v2742 = vmax.f32 %v1920, 0.0
      %v2743 = vmax.f32 %v1925, 0.0
      %v2744 = vmax.f32 %v1928, 0.0
      %v2745 = vmax.f32 %v1933, 0.0
      %v2746 = vmax.f32 %v1936, 0.0
      %v2747 = vmax.f32 %v1941, 0.0
      %v2748 = vmax.f32 %v1944, 0.0
      %v2749 = vmax.f32 %v1949, 0.0
      %v2750 = vmax.f32 %v1952, 0.0
      %v2751 = vmax.f32 %v1957, 0.0
      %v2752 = vmax.f32 %v1960, 0.0
      %v2753 = vmax.f32 %v1965, 0.0
      %v2754 = vmax.f32 %v1968, 0.0
      %v2755 = vmax.f32 %v1973, 0.0
      %v2756 = vmax.f32 %v1976, 0.0
      %v2757 = vmax.f32 %v1981, 0.0
      %v2758 = vmax.f32 %v1984, 0.0
      %v2759 = vmax.f32 %v1989, 0.0
      %v2760 = vmax.f32 %v1992, 0.0
      %v2761 = vmax.f32 %v1997, 0.0
      %v2762 = vmax.f32 %v2000, 0.0
      %v2763 = vmax.f32 %v2005, 0.0
      %v2764 = vmax.f32 %v2008, 0.0
      %v2765 = vmax.f32 %v2013, 0.0
      %v2766 = vmax.f32 %v2016, 0.0
      %v2767 = vmax.f32 %v2021, 0.0
      %v2768 = vmax.f32 %v2024, 0.0
      %v2769 = vmax.f32 %v2029, 0.0
      %v2770 = vmax.f32 %v2032, 0.0
      %v2771 = vmax.f32 %v2037, 0.0
      %v2772 = vmax.f32 %v2040, 0.0
      %v2773 = vmax.f32 %v2045, 0.0
      %v2774 = vmax.f32 %v2048, 0.0
      %v2775 = vmax.f32 %v2053, 0.0
      %v2776 = vmax.f32 %v2056, 0.0
      %v2777 = vmax.f32 %v2061, 0.0
      %v2778 = vmax.f32 %v2064, 0.0
      %v2779 = vmax.f32 %v2069, 0.0
      %v2780 = vmax.f32 %v2072, 0.0
      %v2781 = vmax.f32 %v2077, 0.0
      %v2782 = vmax.f32 %v2080, 0.0
      %v2783 = vmax.f32 %v2085, 0.0
      %v2784 = vmax.f32 %v2088, 0.0
      %v2785 = vmax.f32 %v2093, 0.0
      %v2786 = vmax.f32 %v2096, 0.0
      %v2787 = vmax.f32 %v2101, 0.0
      %v2788 = vmax.f32 %v2104, 0.0
      %v2789 = vmax.f32 %v2109, 0.0
      %v2790 = vmax.f32 %v2112, 0.0
      %v2791 = vmax.f32 %v2117, 0.0
      %v2792 = vmax.f32 %v2120, 0.0
      %v2793 = vmax.f32 %v2125, 0.0
      %v2794 = vmax.f32 %v2128, 0.0
      %v2795 = vmax.f32 %v2133, 0.0
      %v2796 = vmax.f32 %v2136, 0.0
      %v2797 = vmax.f32 %v2141, 0.0
      %v2798 = vmax.f32 %v2144, 0.0
      %v2799 = vmax.f32 %v2149, 0.0
      %v2800 = vmax.f32 %v2152, 0.0
      %v2801 = vmax.f32 %v2157, 0.0
      %v2802 = vmax.f32 %v2160, 0.0
      %v2803 = vmax.f32 %v2165, 0.0
      %v2804 = vmax.f32 %v2168, 0.0
      %v2805 = vmax.f32 %v2173, 0.0
      %v2806 = vmax.f32 %v2176, 0.0
      %v2807 = vmax.f32 %v2181, 0.0
      %v2808 = vmax.f32 %v2184, 0.0
      %v2809 = vmax.f32 %v2189, 0.0
      %v2810 = vmax.f32 %v2192, 0.0
      %v2811 = vmax.f32 %v2197, 0.0
      %v2812 = vmax.f32 %v2200, 0.0
      %v2813 = vmax.f32 %v2205, 0.0
      %v2814 = vmax.f32 %v2208, 0.0
      %v2815 = vmax.f32 %v2213, 0.0
      %v2816 = vmax.f32 %v2216, 0.0
      %v2817 = vmax.f32 %v2221, 0.0
      %v2818 = vmax.f32 %v2224, 0.0
      %v2819 = vmax.f32 %v2229, 0.0
      %v2820 = vmax.f32 %v2232, 0.0
      %v2821 = vmax.f32 %v2237, 0.0
      %v2822 = vmax.f32 %v2240, 0.0
      %v2823 = vmax.f32 %v2245, 0.0
      %v2824 = vmax.f32 %v2248, 0.0
      %v2825 = vmax.f32 %v2253, 0.0
      %v2826 = vmax.f32 %v2256, 0.0
      %v2827 = vmax.f32 %v2261, 0.0
      %v2828 = vmax.f32 %v2264, 0.0
      %v2829 = vmax.f32 %v2269, 0.0
      %v2830 = vmax.f32 %v2272, 0.0
      %v2831 = vmax.f32 %v2277, 0.0
      %v2832 = vmax.f32 %v2280, 0.0
      %v2833 = vmax.f32 %v2285, 0.0
      %v2834 = vmax.f32 %v2288, 0.0
      %v2835 = vmax.f32 %v2293, 0.0
      %v2836 = vmax.f32 %v2296, 0.0
      %v2837 = vmax.f32 %v2301, 0.0
      %v2838 = vmax.f32 %v2304, 0.0
      %v2839 = vmax.f32 %v2309, 0.0
      %v2840 = vmax.f32 %v2312, 0.0
      %v2841 = vmax.f32 %v2317, 0.0
      %v2842 = vmax.f32 %v2320, 0.0
      %v2843 = vmax.f32 %v2325, 0.0
      %v2844 = vmax.f32 %v2328, 0.0
      %v2845 = vmax.f32 %v2333, 0.0
      %v2846 = vmax.f32 %v2336, 0.0
      %v2847 = vmax.f32 %v2341, 0.0
      %v2848 = vmax.f32 %v2344, 0.0
      %v2849 = vmax.f32 %v2349, 0.0
      %v2850 = vmax.f32 %v2352, 0.0
      %v2851 = vmax.f32 %v2357, 0.0
      %v2852 = vmax.f32 %v2360, 0.0
      %v2853 = vmax.f32 %v2365, 0.0
      %v2854 = vmax.f32 %v2368, 0.0
      %v2855 = vmax.f32 %v2373, 0.0
      %v2856 = vmax.f32 %v2376, 0.0
      %v2857 = vmax.f32 %v2381, 0.0
      %v2858 = vmax.f32 %v2384, 0.0
      %v2859 = vmax.f32 %v2389, 0.0
      %v2860 = vmax.f32 %v2392, 0.0
      %v2861 = vmax.f32 %v2397, 0.0
      %v2862 = vmax.f32 %v2400, 0.0
      %v2863 = vmax.f32 %v2405, 0.0
      %v2864 = vmax.f32 %v2408, 0.0
      %v2865 = vmax.f32 %v2413, 0.0
      %v2866 = vmax.f32 %v2416, 0.0
      %v2867 = vmax.f32 %v2421, 0.0
      %v2868 = vmax.f32 %v2424, 0.0
      %v2869 = vmax.f32 %v2429, 0.0
      %v2870 = vmax.f32 %v2432, 0.0
      %v2871 = vmax.f32 %v2437, 0.0
      %v2872 = vmax.f32 %v2440, 0.0
      %v2873 = vmax.f32 %v2445, 0.0
      %v2874 = vmax.f32 %v2448, 0.0
      %v2875 = vmax.f32 %v2453, 0.0
      %v2876 = vmax.f32 %v2456, 0.0
      %v2877 = vmax.f32 %v2461, 0.0
      %v2878 = vmax.f32 %v2464, 0.0
      %v2879 = vmax.f32 %v2469, 0.0
      %v2880 = vmax.f32 %v2472, 0.0
      %v2881 = vmax.f32 %v2477, 0.0
      %v2882 = vmax.f32 %v2480, 0.0
      %v2883 = vmax.f32 %v2485, 0.0
      %v2884 = vmax.f32 %v2488, 0.0
      %v2885 = vmax.f32 %v2493, 0.0
      %v2886 = vmax.f32 %v2496, 0.0
      %v2887 = vmax.f32 %v2501, 0.0
      %v2888 = vmax.f32 %v2504, 0.0
      %v2889 = vmax.f32 %v2509, 0.0
      %v2890 = vmax.f32 %v2512, 0.0
      %v2891 = vmax.f32 %v2517, 0.0
      %v2892 = vmax.f32 %v2520, 0.0
      %v2893 = vmax.f32 %v2525, 0.0
      %v2894 = vmax.f32 %v2528, 0.0
      %v2895 = vmax.f32 %v2533, 0.0
      %v2896 = vmax.f32 %v2536, 0.0
      %v2897 = vmax.f32 %v2541, 0.0
      %v2898 = vmax.f32 %v2544, 0.0
      %v2899 = vmax.f32 %v2549, 0.0
      %v2900 = vmax.f32 %v2552, 0.0
      %v2901 = vmax.f32 %v2557, 0.0
      %v2902 = vmax.f32 %v2560, 0.0
      %v2903 = vmax.f32 %v2565, 0.0
      %v2904 = vmax.f32 %v2568, 0.0
      %v2905 = vmax.f32 %v2573, 0.0
      %v2906 = vmax.f32 %v2576, 0.0
      %v2907 = vmax.f32 %v2581, 0.0
      %v2908 = vmax.f32 %v2584, 0.0
      %v2909 = vmax.f32 %v2589, 0.0
      %v2910 = vmax.f32 %v2592, 0.0
      %v2911 = vmax.f32 %v2597, 0.0
      %v2912 = vmax.f32 %v2600, 0.0
      %v2913 = vmax.f32 %v2605, 0.0
      %v2914 = vmax.f32 %v2608, 0.0
      %v2915 = vmax.f32 %v2613, 0.0
      %v2916 = vmax.f32 %v2616, 0.0
      %v2917 = vmax.f32 %v2621, 0.0
      %v2918 = vmax.f32 %v2624, 0.0
      %v2919 = vmax.f32 %v2629, 0.0
      %v2920 = vmax.f32 %v2632, 0.0
      %v2921 = vmax.f32 %v2637, 0.0
      %v2922 = vmax.f32 %v2640, 0.0
      %v2923 = vmax.f32 %v2645, 0.0
      %v2924 = vmax.f32 %v2648, 0.0
      %v2925 = vmax.f32 %v2653, 0.0
      %v2926 = vmax.f32 %v2656, 0.0
      %v2927 = vmax.f32 %v2661, 0.0
      %v2928 = vmax.f32 %v2664, 0.0
      %v2929 = vmax.f32 %v2669, 0.0
      %v2930 = vmax.f32 %v2672, 0.0
      %v2931 = vpack.c.bf16 %v2676, %v2675
      %v2932 = vpack.c.bf16 %v2678, %v2677
      %v2933 = vpack.c.bf16 %v2680, %v2679
      %v2934 = vpack.c.bf16 %v2682, %v2681
      %v2935 = vpack.c.bf16 %v2684, %v2683
      %v2936 = vpack.c.bf16 %v2686, %v2685
      %v2937 = vpack.c.bf16 %v2688, %v2687
      %v2938 = vpack.c.bf16 %v2690, %v2689
      %v2939 = vpack.c.bf16 %v2692, %v2691
      %v2940 = vpack.c.bf16 %v2694, %v2693
      %v2941 = vpack.c.bf16 %v2696, %v2695
      %v2942 = vpack.c.bf16 %v2698, %v2697
      %v2943 = vpack.c.bf16 %v2700, %v2699
      %v2944 = vpack.c.bf16 %v2702, %v2701
      %v2945 = vpack.c.bf16 %v2704, %v2703
      %v2946 = vpack.c.bf16 %v2706, %v2705
      %v2947 = vpack.c.bf16 %v2708, %v2707
      %v2948 = vpack.c.bf16 %v2710, %v2709
      %v2949 = vpack.c.bf16 %v2712, %v2711
      %v2950 = vpack.c.bf16 %v2714, %v2713
      %v2951 = vpack.c.bf16 %v2716, %v2715
      %v2952 = vpack.c.bf16 %v2718, %v2717
      %v2953 = vpack.c.bf16 %v2720, %v2719
      %v2954 = vpack.c.bf16 %v2722, %v2721
      %v2955 = vpack.c.bf16 %v2724, %v2723
      %v2956 = vpack.c.bf16 %v2726, %v2725
      %v2957 = vpack.c.bf16 %v2728, %v2727
      %v2958 = vpack.c.bf16 %v2730, %v2729
      %v2959 = vpack.c.bf16 %v2732, %v2731
      %v2960 = vpack.c.bf16 %v2734, %v2733
      %v2961 = vpack.c.bf16 %v2736, %v2735
      %v2962 = vpack.c.bf16 %v2738, %v2737
      %v2963 = vpack.c.bf16 %v2740, %v2739
      %v2964 = vpack.c.bf16 %v2742, %v2741
      %v2965 = vpack.c.bf16 %v2744, %v2743
      %v2966 = vpack.c.bf16 %v2746, %v2745
      %v2967 = vpack.c.bf16 %v2748, %v2747
      %v2968 = vpack.c.bf16 %v2750, %v2749
      %v2969 = vpack.c.bf16 %v2752, %v2751
      %v2970 = vpack.c.bf16 %v2754, %v2753
      %v2971 = vpack.c.bf16 %v2756, %v2755
      %v2972 = vpack.c.bf16 %v2758, %v2757
      %v2973 = vpack.c.bf16 %v2760, %v2759
      %v2974 = vpack.c.bf16 %v2762, %v2761
      %v2975 = vpack.c.bf16 %v2764, %v2763
      %v2976 = vpack.c.bf16 %v2766, %v2765
      %v2977 = vpack.c.bf16 %v2768, %v2767
      %v2978 = vpack.c.bf16 %v2770, %v2769
      %v2979 = vpack.c.bf16 %v2772, %v2771
      %v2980 = vpack.c.bf16 %v2774, %v2773
      %v2981 = vpack.c.bf16 %v2776, %v2775
      %v2982 = vpack.c.bf16 %v2778, %v2777
      %v2983 = vpack.c.bf16 %v2780, %v2779
      %v2984 = vpack.c.bf16 %v2782, %v2781
      %v2985 = vpack.c.bf16 %v2784, %v2783
      %v2986 = vpack.c.bf16 %v2786, %v2785
      %v2987 = vpack.c.bf16 %v2788, %v2787
      %v2988 = vpack.c.bf16 %v2790, %v2789
      %v2989 = vpack.c.bf16 %v2792, %v2791
      %v2990 = vpack.c.bf16 %v2794, %v2793
      %v2991 = vpack.c.bf16 %v2796, %v2795
      %v2992 = vpack.c.bf16 %v2798, %v2797
      %v2993 = vpack.c.bf16 %v2800, %v2799
      %v2994 = vpack.c.bf16 %v2802, %v2801
      %v2995 = vpack.c.bf16 %v2804, %v2803
      %v2996 = vpack.c.bf16 %v2806, %v2805
      %v2997 = vpack.c.bf16 %v2808, %v2807
      %v2998 = vpack.c.bf16 %v2810, %v2809
      %v2999 = vpack.c.bf16 %v2812, %v2811
      %v3000 = vpack.c.bf16 %v2814, %v2813
      %v3001 = vpack.c.bf16 %v2816, %v2815
      %v3002 = vpack.c.bf16 %v2818, %v2817
      %v3003 = vpack.c.bf16 %v2820, %v2819
      %v3004 = vpack.c.bf16 %v2822, %v2821
      %v3005 = vpack.c.bf16 %v2824, %v2823
      %v3006 = vpack.c.bf16 %v2826, %v2825
      %v3007 = vpack.c.bf16 %v2828, %v2827
      %v3008 = vpack.c.bf16 %v2830, %v2829
      %v3009 = vpack.c.bf16 %v2832, %v2831
      %v3010 = vpack.c.bf16 %v2834, %v2833
      %v3011 = vpack.c.bf16 %v2836, %v2835
      %v3012 = vpack.c.bf16 %v2838, %v2837
      %v3013 = vpack.c.bf16 %v2840, %v2839
      %v3014 = vpack.c.bf16 %v2842, %v2841
      %v3015 = vpack.c.bf16 %v2844, %v2843
      %v3016 = vpack.c.bf16 %v2846, %v2845
      %v3017 = vpack.c.bf16 %v2848, %v2847
      %v3018 = vpack.c.bf16 %v2850, %v2849
      %v3019 = vpack.c.bf16 %v2852, %v2851
      %v3020 = vpack.c.bf16 %v2854, %v2853
      %v3021 = vpack.c.bf16 %v2856, %v2855
      %v3022 = vpack.c.bf16 %v2858, %v2857
      %v3023 = vpack.c.bf16 %v2860, %v2859
      %v3024 = vpack.c.bf16 %v2862, %v2861
      %v3025 = vpack.c.bf16 %v2864, %v2863
      %v3026 = vpack.c.bf16 %v2866, %v2865
      %v3027 = vpack.c.bf16 %v2868, %v2867
      %v3028 = vpack.c.bf16 %v2870, %v2869
      %v3029 = vpack.c.bf16 %v2872, %v2871
      %v3030 = vpack.c.bf16 %v2874, %v2873
      %v3031 = vpack.c.bf16 %v2876, %v2875
      %v3032 = vpack.c.bf16 %v2878, %v2877
      %v3033 = vpack.c.bf16 %v2880, %v2879
      %v3034 = vpack.c.bf16 %v2882, %v2881
      %v3035 = vpack.c.bf16 %v2884, %v2883
      %v3036 = vpack.c.bf16 %v2886, %v2885
      %v3037 = vpack.c.bf16 %v2888, %v2887
      %v3038 = vpack.c.bf16 %v2890, %v2889
      %v3039 = vpack.c.bf16 %v2892, %v2891
      %v3040 = vpack.c.bf16 %v2894, %v2893
      %v3041 = vpack.c.bf16 %v2896, %v2895
      %v3042 = vpack.c.bf16 %v2898, %v2897
      %v3043 = vpack.c.bf16 %v2900, %v2899
      %v3044 = vpack.c.bf16 %v2902, %v2901
      %v3045 = vpack.c.bf16 %v2904, %v2903
      %v3046 = vpack.c.bf16 %v2906, %v2905
      %v3047 = vpack.c.bf16 %v2908, %v2907
      %v3048 = vpack.c.bf16 %v2910, %v2909
      %v3049 = vpack.c.bf16 %v2912, %v2911
      %v3050 = vpack.c.bf16 %v2914, %v2913
      %v3051 = vpack.c.bf16 %v2916, %v2915
      %v3052 = vpack.c.bf16 %v2918, %v2917
      %v3053 = vpack.c.bf16 %v2920, %v2919
      %v3054 = vpack.c.bf16 %v2922, %v2921
      %v3055 = vpack.c.bf16 %v2924, %v2923
      %v3056 = vpack.c.bf16 %v2926, %v2925
      %v3057 = vpack.c.bf16 %v2928, %v2927
      %v3058 = vpack.c.bf16 %v2930, %v2929
      %v3059 = vld [vmem:[%s1] sm:$0xff]
      %v3060 = vld [vmem:[%s1 + $0x8] sm:$0xff]
      %v3061 = vld [vmem:[%s1 + $0x10] sm:$0xff]
      %v3062 = vld [vmem:[%s1 + $0x18] sm:$0xff]
      %v3063 = vld [vmem:[%s1 + $0x20] sm:$0xff]
      %v3064 = vld [vmem:[%s1 + $0x28] sm:$0xff]
      %v3065 = vld [vmem:[%s1 + $0x30] sm:$0xff]
      %v3066 = vld [vmem:[%s1 + $0x38] sm:$0xff]
      %v3075 = vunpack.c.l.b16 %v3059
      %v3076 = vunpack.c.h.b16 %v3059
      %v3077 = vunpack.c.l.b16 %v3060
      %v3078 = vunpack.c.h.b16 %v3060
      %v3079 = vunpack.c.l.b16 %v3061
      %v3080 = vunpack.c.h.b16 %v3061
      %v3081 = vunpack.c.l.b16 %v3062
      %v3082 = vunpack.c.h.b16 %v3062
      %v3083 = vunpack.c.l.b16 %v3063
      %v3084 = vunpack.c.h.b16 %v3063
      %v3085 = vunpack.c.l.b16 %v3064
      %v3086 = vunpack.c.h.b16 %v3064
      %v3087 = vunpack.c.l.b16 %v3065
      %v3088 = vunpack.c.h.b16 %v3065
      %v3089 = vunpack.c.l.b16 %v3066
      %v3090 = vunpack.c.h.b16 %v3066
      %v3091 = vpack.c.b16 %v3075, %v3075
      %v3092 = vpack.c.b16 %v3076, %v3076
      %v3093 = vpack.c.b16 %v3077, %v3077
      %v3094 = vpack.c.b16 %v3078, %v3078
      %v3095 = vpack.c.b16 %v3079, %v3079
      %v3096 = vpack.c.b16 %v3080, %v3080
      %v3097 = vpack.c.b16 %v3081, %v3081
      %v3098 = vpack.c.b16 %v3082, %v3082
      %v3099 = vpack.c.b16 %v3083, %v3083
      %v3100 = vpack.c.b16 %v3084, %v3084
      %v3101 = vpack.c.b16 %v3085, %v3085
      %v3102 = vpack.c.b16 %v3086, %v3086
      %v3103 = vpack.c.b16 %v3087, %v3087
      %v3104 = vpack.c.b16 %v3088, %v3088
      %v3105 = vpack.c.b16 %v3089, %v3089
      %v3106 = vpack.c.b16 %v3090, %v3090
      %3123 = vmatprep.subr.bf16.mxu0 0
      %3124 = vmatpush1.bf16.msra.mxu0 %v2931
      %3125 = vmatprep.subr.bf16.mxu0 0
      %3126 = vmatpush1.bf16.msra.mxu0 %v2932
      %3127 = vmatprep.subr.bf16.mxu0 0
      %3128 = vmatpush1.bf16.msra.mxu0 %v2933
      %3129 = vmatprep.subr.bf16.mxu0 0
      %3130 = vmatpush1.bf16.msra.mxu0 %v2934
      %3131 = vmatprep.subr.bf16.mxu0 0
      %3132 = vmatpush1.bf16.msra.mxu0 %v2935
      %3133 = vmatprep.subr.bf16.mxu0 0
      %3134 = vmatpush1.bf16.msra.mxu0 %v2936
      %3135 = vmatprep.subr.bf16.mxu0 0
      %3136 = vmatpush1.bf16.msra.mxu0 %v2937
      %3137 = vmatprep.subr.bf16.mxu0 0
      %3138 = vmatpush1.bf16.msra.mxu0 %v2938
      %3139 = vmatprep.subr.bf16.mxu0 0
      %3140 = vmatpush1.bf16.msra.mxu0 %v2939
      %3141 = vmatprep.subr.bf16.mxu0 0
      %3142 = vmatpush1.bf16.msra.mxu0 %v2940
      %3143 = vmatprep.subr.bf16.mxu0 0
      %3144 = vmatpush1.bf16.msra.mxu0 %v2941
      %3145 = vmatprep.subr.bf16.mxu0 0
      %3146 = vmatpush1.bf16.msra.mxu0 %v2942
      %3147 = vmatprep.subr.bf16.mxu0 0
      %3148 = vmatpush1.bf16.msra.mxu0 %v2943
      %3149 = vmatprep.subr.bf16.mxu0 0
      %3150 = vmatpush1.bf16.msra.mxu0 %v2944
      %3151 = vmatprep.subr.bf16.mxu0 0
      %3152 = vmatpush1.bf16.msra.mxu0 %v2945
      %3153 = vmatprep.subr.bf16.mxu0 0
      %3154 = vmatpush1.bf16.msra.mxu0 %v2946
      %3155 = vmatprep.mubr.bf16.mxu0 %v3092
      %3156 = vmatmul.mubr.bf16.gmra.mrb[0].mxu0 %v3091
      %v3157 = vpop.f32.mrb[0].mxu0
      %v3158 = vadd.f32 0.0, %v3157
      %v3159 = vpop.f32.mrb[0].mxu0
      %v3160 = vpop.f32.mrb[0].mxu0
      %v3161 = vpop.f32.mrb[0].mxu0
      %3162 = vdwg.mxu0
      %3163 = vmatprep.subr.bf16.mxu0 0
      %3164 = vmatpush1.bf16.msra.mxu0 %v2947
      %3165 = vmatprep.subr.bf16.mxu0 0
      %3166 = vmatpush1.bf16.msra.mxu0 %v2948
      %3167 = vmatprep.subr.bf16.mxu0 0
      %3168 = vmatpush1.bf16.msra.mxu0 %v2949
      %3169 = vmatprep.subr.bf16.mxu0 0
      %3170 = vmatpush1.bf16.msra.mxu0 %v2950
      %3171 = vmatprep.subr.bf16.mxu0 0
      %3172 = vmatpush1.bf16.msra.mxu0 %v2951
      %3173 = vmatprep.subr.bf16.mxu0 0
      %3174 = vmatpush1.bf16.msra.mxu0 %v2952
      %3175 = vmatprep.subr.bf16.mxu0 0
      %3176 = vmatpush1.bf16.msra.mxu0 %v2953
      %3177 = vmatprep.subr.bf16.mxu0 0
      %3178 = vmatpush1.bf16.msra.mxu0 %v2954
      %3179 = vmatprep.subr.bf16.mxu0 0
      %3180 = vmatpush1.bf16.msra.mxu0 %v2955
      %3181 = vmatprep.subr.bf16.mxu0 0
      %3182 = vmatpush1.bf16.msra.mxu0 %v2956
      %3183 = vmatprep.subr.bf16.mxu0 0
      %3184 = vmatpush1.bf16.msra.mxu0 %v2957
      %3185 = vmatprep.subr.bf16.mxu0 0
      %3186 = vmatpush1.bf16.msra.mxu0 %v2958
      %3187 = vmatprep.subr.bf16.mxu0 0
      %3188 = vmatpush1.bf16.msra.mxu0 %v2959
      %3189 = vmatprep.subr.bf16.mxu0 0
      %3190 = vmatpush1.bf16.msra.mxu0 %v2960
      %3191 = vmatprep.subr.bf16.mxu0 0
      %3192 = vmatpush1.bf16.msra.mxu0 %v2961
      %3193 = vmatprep.subr.bf16.mxu0 0
      %3194 = vmatpush1.bf16.msra.mxu0 %v2962
      %3195 = vmatprep.mubr.bf16.mxu0 %v3094
      %3196 = vmatmul.mubr.bf16.gmra.mrb[0].mxu0 %v3093
      %v3197 = vpop.f32.mrb[0].mxu0
      %v3198 = vadd.f32 %v3158, %v3197
      %v3199 = vpop.f32.mrb[0].mxu0
      %v3200 = vpop.f32.mrb[0].mxu0
      %v3201 = vpop.f32.mrb[0].mxu0
      %3202 = vdwg.mxu0
      %3203 = vmatprep.subr.bf16.mxu0 0
      %3204 = vmatpush1.bf16.msra.mxu0 %v2963
      %3205 = vmatprep.subr.bf16.mxu0 0
      %3206 = vmatpush1.bf16.msra.mxu0 %v2964
      %3207 = vmatprep.subr.bf16.mxu0 0
      %3208 = vmatpush1.bf16.msra.mxu0 %v2965
      %3209 = vmatprep.subr.bf16.mxu0 0
      %3210 = vmatpush1.bf16.msra.mxu0 %v2966
      %3211 = vmatprep.subr.bf16.mxu0 0
      %3212 = vmatpush1.bf16.msra.mxu0 %v2967
      %3213 = vmatprep.subr.bf16.mxu0 0
      %3214 = vmatpush1.bf16.msra.mxu0 %v2968
      %3215 = vmatprep.subr.bf16.mxu0 0
      %3216 = vmatpush1.bf16.msra.mxu0 %v2969
      %3217 = vmatprep.subr.bf16.mxu0 0
      %3218 = vmatpush1.bf16.msra.mxu0 %v2970
      %3219 = vmatprep.subr.bf16.mxu0 0
      %3220 = vmatpush1.bf16.msra.mxu0 %v2971
      %3221 = vmatprep.subr.bf16.mxu0 0
      %3222 = vmatpush1.bf16.msra.mxu0 %v2972
      %3223 = vmatprep.subr.bf16.mxu0 0
      %3224 = vmatpush1.bf16.msra.mxu0 %v2973
      %3225 = vmatprep.subr.bf16.mxu0 0
      %3226 = vmatpush1.bf16.msra.mxu0 %v2974
      %3227 = vmatprep.subr.bf16.mxu0 0
      %3228 = vmatpush1.bf16.msra.mxu0 %v2975
      %3229 = vmatprep.subr.bf16.mxu0 0
      %3230 = vmatpush1.bf16.msra.mxu0 %v2976
      %3231 = vmatprep.subr.bf16.mxu0 0
      %3232 = vmatpush1.bf16.msra.mxu0 %v2977
      %3233 = vmatprep.subr.bf16.mxu0 0
      %3234 = vmatpush1.bf16.msra.mxu0 %v2978
      %3235 = vmatprep.mubr.bf16.mxu0 %v3096
      %3236 = vmatmul.mubr.bf16.gmra.mrb[0].mxu0 %v3095
      %v3237 = vpop.f32.mrb[0].mxu0
      %v3238 = vadd.f32 %v3198, %v3237
      %v3239 = vpop.f32.mrb[0].mxu0
      %v3240 = vpop.f32.mrb[0].mxu0
      %v3241 = vpop.f32.mrb[0].mxu0
      %3242 = vdwg.mxu0
      %3243 = vmatprep.subr.bf16.mxu0 0
      %3244 = vmatpush1.bf16.msra.mxu0 %v2979
      %3245 = vmatprep.subr.bf16.mxu0 0
      %3246 = vmatpush1.bf16.msra.mxu0 %v2980
      %3247 = vmatprep.subr.bf16.mxu0 0
      %3248 = vmatpush1.bf16.msra.mxu0 %v2981
      %3249 = vmatprep.subr.bf16.mxu0 0
      %3250 = vmatpush1.bf16.msra.mxu0 %v2982
      %3251 = vmatprep.subr.bf16.mxu0 0
      %3252 = vmatpush1.bf16.msra.mxu0 %v2983
      %3253 = vmatprep.subr.bf16.mxu0 0
      %3254 = vmatpush1.bf16.msra.mxu0 %v2984
      %3255 = vmatprep.subr.bf16.mxu0 0
      %3256 = vmatpush1.bf16.msra.mxu0 %v2985
      %3257 = vmatprep.subr.bf16.mxu0 0
      %3258 = vmatpush1.bf16.msra.mxu0 %v2986
      %3259 = vmatprep.subr.bf16.mxu0 0
      %3260 = vmatpush1.bf16.msra.mxu0 %v2987
      %3261 = vmatprep.subr.bf16.mxu0 0
      %3262 = vmatpush1.bf16.msra.mxu0 %v2988
      %3263 = vmatprep.subr.bf16.mxu0 0
      %3264 = vmatpush1.bf16.msra.mxu0 %v2989
      %3265 = vmatprep.subr.bf16.mxu0 0
      %3266 = vmatpush1.bf16.msra.mxu0 %v2990
      %3267 = vmatprep.subr.bf16.mxu0 0
      %3268 = vmatpush1.bf16.msra.mxu0 %v2991
      %3269 = vmatprep.subr.bf16.mxu0 0
      %3270 = vmatpush1.bf16.msra.mxu0 %v2992
      %3271 = vmatprep.subr.bf16.mxu0 0
      %3272 = vmatpush1.bf16.msra.mxu0 %v2993
      %3273 = vmatprep.subr.bf16.mxu0 0
      %3274 = vmatpush1.bf16.msra.mxu0 %v2994
      %3275 = vmatprep.mubr.bf16.mxu0 %v3098
      %3276 = vmatmul.mubr.bf16.gmra.mrb[0].mxu0 %v3097
      %v3277 = vpop.f32.mrb[0].mxu0
      %v3278 = vadd.f32 %v3238, %v3277
      %v3279 = vpop.f32.mrb[0].mxu0
      %v3280 = vpop.f32.mrb[0].mxu0
      %v3281 = vpop.f32.mrb[0].mxu0
      %3282 = vdwg.mxu0
      %3283 = vmatprep.subr.bf16.mxu0 0
      %3284 = vmatpush1.bf16.msra.mxu0 %v2995
      %3285 = vmatprep.subr.bf16.mxu0 0
      %3286 = vmatpush1.bf16.msra.mxu0 %v2996
      %3287 = vmatprep.subr.bf16.mxu0 0
      %3288 = vmatpush1.bf16.msra.mxu0 %v2997
      %3289 = vmatprep.subr.bf16.mxu0 0
      %3290 = vmatpush1.bf16.msra.mxu0 %v2998
      %3291 = vmatprep.subr.bf16.mxu0 0
      %3292 = vmatpush1.bf16.msra.mxu0 %v2999
      %3293 = vmatprep.subr.bf16.mxu0 0
      %3294 = vmatpush1.bf16.msra.mxu0 %v3000
      %3295 = vmatprep.subr.bf16.mxu0 0
      %3296 = vmatpush1.bf16.msra.mxu0 %v3001
      %3297 = vmatprep.subr.bf16.mxu0 0
      %3298 = vmatpush1.bf16.msra.mxu0 %v3002
      %3299 = vmatprep.subr.bf16.mxu0 0
      %3300 = vmatpush1.bf16.msra.mxu0 %v3003
      %3301 = vmatprep.subr.bf16.mxu0 0
      %3302 = vmatpush1.bf16.msra.mxu0 %v3004
      %3303 = vmatprep.subr.bf16.mxu0 0
      %3304 = vmatpush1.bf16.msra.mxu0 %v3005
      %3305 = vmatprep.subr.bf16.mxu0 0
      %3306 = vmatpush1.bf16.msra.mxu0 %v3006
      %3307 = vmatprep.subr.bf16.mxu0 0
      %3308 = vmatpush1.bf16.msra.mxu0 %v3007
      %3309 = vmatprep.subr.bf16.mxu0 0
      %3310 = vmatpush1.bf16.msra.mxu0 %v3008
      %3311 = vmatprep.subr.bf16.mxu0 0
      %3312 = vmatpush1.bf16.msra.mxu0 %v3009
      %3313 = vmatprep.subr.bf16.mxu0 0
      %3314 = vmatpush1.bf16.msra.mxu0 %v3010
      %3315 = vmatprep.mubr.bf16.mxu0 %v3100
      %3316 = vmatmul.mubr.bf16.gmra.mrb[0].mxu0 %v3099
      %v3317 = vpop.f32.mrb[0].mxu0
      %v3318 = vadd.f32 %v3278, %v3317
      %v3319 = vpop.f32.mrb[0].mxu0
      %v3320 = vpop.f32.mrb[0].mxu0
      %v3321 = vpop.f32.mrb[0].mxu0
      %3322 = vdwg.mxu0
      %3323 = vmatprep.subr.bf16.mxu0 0
      %3324 = vmatpush1.bf16.msra.mxu0 %v3011
      %3325 = vmatprep.subr.bf16.mxu0 0
      %3326 = vmatpush1.bf16.msra.mxu0 %v3012
      %3327 = vmatprep.subr.bf16.mxu0 0
      %3328 = vmatpush1.bf16.msra.mxu0 %v3013
      %3329 = vmatprep.subr.bf16.mxu0 0
      %3330 = vmatpush1.bf16.msra.mxu0 %v3014
      %3331 = vmatprep.subr.bf16.mxu0 0
      %3332 = vmatpush1.bf16.msra.mxu0 %v3015
      %3333 = vmatprep.subr.bf16.mxu0 0
      %3334 = vmatpush1.bf16.msra.mxu0 %v3016
      %3335 = vmatprep.subr.bf16.mxu0 0
      %3336 = vmatpush1.bf16.msra.mxu0 %v3017
      %3337 = vmatprep.subr.bf16.mxu0 0
      %3338 = vmatpush1.bf16.msra.mxu0 %v3018
      %3339 = vmatprep.subr.bf16.mxu0 0
      %3340 = vmatpush1.bf16.msra.mxu0 %v3019
      %3341 = vmatprep.subr.bf16.mxu0 0
      %3342 = vmatpush1.bf16.msra.mxu0 %v3020
      %3343 = vmatprep.subr.bf16.mxu0 0
      %3344 = vmatpush1.bf16.msra.mxu0 %v3021
      %3345 = vmatprep.subr.bf16.mxu0 0
      %3346 = vmatpush1.bf16.msra.mxu0 %v3022
      %3347 = vmatprep.subr.bf16.mxu0 0
      %3348 = vmatpush1.bf16.msra.mxu0 %v3023
      %3349 = vmatprep.subr.bf16.mxu0 0
      %3350 = vmatpush1.bf16.msra.mxu0 %v3024
      %3351 = vmatprep.subr.bf16.mxu0 0
      %3352 = vmatpush1.bf16.msra.mxu0 %v3025
      %3353 = vmatprep.subr.bf16.mxu0 0
      %3354 = vmatpush1.bf16.msra.mxu0 %v3026
      %3355 = vmatprep.mubr.bf16.mxu0 %v3102
      %3356 = vmatmul.mubr.bf16.gmra.mrb[0].mxu0 %v3101
      %v3357 = vpop.f32.mrb[0].mxu0
      %v3358 = vadd.f32 %v3318, %v3357
      %v3359 = vpop.f32.mrb[0].mxu0
      %v3360 = vpop.f32.mrb[0].mxu0
      %v3361 = vpop.f32.mrb[0].mxu0
      %3362 = vdwg.mxu0
      %3363 = vmatprep.subr.bf16.mxu0 0
      %3364 = vmatpush1.bf16.msra.mxu0 %v3027
      %3365 = vmatprep.subr.bf16.mxu0 0
      %3366 = vmatpush1.bf16.msra.mxu0 %v3028
      %3367 = vmatprep.subr.bf16.mxu0 0
      %3368 = vmatpush1.bf16.msra.mxu0 %v3029
      %3369 = vmatprep.subr.bf16.mxu0 0
      %3370 = vmatpush1.bf16.msra.mxu0 %v3030
      %3371 = vmatprep.subr.bf16.mxu0 0
      %3372 = vmatpush1.bf16.msra.mxu0 %v3031
      %3373 = vmatprep.subr.bf16.mxu0 0
      %3374 = vmatpush1.bf16.msra.mxu0 %v3032
      %3375 = vmatprep.subr.bf16.mxu0 0
      %3376 = vmatpush1.bf16.msra.mxu0 %v3033
      %3377 = vmatprep.subr.bf16.mxu0 0
      %3378 = vmatpush1.bf16.msra.mxu0 %v3034
      %3379 = vmatprep.subr.bf16.mxu0 0
      %3380 = vmatpush1.bf16.msra.mxu0 %v3035
      %3381 = vmatprep.subr.bf16.mxu0 0
      %3382 = vmatpush1.bf16.msra.mxu0 %v3036
      %3383 = vmatprep.subr.bf16.mxu0 0
      %3384 = vmatpush1.bf16.msra.mxu0 %v3037
      %3385 = vmatprep.subr.bf16.mxu0 0
      %3386 = vmatpush1.bf16.msra.mxu0 %v3038
      %3387 = vmatprep.subr.bf16.mxu0 0
      %3388 = vmatpush1.bf16.msra.mxu0 %v3039
      %3389 = vmatprep.subr.bf16.mxu0 0
      %3390 = vmatpush1.bf16.msra.mxu0 %v3040
      %3391 = vmatprep.subr.bf16.mxu0 0
      %3392 = vmatpush1.bf16.msra.mxu0 %v3041
      %3393 = vmatprep.subr.bf16.mxu0 0
      %3394 = vmatpush1.bf16.msra.mxu0 %v3042
      %3395 = vmatprep.mubr.bf16.mxu0 %v3104
      %3396 = vmatmul.mubr.bf16.gmra.mrb[0].mxu0 %v3103
      %v3397 = vpop.f32.mrb[0].mxu0
      %v3398 = vadd.f32 %v3358, %v3397
      %v3399 = vpop.f32.mrb[0].mxu0
      %v3400 = vpop.f32.mrb[0].mxu0
      %v3401 = vpop.f32.mrb[0].mxu0
      %3402 = vdwg.mxu0
      %3403 = vmatprep.subr.bf16.mxu0 0
      %3404 = vmatpush1.bf16.msra.mxu0 %v3043
      %3405 = vmatprep.subr.bf16.mxu0 0
      %3406 = vmatpush1.bf16.msra.mxu0 %v3044
      %3407 = vmatprep.subr.bf16.mxu0 0
      %3408 = vmatpush1.bf16.msra.mxu0 %v3045
      %3409 = vmatprep.subr.bf16.mxu0 0
      %3410 = vmatpush1.bf16.msra.mxu0 %v3046
      %3411 = vmatprep.subr.bf16.mxu0 0
      %3412 = vmatpush1.bf16.msra.mxu0 %v3047
      %3413 = vmatprep.subr.bf16.mxu0 0
      %3414 = vmatpush1.bf16.msra.mxu0 %v3048
      %3415 = vmatprep.subr.bf16.mxu0 0
      %3416 = vmatpush1.bf16.msra.mxu0 %v3049
      %3417 = vmatprep.subr.bf16.mxu0 0
      %3418 = vmatpush1.bf16.msra.mxu0 %v3050
      %3419 = vmatprep.subr.bf16.mxu0 0
      %3420 = vmatpush1.bf16.msra.mxu0 %v3051
      %3421 = vmatprep.subr.bf16.mxu0 0
      %3422 = vmatpush1.bf16.msra.mxu0 %v3052
      %3423 = vmatprep.subr.bf16.mxu0 0
      %3424 = vmatpush1.bf16.msra.mxu0 %v3053
      %3425 = vmatprep.subr.bf16.mxu0 0
      %3426 = vmatpush1.bf16.msra.mxu0 %v3054
      %3427 = vmatprep.subr.bf16.mxu0 0
      %3428 = vmatpush1.bf16.msra.mxu0 %v3055
      %3429 = vmatprep.subr.bf16.mxu0 0
      %3430 = vmatpush1.bf16.msra.mxu0 %v3056
      %3431 = vmatprep.subr.bf16.mxu0 0
      %3432 = vmatpush1.bf16.msra.mxu0 %v3057
      %3433 = vmatprep.subr.bf16.mxu0 0
      %3434 = vmatpush1.bf16.msra.mxu0 %v3058
      %3435 = vmatprep.mubr.bf16.mxu0 %v3106
      %3436 = vmatmul.mubr.bf16.gmra.mrb[0].mxu0 %v3105
      %v3437 = vpop.f32.mrb[0].mxu0
      %v3438 = vadd.f32 %v3398, %v3437
      %v3439 = vpop.f32.mrb[0].mxu0
      %v3440 = vpop.f32.mrb[0].mxu0
      %v3441 = vpop.f32.mrb[0].mxu0
      %3442 = vdwg.mxu0
      %v3443 = vpack.c.bf16 %v3438, %v3438
      %v3444 = vld [vmem:[%s501] sm:$0xf]
      %v3445 = vld [vmem:[%s501 + $0x4] sm:$0xf]
      %v3446 = vld [vmem:[%s501 + $0x8] sm:$0xf]
      %v3447 = vld [vmem:[%s501 + $0xc] sm:$0xf]
      %v3448 = vld [vmem:[%s504] sm:$0x1]
      %v3450 = vlaneseq
      %v3451 = vshrl.u32 %v3450, 7
      %v3452 = vsub.s32 0, %v3451
      %v3453 = vrot.slane %v3448, %v3452
      %v3459 = vunpack.c.l.b16 %v3444
      %v3460 = vunpack.c.l.b16 %v3445
      %v3461 = vunpack.c.l.b16 %v3446
      %v3462 = vunpack.c.l.b16 %v3447
      %v3463 = vpack.c.b16 %v3460, %v3459
      %v3464 = vpack.c.b16 %v3462, %v3461
      %vm3467 = vcmask 261120
      %v3469 = vsel %vm3467, %v3443, 0
      %3471 = vmatprep.subr.bf16.mxu0 0
      %3472 = vmatpush1.bf16.msra.mxu0 %v3463
      %3473 = vmatprep.subr.bf16.mxu0 0
      %3474 = vmatpush1.bf16.msra.mxu0 %v3464
      %3475 = vmatprep.subr.bf16.mxu0 0
      %3476 = vmatpush1.bf16.msra.mxu0 0
      %3477 = vmatprep.subr.bf16.mxu0 0
      %3478 = vmatpush1.bf16.msra.mxu0 0
      %3479 = vmatprep.subr.bf16.mxu0 0
      %3480 = vmatpush1.bf16.msra.mxu0 0
      %3481 = vmatprep.subr.bf16.mxu0 0
      %3482 = vmatpush1.bf16.msra.mxu0 0
      %3483 = vmatprep.subr.bf16.mxu0 0
      %3484 = vmatpush1.bf16.msra.mxu0 0
      %3485 = vmatprep.subr.bf16.mxu0 0
      %3486 = vmatpush1.bf16.msra.mxu0 0
      %3487 = vmatprep.subr.bf16.mxu0 0
      %3488 = vmatpush1.bf16.msra.mxu0 0
      %3489 = vmatprep.subr.bf16.mxu0 0
      %3490 = vmatpush1.bf16.msra.mxu0 0
      %3491 = vmatprep.subr.bf16.mxu0 0
      %3492 = vmatpush1.bf16.msra.mxu0 0
      %3493 = vmatprep.subr.bf16.mxu0 0
      %3494 = vmatpush1.bf16.msra.mxu0 0
      %3495 = vmatprep.subr.bf16.mxu0 0
      %3496 = vmatpush1.bf16.msra.mxu0 0
      %3497 = vmatprep.subr.bf16.mxu0 0
      %3498 = vmatpush1.bf16.msra.mxu0 0
      %3499 = vmatprep.subr.bf16.mxu0 0
      %3500 = vmatpush1.bf16.msra.mxu0 0
      %3501 = vmatprep.subr.bf16.mxu0 0
      %3502 = vmatpush1.bf16.msra.mxu0 0
      %3503 = vmatprep.mubr.bf16.mxu0 0
      %3504 = vmatmul.mubr.bf16.gmra.mrb[0].mxu0 %v3469
      %v3505 = vpop.f32.mrb[0].mxu0
      %v3506 = vadd.f32 %v3453, %v3505
      %v3507 = vpop.f32.mrb[0].mxu0
      %v3508 = vpop.f32.mrb[0].mxu0
      %v3509 = vpop.f32.mrb[0].mxu0
      %3510 = vdwg.mxu0
      %vm3511 = vcmask 523264
      %v3512 = vsel %vm3511, %v3506, 0.0
      %v3513 = vrot.slane %v3512, 4
      %v3514 = vadd.f32 %v3512, %v3513
      %v3515 = vrot.slane %v3514, 2
      %v3516 = vadd.f32 %v3514, %v3515
      %v3517 = vrot.slane %v3516, 1
      %v3518 = vadd.f32 %v3516, %v3517
      %v3519 = vrcp.pop 8.0
      %v3520 = vmul.f32 %v3518, %v3519
      %v3521 = vsub.f32 %v3506, %v3520
      %v3522 = vmul.f32 %v3521, %v3521
      %v3523 = vsel %vm3511, %v3522, 0.0
      %v3524 = vrot.slane %v3523, 4
      %v3525 = vadd.f32 %v3523, %v3524
      %v3526 = vrot.slane %v3525, 2
      %v3527 = vadd.f32 %v3525, %v3526
      %v3528 = vrot.slane %v3527, 1
      %v3529 = vadd.f32 %v3527, %v3528
      %v3530 = vmul.f32 %v3529, %v3519
      %v3531 = vadd.f32 %v3530, 1e-05
      %v3532 = vrsqrt.pop %v3531
      %v3533 = vmul.f32 %v3521, %v3532
      %v3534 = vld [vmem:[%s507] sm:$0x1]
      %v3536 = vlaneseq
      %v3537 = vshrl.u32 %v3536, 7
      %v3538 = vsub.s32 0, %v3537
      %v3539 = vrot.slane %v3534, %v3538
      %v3541 = vmul.f32 %v3533, %v3539
      %v3542 = vld [vmem:[%s510] sm:$0x1]
      %v3544 = vlaneseq
      %v3545 = vshrl.u32 %v3544, 7
      %v3546 = vsub.s32 0, %v3545
      %v3547 = vrot.slane %v3542, %v3546
      %v3549 = vadd.f32 %v3541, %v3547
      %v3550 = vmax.f32 %v3549, 0.0
      %v3551 = vpack.c.bf16 %v3550, %v3550
      %v3552 = vld [vmem:[%s515] sm:$0xf]
      %v3553 = vld [vmem:[%s515 + $0x4] sm:$0xf]
      %v3554 = vld [vmem:[%s515 + $0x8] sm:$0xf]
      %v3555 = vld [vmem:[%s515 + $0xc] sm:$0xf]
      %v3556 = vld [vmem:[%s515 + $0x10] sm:$0xf]
      %v3557 = vld [vmem:[%s515 + $0x14] sm:$0xf]
      %v3558 = vld [vmem:[%s515 + $0x18] sm:$0xf]
      %v3559 = vld [vmem:[%s515 + $0x1c] sm:$0xf]
      %v3560 = vld [vmem:[%s518] sm:$0x1]
      %v3562 = vlaneseq
      %v3563 = vshrl.u32 %v3562, 7
      %v3564 = vsub.s32 0, %v3563
      %v3565 = vrot.slane %v3560, %v3564
      %v3575 = vunpack.c.l.b16 %v3552
      %v3576 = vunpack.c.l.b16 %v3553
      %v3577 = vunpack.c.l.b16 %v3554
      %v3578 = vunpack.c.l.b16 %v3555
      %v3579 = vunpack.c.l.b16 %v3556
      %v3580 = vunpack.c.l.b16 %v3557
      %v3581 = vunpack.c.l.b16 %v3558
      %v3582 = vunpack.c.l.b16 %v3559
      %v3583 = vpack.c.b16 %v3576, %v3575
      %v3584 = vpack.c.b16 %v3578, %v3577
      %v3585 = vpack.c.b16 %v3580, %v3579
      %v3586 = vpack.c.b16 %v3582, %v3581
      %v3592 = vsel %vm3511, %v3551, 0
      %3594 = vmatprep.subr.bf16.mxu0 0
      %3595 = vmatpush1.bf16.msra.mxu0 %v3583
      %3596 = vmatprep.subr.bf16.mxu0 0
      %3597 = vmatpush1.bf16.msra.mxu0 %v3584
      %3598 = vmatprep.subr.bf16.mxu0 0
      %3599 = vmatpush1.bf16.msra.mxu0 %v3585
      %3600 = vmatprep.subr.bf16.mxu0 0
      %3601 = vmatpush1.bf16.msra.mxu0 %v3586
      %3602 = vmatprep.subr.bf16.mxu0 0
      %3603 = vmatpush1.bf16.msra.mxu0 0
      %3604 = vmatprep.subr.bf16.mxu0 0
      %3605 = vmatpush1.bf16.msra.mxu0 0
      %3606 = vmatprep.subr.bf16.mxu0 0
      %3607 = vmatpush1.bf16.msra.mxu0 0
      %3608 = vmatprep.subr.bf16.mxu0 0
      %3609 = vmatpush1.bf16.msra.mxu0 0
      %3610 = vmatprep.subr.bf16.mxu0 0
      %3611 = vmatpush1.bf16.msra.mxu0 0
      %3612 = vmatprep.subr.bf16.mxu0 0
      %3613 = vmatpush1.bf16.msra.mxu0 0
      %3614 = vmatprep.subr.bf16.mxu0 0
      %3615 = vmatpush1.bf16.msra.mxu0 0
      %3616 = vmatprep.subr.bf16.mxu0 0
      %3617 = vmatpush1.bf16.msra.mxu0 0
      %3618 = vmatprep.subr.bf16.mxu0 0
      %3619 = vmatpush1.bf16.msra.mxu0 0
      %3620 = vmatprep.subr.bf16.mxu0 0
      %3621 = vmatpush1.bf16.msra.mxu0 0
      %3622 = vmatprep.subr.bf16.mxu0 0
      %3623 = vmatpush1.bf16.msra.mxu0 0
      %3624 = vmatprep.subr.bf16.mxu0 0
      %3625 = vmatpush1.bf16.msra.mxu0 0
      %3626 = vmatprep.mubr.bf16.mxu0 0
      %3627 = vmatmul.mubr.bf16.gmra.mrb[0].mxu0 %v3592
      %v3628 = vpop.f32.mrb[0].mxu0
      %v3629 = vadd.f32 %v3565, %v3628
      %v3630 = vpop.f32.mrb[0].mxu0
      %v3631 = vpop.f32.mrb[0].mxu0
      %v3632 = vpop.f32.mrb[0].mxu0
      %3633 = vdwg.mxu0
      %v3634 = vrot.slane %v3629, 4
      %v3635 = vadd.f32 %v3629, %v3634
      %v3636 = vrot.slane %v3635, 2
      %v3637 = vadd.f32 %v3635, %v3636
      %v3638 = vrot.slane %v3637, 1
      %v3639 = vadd.f32 %v3637, %v3638
      %v3640 = vmul.f32 %v3639, %v3519
      %v3641 = vsub.f32 %v3629, %v3640
      %v3642 = vmul.f32 %v3641, %v3641
      %v3643 = vrot.slane %v3642, 4
      %v3644 = vadd.f32 %v3642, %v3643
      %v3645 = vrot.slane %v3644, 2
      %v3646 = vadd.f32 %v3644, %v3645
      %v3647 = vrot.slane %v3646, 1
      %v3648 = vadd.f32 %v3646, %v3647
      %v3649 = vmul.f32 %v3648, %v3519
      %v3650 = vadd.f32 %v3649, 1e-05
      %v3651 = vrsqrt.pop %v3650
      %v3652 = vmul.f32 %v3641, %v3651
      %v3653 = vld [vmem:[%s521] sm:$0x1]
      %v3655 = vlaneseq
      %v3656 = vshrl.u32 %v3655, 7
      %v3657 = vsub.s32 0, %v3656
      %v3658 = vrot.slane %v3653, %v3657
      %v3660 = vmul.f32 %v3652, %v3658
      %v3661 = vld [vmem:[%s524] sm:$0x1]
      %v3663 = vlaneseq
      %v3664 = vshrl.u32 %v3663, 7
      %v3665 = vsub.s32 0, %v3664
      %v3666 = vrot.slane %v3661, %v3665
      %v3668 = vadd.f32 %v3660, %v3666
      %v3669 = vmul.f32 %v3668, %v3668
      %3670 = vadd.xlane.f32.xlu0 %v3669
      %v3671 = vpop.xlane.xlu0 %3670
      %v3672 = vrsqrt.pop %v3671
      %v3673 = vmul.f32 %v3671, %v3672
      %vm3674 = vcmp.eq.f32.partialorder %v3671, inf
      %v3675 = vsel %vm3674, %v3671, %v3673
      %vm3676 = vcmp.eq.f32.partialorder %v3671, 0.0
      %v3677 = vand.u32 %v3671, 2147483648
      %v3678 = vsel %vm3676, %v3677, %v3675
      %v3679 = vmax.f32 %v3678, 1e-12
      %v3680 = vrcp.pop %v3679
      %v3681 = vmul.f32 %v3668, %v3680
      %3682 = vst [vmem:[%s528] sm:$0xff] %v3681
      %p3683 = scmp.lt.s32.totalorder %s22, 1
      %s3684 = scalar_select %p3683, %s22, 1
      %s3685 = smul.addr %s3684, 8
      %s3686 = scalar_lea.vmem %s11, %s3685
      // Predicated region
      $region65: #{moco_forward.2} parent=63 // pred_check
        %p3687 = pneg %p321
      $region66: #{moco_forward.2} parent=63 // pred_check_branch
        %3689 = sbr.rel (%p3687) target = $region68
      $region67: #{moco_forward.2} parent=63 // pred_region
        _
      $region68: #{moco_forward.2} parent=63 // pred_fallthru
        _
    $region64: #{moco_forward.2} parent=5 // pred_fallthru
      _
    %p3690 = scmp.le.s32.totalorder 2, %s17
    // Predicated region
    $region69: #{moco_forward.2} parent=5 // pred_check
      %p3691 = pneg %p3690
    $region70: #{moco_forward.2} parent=5 // pred_check_branch
      %3693 = sbr.rel (%p3691) target = $region72
    $region71: #{moco_forward.2} parent=5 // pred_region
      %s3694 = ssub.s32 %s17, 2
      // Predicated region
      $region73: #{moco_forward.2} parent=71 // pred_check
        %p3695 = pneg %p327
      $region74: #{moco_forward.2} parent=71 // pred_check_branch
        %3697 = sbr.rel (%p3695) target = $region76
      $region75: #{moco_forward.2} parent=71 // pred_region
        %p3698 = scmp.lt.s32.totalorder %s23, 1
        %s3699 = scalar_select %p3698, %s23, 1
        %s3700 = smul.addr %s3699, 8
        %s3701 = scalar_lea.vmem %s11, %s3700
      $region76: #{moco_forward.2} parent=71 // pred_fallthru
        _
    $region72: #{moco_forward.2} parent=5 // pred_fallthru
      _
  $region6: #{moco_forward.2} parent=0 // loop_footer
    %s21 = sadd.s32 1, %s17
  $region7: #{moco_forward.2} parent=0 // loop_footer_branch
    %16 = sbr.rel target = $region3
  $region8: #{moco_forward.2} parent=0 // loop_exit
    _

</llo_original>
